<compile_context>
chip_gen: v7x
topology: tpu7x:2x2x1
jax: 0.10.0
libtpu: 0.0.40
codegen_flags: <defaults>
</compile_context>

<pallas_src>
import jax
import jax.numpy as jnp
import numpy as np
from jax.experimental import pallas as pl
from jax.experimental.pallas import tpu as pltpu

C = 384          # channels (fixed by the module)
H = W = 14       # spatial size (from x69)
K = 5            # depthwise kernel size
PAD = 2          # conv padding
EPS = 1e-5       # BatchNorm eps
CBLK = 128       # channels per grid step (one lane block)


def bn_relu_dwconv_kernel(x_ref, gamma_ref, beta_ref, w_ref, o_ref, shift_ref):
    # ---- BatchNorm2d (training-mode batch stats), folded to scale/shift ----
    x = x_ref[...]                                         # (H, W, CBLK) f32
    n_inv = 1.0 / float(H * W)
    s1 = jnp.sum(x, axis=(0, 1), keepdims=True)            # (1, 1, CBLK)
    s2 = jnp.sum(x * x, axis=(0, 1), keepdims=True)        # (1, 1, CBLK)
    mean = s1 * n_inv
    var = s2 * n_inv - mean * mean                         # biased variance
    scale = gamma_ref[...] * jax.lax.rsqrt(var + EPS)      # (1, 1, CBLK)
    shift = beta_ref[...] - mean * scale                   # (1, 1, CBLK)

    # ---- BN + ReLU in one elementwise pass ----
    y = jnp.maximum(x * scale + shift, 0.0)                # (H, W, CBLK)

    # ---- build 5 W-shifted, zero-bordered copies:
    #      shift_ref[j, h + PAD, w, c] == y[h, w + j - PAD, c]  (0 if OOB) ----
    zrows = jnp.zeros((PAD, W, CBLK), jnp.float32)
    for j in range(K):
        dw = j - PAD
        shift_ref[j, 0:PAD, :, :] = zrows                  # top H border
        shift_ref[j, H + PAD:H + 2 * PAD, :, :] = zrows    # bottom H border
        if dw == 0:
            shift_ref[j, PAD:PAD + H, :, :] = y
        elif dw < 0:
            k = -dw
            shift_ref[j, PAD:PAD + H, 0:k, :] = jnp.zeros((H, k, CBLK), jnp.float32)
            shift_ref[j, PAD:PAD + H, k:W, :] = y[:, 0:W - k, :]
        else:
            k = dw
            shift_ref[j, PAD:PAD + H, W - k:W, :] = jnp.zeros((H, k, CBLK), jnp.float32)
            shift_ref[j, PAD:PAD + H, 0:W - k, :] = y[:, k:W, :]

    # ---- depthwise 5x5 conv: 25 taps, leading-axis slices only ----
    wts = w_ref[...]                                       # (K*K, CBLK)
    acc = None
    for i in range(K):
        for j in range(K):
            t = i * K + j
            term = shift_ref[j, i:i + H, :, :] * wts[t:t + 1, :]
            acc = term if acc is None else acc + term
    o_ref[...] = acc


def bn_relu_dwconv(x_nhwc, gamma, beta, w_hwc):
    """x_nhwc: (1, H, W, C); gamma/beta: (C,); w_hwc: (K, K, C) depthwise weight
    (== PyTorch (C,1,K,K) weight in HWC layout, converted once at init time)."""
    x3 = x_nhwc.reshape(H, W, C)        # squeeze batch dim (metadata only)
    g = gamma.reshape(1, C)
    b = beta.reshape(1, C)
    w2 = w_hwc.reshape(K * K, C)        # row-major collapse (metadata only)

    out = pl.pallas_call(
        bn_relu_dwconv_kernel,
        out_shape=jax.ShapeDtypeStruct((H, W, C), jnp.float32),
        grid=(C // CBLK,),
        in_specs=[
            pl.BlockSpec((H, W, CBLK), lambda c: (0, 0, c)),
            pl.BlockSpec((1, CBLK), lambda c: (0, c)),
            pl.BlockSpec((1, CBLK), lambda c: (0, c)),
            pl.BlockSpec((K * K, CBLK), lambda c: (0, c)),
        ],
        out_specs=pl.BlockSpec((H, W, CBLK), lambda c: (0, 0, c)),
        scratch_shapes=[pltpu.VMEM((K, H + 2 * PAD, W, CBLK), jnp.float32)],
        compiler_params=pltpu.CompilerParams(dimension_semantics=("parallel",)),
    )(x3, g, b, w2)

    return out[None]                     # (1, H, W, C), NHWC


def reference_nhwc(x, gamma, beta, w_hwc):
    """Pure-JAX NHWC reference (training-mode BN -> ReLU -> depthwise conv);
    mathematically identical to the PyTorch NCHW module's forward."""
    mean = jnp.mean(x, axis=(0, 1, 2), keepdims=True)
    var = jnp.mean((x - mean) ** 2, axis=(0, 1, 2), keepdims=True)
    y = (x - mean) * jax.lax.rsqrt(var + EPS) * gamma + beta
    y = jnp.maximum(y, 0.0)
    return jax.lax.conv_general_dilated(
        y, w_hwc.reshape(K, K, 1, C),
        window_strides=(1, 1), padding=((PAD, PAD), (PAD, PAD)),
        dimension_numbers=("NHWC", "HWIO", "NHWC"),
        feature_group_count=C)


if __name__ == "__main__":
    key = jax.random.PRNGKey(0)
    k1, k2, k3, k4 = jax.random.split(key, 4)

    # deterministic inputs / parameters (shapes dictated by the module; NHWC)
    x = jax.random.normal(k1, (1, H, W, C), jnp.float32)            # activation
    gamma = 1.0 + 0.1 * jax.random.normal(k2, (C,), jnp.float32)    # BN weight
    beta = 0.1 * jax.random.normal(k3, (C,), jnp.float32)           # BN bias
    w = 0.1 * jax.random.normal(k4, (K, K, C), jnp.float32)         # depthwise weight

    out = jax.block_until_ready(bn_relu_dwconv(x, gamma, beta, w))
    ref = reference_nhwc(x, gamma, beta, w)
    np.testing.assert_allclose(np.asarray(out), np.asarray(ref),
                               atol=1e-4, rtol=1e-4)
    print("KERNEL_OK")
</pallas_src>

<mosaic_0001>
module attributes {stable_mosaic.version = 11 : i64} {
  func.func @bn_relu_dwconv_kernel(%arg0: i32, %arg1: memref<14x14x128xf32, #tpu.memory_space<vmem>>, %arg2: memref<1x128xf32, #tpu.memory_space<vmem>>, %arg3: memref<1x128xf32, #tpu.memory_space<vmem>>, %arg4: memref<25x128xf32, #tpu.memory_space<vmem>>, %arg5: memref<14x14x128xf32, #tpu.memory_space<vmem>>, %arg6: memref<5x18x14x128xf32, #tpu.memory_space<vmem>>) attributes {dimension_semantics = [#tpu.dimension_semantics<parallel>], iteration_bounds = array<i64: 3>, scalar_prefetch = 0 : i64, scratch_operands = 1 : i64, tpu.core_type = #tpu.core_type<tc>, window_params = [{transform_indices = @transform_0, window_bounds = array<i64: 14, 14, 128>}, {transform_indices = @transform_1, window_bounds = array<i64: 1, 128>}, {transform_indices = @transform_2, window_bounds = array<i64: 1, 128>}, {transform_indices = @transform_3, window_bounds = array<i64: 25, 128>}, {transform_indices = @transform_4, window_bounds = array<i64: 14, 14, 128>}]} {
    %c0 = arith.constant 0 : index
    %c0_0 = arith.constant 0 : index
    %c0_1 = arith.constant 0 : index
    %0 = vector.load %arg1[%c0, %c0_0, %c0_1] : memref<14x14x128xf32, #tpu.memory_space<vmem>>, vector<14x14x128xf32>
    %cst = arith.constant dense<0.000000e+00> : vector<128xf32>
    %1 = vector.multi_reduction <add>, %0, %cst [0, 1] : vector<14x14x128xf32> to vector<128xf32>
    %2 = vector.shape_cast %1 : vector<128xf32> to vector<1x1x128xf32>
    %3 = arith.mulf %0, %0 : vector<14x14x128xf32>
    %cst_2 = arith.constant dense<0.000000e+00> : vector<128xf32>
    %4 = vector.multi_reduction <add>, %3, %cst_2 [0, 1] : vector<14x14x128xf32> to vector<128xf32>
    %5 = vector.shape_cast %4 : vector<128xf32> to vector<1x1x128xf32>
    %cst_3 = arith.constant 0.00510204071 : f32
    %6 = vector.broadcast %cst_3 : f32 to vector<1x1x128xf32>
    %7 = arith.mulf %2, %6 : vector<1x1x128xf32>
    %cst_4 = arith.constant 0.00510204071 : f32
    %8 = vector.broadcast %cst_4 : f32 to vector<1x1x128xf32>
    %9 = arith.mulf %5, %8 : vector<1x1x128xf32>
    %10 = arith.mulf %7, %7 : vector<1x1x128xf32>
    %11 = arith.subf %9, %10 : vector<1x1x128xf32>
    %c0_5 = arith.constant 0 : index
    %c0_6 = arith.constant 0 : index
    %12 = vector.load %arg2[%c0_5, %c0_6] : memref<1x128xf32, #tpu.memory_space<vmem>>, vector<1x128xf32>
    %cst_7 = arith.constant 9.99999974E-6 : f32
    %13 = vector.broadcast %cst_7 : f32 to vector<1x1x128xf32>
    %14 = arith.addf %11, %13 : vector<1x1x128xf32>
    %15 = math.rsqrt %14 : vector<1x1x128xf32>
    %16 = vector.shape_cast %12 : vector<1x128xf32> to vector<1x1x128xf32>
    %17 = arith.mulf %16, %15 : vector<1x1x128xf32>
    %c0_8 = arith.constant 0 : index
    %c0_9 = arith.constant 0 : index
    %18 = vector.load %arg3[%c0_8, %c0_9] : memref<1x128xf32, #tpu.memory_space<vmem>>, vector<1x128xf32>
    %19 = arith.mulf %7, %17 : vector<1x1x128xf32>
    %20 = vector.shape_cast %18 : vector<1x128xf32> to vector<1x1x128xf32>
    %21 = arith.subf %20, %19 : vector<1x1x128xf32>
    %22 = vector.broadcast %17 : vector<1x1x128xf32> to vector<14x14x128xf32>
    %23 = arith.mulf %0, %22 : vector<14x14x128xf32>
    %24 = vector.broadcast %21 : vector<1x1x128xf32> to vector<14x14x128xf32>
    %25 = arith.addf %23, %24 : vector<14x14x128xf32>
    %cst_10 = arith.constant 0.000000e+00 : f32
    %26 = vector.broadcast %cst_10 : f32 to vector<14x14x128xf32>
    %27 = arith.maximumf %25, %26 : vector<14x14x128xf32>
    %cst_11 = arith.constant 0.000000e+00 : f32
    %28 = vector.broadcast %cst_11 : f32 to vector<2x14x128xf32>
    %c0_12 = arith.constant 0 : index
    %c0_13 = arith.constant 0 : index
    %c0_14 = arith.constant 0 : index
    %c0_15 = arith.constant 0 : index
    %29 = vector.load %arg6[%c0_12, %c0_13, %c0_14, %c0_15] : memref<5x18x14x128xf32, #tpu.memory_space<vmem>>, vector<1x2x14x128xf32>
    %30 = vector.shape_cast %29 : vector<1x2x14x128xf32> to vector<2x14x128xf32>
    %31 = vector.shape_cast %28 : vector<2x14x128xf32> to vector<1x2x14x128xf32>
    tpu.vector_store %arg6[%c0_12, %c0_13, %c0_14, %c0_15], %31 {strides = array<i32>} : memref<5x18x14x128xf32, #tpu.memory_space<vmem>>, vector<1x2x14x128xf32>,
    %c0_16 = arith.constant 0 : index
    %c16 = arith.constant 16 : index
    %c0_17 = arith.constant 0 : index
    %c0_18 = arith.constant 0 : index
    %32 = vector.load %arg6[%c0_16, %c16, %c0_17, %c0_18] : memref<5x18x14x128xf32, #tpu.memory_space<vmem>>, vector<1x2x14x128xf32>
    %33 = vector.shape_cast %32 : vector<1x2x14x128xf32> to vector<2x14x128xf32>
    %34 = vector.shape_cast %28 : vector<2x14x128xf32> to vector<1x2x14x128xf32>
    tpu.vector_store %arg6[%c0_16, %c16, %c0_17, %c0_18], %34 {strides = array<i32>} : memref<5x18x14x128xf32, #tpu.memory_space<vmem>>, vector<1x2x14x128xf32>,
    %cst_19 = arith.constant 0.000000e+00 : f32
    %35 = vector.broadcast %cst_19 : f32 to vector<14x2x128xf32>
    %c0_20 = arith.constant 0 : index
    %c2 = arith.constant 2 : index
    %c0_21 = arith.constant 0 : index
    %c0_22 = arith.constant 0 : index
    %36 = vector.load %arg6[%c0_20, %c2, %c0_21, %c0_22] : memref<5x18x14x128xf32, #tpu.memory_space<vmem>>, vector<1x14x2x128xf32>
    %37 = vector.shape_cast %36 : vector<1x14x2x128xf32> to vector<14x2x128xf32>
    %38 = vector.shape_cast %35 : vector<14x2x128xf32> to vector<1x14x2x128xf32>
    tpu.vector_store %arg6[%c0_20, %c2, %c0_21, %c0_22], %38 {strides = array<i32>} : memref<5x18x14x128xf32, #tpu.memory_space<vmem>>, vector<1x14x2x128xf32>,
    %39 = vector.extract_strided_slice %27 {offsets = [0, 0, 0], sizes = [14, 12, 128], strides = [1, 1, 1]} : vector<14x14x128xf32> to vector<14x12x128xf32>
    %c0_23 = arith.constant 0 : index
    %c2_24 = arith.constant 2 : index
    %c2_25 = arith.constant 2 : index
    %c0_26 = arith.constant 0 : index
    %40 = vector.load %arg6[%c0_23, %c2_24, %c2_25, %c0_26] : memref<5x18x14x128xf32, #tpu.memory_space<vmem>>, vector<1x14x12x128xf32>
    %41 = vector.shape_cast %40 : vector<1x14x12x128xf32> to vector<14x12x128xf32>
    %42 = vector.shape_cast %39 : vector<14x12x128xf32> to vector<1x14x12x128xf32>
    tpu.vector_store %arg6[%c0_23, %c2_24, %c2_25, %c0_26], %42 {strides = array<i32>} : memref<5x18x14x128xf32, #tpu.memory_space<vmem>>, vector<1x14x12x128xf32>,
    %c1 = arith.constant 1 : index
    %c0_27 = arith.constant 0 : index
    %c0_28 = arith.constant 0 : index
    %c0_29 = arith.constant 0 : index
    %43 = vector.load %arg6[%c1, %c0_27, %c0_28, %c0_29] : memref<5x18x14x128xf32, #tpu.memory_space<vmem>>, vector<1x2x14x128xf32>
    %44 = vector.shape_cast %43 : vector<1x2x14x128xf32> to vector<2x14x128xf32>
    %45 = vector.shape_cast %28 : vector<2x14x128xf32> to vector<1x2x14x128xf32>
    tpu.vector_store %arg6[%c1, %c0_27, %c0_28, %c0_29], %45 {strides = array<i32>} : memref<5x18x14x128xf32, #tpu.memory_space<vmem>>, vector<1x2x14x128xf32>,
    %c1_30 = arith.constant 1 : index
    %c16_31 = arith.constant 16 : index
    %c0_32 = arith.constant 0 : index
    %c0_33 = arith.constant 0 : index
    %46 = vector.load %arg6[%c1_30, %c16_31, %c0_32, %c0_33] : memref<5x18x14x128xf32, #tpu.memory_space<vmem>>, vector<1x2x14x128xf32>
    %47 = vector.shape_cast %46 : vector<1x2x14x128xf32> to vector<2x14x128xf32>
    %48 = vector.shape_cast %28 : vector<2x14x128xf32> to vector<1x2x14x128xf32>
    tpu.vector_store %arg6[%c1_30, %c16_31, %c0_32, %c0_33], %48 {strides = array<i32>} : memref<5x18x14x128xf32, #tpu.memory_space<vmem>>, vector<1x2x14x128xf32>,
    %cst_34 = arith.constant 0.000000e+00 : f32
    %49 = vector.broadcast %cst_34 : f32 to vector<14x1x128xf32>
    %c1_35 = arith.constant 1 : index
    %c2_36 = arith.constant 2 : index
    %c0_37 = arith.constant 0 : index
    %c0_38 = arith.constant 0 : index
    %50 = vector.load %arg6[%c1_35, %c2_36, %c0_37, %c0_38] : memref<5x18x14x128xf32, #tpu.memory_space<vmem>>, vector<1x14x1x128xf32>
    %51 = vector.shape_cast %50 : vector<1x14x1x128xf32> to vector<14x1x128xf32>
    %52 = vector.shape_cast %49 : vector<14x1x128xf32> to vector<1x14x1x128xf32>
    tpu.vector_store %arg6[%c1_35, %c2_36, %c0_37, %c0_38], %52 {strides = array<i32>} : memref<5x18x14x128xf32, #tpu.memory_space<vmem>>, vector<1x14x1x128xf32>,
    %53 = vector.extract_strided_slice %27 {offsets = [0, 0, 0], sizes = [14, 13, 128], strides = [1, 1, 1]} : vector<14x14x128xf32> to vector<14x13x128xf32>
    %c1_39 = arith.constant 1 : index
    %c2_40 = arith.constant 2 : index
    %c1_41 = arith.constant 1 : index
    %c0_42 = arith.constant 0 : index
    %54 = vector.load %arg6[%c1_39, %c2_40, %c1_41, %c0_42] : memref<5x18x14x128xf32, #tpu.memory_space<vmem>>, vector<1x14x13x128xf32>
    %55 = vector.shape_cast %54 : vector<1x14x13x128xf32> to vector<14x13x128xf32>
    %56 = vector.shape_cast %53 : vector<14x13x128xf32> to vector<1x14x13x128xf32>
    tpu.vector_store %arg6[%c1_39, %c2_40, %c1_41, %c0_42], %56 {strides = array<i32>} : memref<5x18x14x128xf32, #tpu.memory_space<vmem>>, vector<1x14x13x128xf32>,
    %c2_43 = arith.constant 2 : index
    %c0_44 = arith.constant 0 : index
    %c0_45 = arith.constant 0 : index
    %c0_46 = arith.constant 0 : index
    %57 = vector.load %arg6[%c2_43, %c0_44, %c0_45, %c0_46] : memref<5x18x14x128xf32, #tpu.memory_space<vmem>>, vector<1x2x14x128xf32>
    %58 = vector.shape_cast %57 : vector<1x2x14x128xf32> to vector<2x14x128xf32>
    %59 = vector.shape_cast %28 : vector<2x14x128xf32> to vector<1x2x14x128xf32>
    tpu.vector_store %arg6[%c2_43, %c0_44, %c0_45, %c0_46], %59 {strides = array<i32>} : memref<5x18x14x128xf32, #tpu.memory_space<vmem>>, vector<1x2x14x128xf32>,
    %c2_47 = arith.constant 2 : index
    %c16_48 = arith.constant 16 : index
    %c0_49 = arith.constant 0 : index
    %c0_50 = arith.constant 0 : index
    %60 = vector.load %arg6[%c2_47, %c16_48, %c0_49, %c0_50] : memref<5x18x14x128xf32, #tpu.memory_space<vmem>>, vector<1x2x14x128xf32>
    %61 = vector.shape_cast %60 : vector<1x2x14x128xf32> to vector<2x14x128xf32>
    %62 = vector.shape_cast %28 : vector<2x14x128xf32> to vector<1x2x14x128xf32>
    tpu.vector_store %arg6[%c2_47, %c16_48, %c0_49, %c0_50], %62 {strides = array<i32>} : memref<5x18x14x128xf32, #tpu.memory_space<vmem>>, vector<1x2x14x128xf32>,
    %c2_51 = arith.constant 2 : index
    %c2_52 = arith.constant 2 : index
    %c0_53 = arith.constant 0 : index
    %c0_54 = arith.constant 0 : index
    %63 = vector.load %arg6[%c2_51, %c2_52, %c0_53, %c0_54] : memref<5x18x14x128xf32, #tpu.memory_space<vmem>>, vector<1x14x14x128xf32>
    %64 = vector.shape_cast %63 : vector<1x14x14x128xf32> to vector<14x14x128xf32>
    %65 = vector.shape_cast %27 : vector<14x14x128xf32> to vector<1x14x14x128xf32>
    tpu.vector_store %arg6[%c2_51, %c2_52, %c0_53, %c0_54], %65 {strides = array<i32>} : memref<5x18x14x128xf32, #tpu.memory_space<vmem>>, vector<1x14x14x128xf32>,
    %c3 = arith.constant 3 : index
    %c0_55 = arith.constant 0 : index
    %c0_56 = arith.constant 0 : index
    %c0_57 = arith.constant 0 : index
    %66 = vector.load %arg6[%c3, %c0_55, %c0_56, %c0_57] : memref<5x18x14x128xf32, #tpu.memory_space<vmem>>, vector<1x2x14x128xf32>
    %67 = vector.shape_cast %66 : vector<1x2x14x128xf32> to vector<2x14x128xf32>
    %68 = vector.shape_cast %28 : vector<2x14x128xf32> to vector<1x2x14x128xf32>
    tpu.vector_store %arg6[%c3, %c0_55, %c0_56, %c0_57], %68 {strides = array<i32>} : memref<5x18x14x128xf32, #tpu.memory_space<vmem>>, vector<1x2x14x128xf32>,
    %c3_58 = arith.constant 3 : index
    %c16_59 = arith.constant 16 : index
    %c0_60 = arith.constant 0 : index
    %c0_61 = arith.constant 0 : index
    %69 = vector.load %arg6[%c3_58, %c16_59, %c0_60, %c0_61] : memref<5x18x14x128xf32, #tpu.memory_space<vmem>>, vector<1x2x14x128xf32>
    %70 = vector.shape_cast %69 : vector<1x2x14x128xf32> to vector<2x14x128xf32>
    %71 = vector.shape_cast %28 : vector<2x14x128xf32> to vector<1x2x14x128xf32>
    tpu.vector_store %arg6[%c3_58, %c16_59, %c0_60, %c0_61], %71 {strides = array<i32>} : memref<5x18x14x128xf32, #tpu.memory_space<vmem>>, vector<1x2x14x128xf32>,
    %cst_62 = arith.constant 0.000000e+00 : f32
    %72 = vector.broadcast %cst_62 : f32 to vector<14x1x128xf32>
    %c3_63 = arith.constant 3 : index
    %c2_64 = arith.constant 2 : index
    %c13 = arith.constant 13 : index
    %c0_65 = arith.constant 0 : index
    %73 = vector.load %arg6[%c3_63, %c2_64, %c13, %c0_65] : memref<5x18x14x128xf32, #tpu.memory_space<vmem>>, vector<1x14x1x128xf32>
    %74 = vector.shape_cast %73 : vector<1x14x1x128xf32> to vector<14x1x128xf32>
    %75 = vector.shape_cast %72 : vector<14x1x128xf32> to vector<1x14x1x128xf32>
    tpu.vector_store %arg6[%c3_63, %c2_64, %c13, %c0_65], %75 {strides = array<i32>} : memref<5x18x14x128xf32, #tpu.memory_space<vmem>>, vector<1x14x1x128xf32>,
    %76 = vector.extract_strided_slice %27 {offsets = [0, 1, 0], sizes = [14, 13, 128], strides = [1, 1, 1]} : vector<14x14x128xf32> to vector<14x13x128xf32>
    %c3_66 = arith.constant 3 : index
    %c2_67 = arith.constant 2 : index
    %c0_68 = arith.constant 0 : index
    %c0_69 = arith.constant 0 : index
    %77 = vector.load %arg6[%c3_66, %c2_67, %c0_68, %c0_69] : memref<5x18x14x128xf32, #tpu.memory_space<vmem>>, vector<1x14x13x128xf32>
    %78 = vector.shape_cast %77 : vector<1x14x13x128xf32> to vector<14x13x128xf32>
    %79 = vector.shape_cast %76 : vector<14x13x128xf32> to vector<1x14x13x128xf32>
    tpu.vector_store %arg6[%c3_66, %c2_67, %c0_68, %c0_69], %79 {strides = array<i32>} : memref<5x18x14x128xf32, #tpu.memory_space<vmem>>, vector<1x14x13x128xf32>,
    %c4 = arith.constant 4 : index
    %c0_70 = arith.constant 0 : index
    %c0_71 = arith.constant 0 : index
    %c0_72 = arith.constant 0 : index
    %80 = vector.load %arg6[%c4, %c0_70, %c0_71, %c0_72] : memref<5x18x14x128xf32, #tpu.memory_space<vmem>>, vector<1x2x14x128xf32>
    %81 = vector.shape_cast %80 : vector<1x2x14x128xf32> to vector<2x14x128xf32>
    %82 = vector.shape_cast %28 : vector<2x14x128xf32> to vector<1x2x14x128xf32>
    tpu.vector_store %arg6[%c4, %c0_70, %c0_71, %c0_72], %82 {strides = array<i32>} : memref<5x18x14x128xf32, #tpu.memory_space<vmem>>, vector<1x2x14x128xf32>,
    %c4_73 = arith.constant 4 : index
    %c16_74 = arith.constant 16 : index
    %c0_75 = arith.constant 0 : index
    %c0_76 = arith.constant 0 : index
    %83 = vector.load %arg6[%c4_73, %c16_74, %c0_75, %c0_76] : memref<5x18x14x128xf32, #tpu.memory_space<vmem>>, vector<1x2x14x128xf32>
    %84 = vector.shape_cast %83 : vector<1x2x14x128xf32> to vector<2x14x128xf32>
    %85 = vector.shape_cast %28 : vector<2x14x128xf32> to vector<1x2x14x128xf32>
    tpu.vector_store %arg6[%c4_73, %c16_74, %c0_75, %c0_76], %85 {strides = array<i32>} : memref<5x18x14x128xf32, #tpu.memory_space<vmem>>, vector<1x2x14x128xf32>,
    %cst_77 = arith.constant 0.000000e+00 : f32
    %86 = vector.broadcast %cst_77 : f32 to vector<14x2x128xf32>
    %c4_78 = arith.constant 4 : index
    %c2_79 = arith.constant 2 : index
    %c12 = arith.constant 12 : index
    %c0_80 = arith.constant 0 : index
    %87 = vector.load %arg6[%c4_78, %c2_79, %c12, %c0_80] : memref<5x18x14x128xf32, #tpu.memory_space<vmem>>, vector<1x14x2x128xf32>
    %88 = vector.shape_cast %87 : vector<1x14x2x128xf32> to vector<14x2x128xf32>
    %89 = vector.shape_cast %86 : vector<14x2x128xf32> to vector<1x14x2x128xf32>
    tpu.vector_store %arg6[%c4_78, %c2_79, %c12, %c0_80], %89 {strides = array<i32>} : memref<5x18x14x128xf32, #tpu.memory_space<vmem>>, vector<1x14x2x128xf32>,
    %90 = vector.extract_strided_slice %27 {offsets = [0, 2, 0], sizes = [14, 12, 128], strides = [1, 1, 1]} : vector<14x14x128xf32> to vector<14x12x128xf32>
    %c4_81 = arith.constant 4 : index
    %c2_82 = arith.constant 2 : index
    %c0_83 = arith.constant 0 : index
    %c0_84 = arith.constant 0 : index
    %91 = vector.load %arg6[%c4_81, %c2_82, %c0_83, %c0_84] : memref<5x18x14x128xf32, #tpu.memory_space<vmem>>, vector<1x14x12x128xf32>
    %92 = vector.shape_cast %91 : vector<1x14x12x128xf32> to vector<14x12x128xf32>
    %93 = vector.shape_cast %90 : vector<14x12x128xf32> to vector<1x14x12x128xf32>
    tpu.vector_store %arg6[%c4_81, %c2_82, %c0_83, %c0_84], %93 {strides = array<i32>} : memref<5x18x14x128xf32, #tpu.memory_space<vmem>>, vector<1x14x12x128xf32>,
    %c0_85 = arith.constant 0 : index
    %c0_86 = arith.constant 0 : index
    %94 = vector.load %arg4[%c0_85, %c0_86] : memref<25x128xf32, #tpu.memory_space<vmem>>, vector<25x128xf32>
    %c0_87 = arith.constant 0 : index
    %c0_88 = arith.constant 0 : index
    %c0_89 = arith.constant 0 : index
    %c0_90 = arith.constant 0 : index
    %95 = vector.load %arg6[%c0_87, %c0_88, %c0_89, %c0_90] : memref<5x18x14x128xf32, #tpu.memory_space<vmem>>, vector<1x14x14x128xf32>
    %96 = vector.shape_cast %95 : vector<1x14x14x128xf32> to vector<14x14x128xf32>
    %97 = vector.extract_strided_slice %94 {offsets = [0, 0], sizes = [1, 128], strides = [1, 1]} : vector<25x128xf32> to vector<1x128xf32>
    %98 = vector.shape_cast %97 : vector<1x128xf32> to vector<1x1x128xf32>
    %99 = vector.broadcast %98 : vector<1x1x128xf32> to vector<14x14x128xf32>
    %100 = arith.mulf %96, %99 : vector<14x14x128xf32>
    %c1_91 = arith.constant 1 : index
    %c0_92 = arith.constant 0 : index
    %c0_93 = arith.constant 0 : index
    %c0_94 = arith.constant 0 : index
    %101 = vector.load %arg6[%c1_91, %c0_92, %c0_93, %c0_94] : memref<5x18x14x128xf32, #tpu.memory_space<vmem>>, vector<1x14x14x128xf32>
    %102 = vector.shape_cast %101 : vector<1x14x14x128xf32> to vector<14x14x128xf32>
    %103 = vector.extract_strided_slice %94 {offsets = [1, 0], sizes = [1, 128], strides = [1, 1]} : vector<25x128xf32> to vector<1x128xf32>
    %104 = vector.shape_cast %103 : vector<1x128xf32> to vector<1x1x128xf32>
    %105 = vector.broadcast %104 : vector<1x1x128xf32> to vector<14x14x128xf32>
    %106 = arith.mulf %102, %105 : vector<14x14x128xf32>
    %107 = arith.addf %100, %106 : vector<14x14x128xf32>
    %c2_95 = arith.constant 2 : index
    %c0_96 = arith.constant 0 : index
    %c0_97 = arith.constant 0 : index
    %c0_98 = arith.constant 0 : index
    %108 = vector.load %arg6[%c2_95, %c0_96, %c0_97, %c0_98] : memref<5x18x14x128xf32, #tpu.memory_space<vmem>>, vector<1x14x14x128xf32>
    %109 = vector.shape_cast %108 : vector<1x14x14x128xf32> to vector<14x14x128xf32>
    %110 = vector.extract_strided_slice %94 {offsets = [2, 0], sizes = [1, 128], strides = [1, 1]} : vector<25x128xf32> to vector<1x128xf32>
    %111 = vector.shape_cast %110 : vector<1x128xf32> to vector<1x1x128xf32>
    %112 = vector.broadcast %111 : vector<1x1x128xf32> to vector<14x14x128xf32>
    %113 = arith.mulf %109, %112 : vector<14x14x128xf32>
    %114 = arith.addf %107, %113 : vector<14x14x128xf32>
    %c3_99 = arith.constant 3 : index
    %c0_100 = arith.constant 0 : index
    %c0_101 = arith.constant 0 : index
    %c0_102 = arith.constant 0 : index
    %115 = vector.load %arg6[%c3_99, %c0_100, %c0_101, %c0_102] : memref<5x18x14x128xf32, #tpu.memory_space<vmem>>, vector<1x14x14x128xf32>
    %116 = vector.shape_cast %115 : vector<1x14x14x128xf32> to vector<14x14x128xf32>
    %117 = vector.extract_strided_slice %94 {offsets = [3, 0], sizes = [1, 128], strides = [1, 1]} : vector<25x128xf32> to vector<1x128xf32>
    %118 = vector.shape_cast %117 : vector<1x128xf32> to vector<1x1x128xf32>
    %119 = vector.broadcast %118 : vector<1x1x128xf32> to vector<14x14x128xf32>
    %120 = arith.mulf %116, %119 : vector<14x14x128xf32>
    %121 = arith.addf %114, %120 : vector<14x14x128xf32>
    %c4_103 = arith.constant 4 : index
    %c0_104 = arith.constant 0 : index
    %c0_105 = arith.constant 0 : index
    %c0_106 = arith.constant 0 : index
    %122 = vector.load %arg6[%c4_103, %c0_104, %c0_105, %c0_106] : memref<5x18x14x128xf32, #tpu.memory_space<vmem>>, vector<1x14x14x128xf32>
    %123 = vector.shape_cast %122 : vector<1x14x14x128xf32> to vector<14x14x128xf32>
    %124 = vector.extract_strided_slice %94 {offsets = [4, 0], sizes = [1, 128], strides = [1, 1]} : vector<25x128xf32> to vector<1x128xf32>
    %125 = vector.shape_cast %124 : vector<1x128xf32> to vector<1x1x128xf32>
    %126 = vector.broadcast %125 : vector<1x1x128xf32> to vector<14x14x128xf32>
    %127 = arith.mulf %123, %126 : vector<14x14x128xf32>
    %128 = arith.addf %121, %127 : vector<14x14x128xf32>
    %c0_107 = arith.constant 0 : index
    %c1_108 = arith.constant 1 : index
    %c0_109 = arith.constant 0 : index
    %c0_110 = arith.constant 0 : index
    %129 = vector.load %arg6[%c0_107, %c1_108, %c0_109, %c0_110] : memref<5x18x14x128xf32, #tpu.memory_space<vmem>>, vector<1x14x14x128xf32>
    %130 = vector.shape_cast %129 : vector<1x14x14x128xf32> to vector<14x14x128xf32>
    %131 = vector.extract_strided_slice %94 {offsets = [5, 0], sizes = [1, 128], strides = [1, 1]} : vector<25x128xf32> to vector<1x128xf32>
    %132 = vector.shape_cast %131 : vector<1x128xf32> to vector<1x1x128xf32>
    %133 = vector.broadcast %132 : vector<1x1x128xf32> to vector<14x14x128xf32>
    %134 = arith.mulf %130, %133 : vector<14x14x128xf32>
    %135 = arith.addf %128, %134 : vector<14x14x128xf32>
    %c1_111 = arith.constant 1 : index
    %c1_112 = arith.constant 1 : index
    %c0_113 = arith.constant 0 : index
    %c0_114 = arith.constant 0 : index
    %136 = vector.load %arg6[%c1_111, %c1_112, %c0_113, %c0_114] : memref<5x18x14x128xf32, #tpu.memory_space<vmem>>, vector<1x14x14x128xf32>
    %137 = vector.shape_cast %136 : vector<1x14x14x128xf32> to vector<14x14x128xf32>
    %138 = vector.extract_strided_slice %94 {offsets = [6, 0], sizes = [1, 128], strides = [1, 1]} : vector<25x128xf32> to vector<1x128xf32>
    %139 = vector.shape_cast %138 : vector<1x128xf32> to vector<1x1x128xf32>
    %140 = vector.broadcast %139 : vector<1x1x128xf32> to vector<14x14x128xf32>
    %141 = arith.mulf %137, %140 : vector<14x14x128xf32>
    %142 = arith.addf %135, %141 : vector<14x14x128xf32>
    %c2_115 = arith.constant 2 : index
    %c1_116 = arith.constant 1 : index
    %c0_117 = arith.constant 0 : index
    %c0_118 = arith.constant 0 : index
    %143 = vector.load %arg6[%c2_115, %c1_116, %c0_117, %c0_118] : memref<5x18x14x128xf32, #tpu.memory_space<vmem>>, vector<1x14x14x128xf32>
    %144 = vector.shape_cast %143 : vector<1x14x14x128xf32> to vector<14x14x128xf32>
    %145 = vector.extract_strided_slice %94 {offsets = [7, 0], sizes = [1, 128], strides = [1, 1]} : vector<25x128xf32> to vector<1x128xf32>
    %146 = vector.shape_cast %145 : vector<1x128xf32> to vector<1x1x128xf32>
    %147 = vector.broadcast %146 : vector<1x1x128xf32> to vector<14x14x128xf32>
    %148 = arith.mulf %144, %147 : vector<14x14x128xf32>
    %149 = arith.addf %142, %148 : vector<14x14x128xf32>
    %c3_119 = arith.constant 3 : index
    %c1_120 = arith.constant 1 : index
    %c0_121 = arith.constant 0 : index
    %c0_122 = arith.constant 0 : index
    %150 = vector.load %arg6[%c3_119, %c1_120, %c0_121, %c0_122] : memref<5x18x14x128xf32, #tpu.memory_space<vmem>>, vector<1x14x14x128xf32>
    %151 = vector.shape_cast %150 : vector<1x14x14x128xf32> to vector<14x14x128xf32>
    %152 = vector.extract_strided_slice %94 {offsets = [8, 0], sizes = [1, 128], strides = [1, 1]} : vector<25x128xf32> to vector<1x128xf32>
    %153 = vector.shape_cast %152 : vector<1x128xf32> to vector<1x1x128xf32>
    %154 = vector.broadcast %153 : vector<1x1x128xf32> to vector<14x14x128xf32>
    %155 = arith.mulf %151, %154 : vector<14x14x128xf32>
    %156 = arith.addf %149, %155 : vector<14x14x128xf32>
    %c4_123 = arith.constant 4 : index
    %c1_124 = arith.constant 1 : index
    %c0_125 = arith.constant 0 : index
    %c0_126 = arith.constant 0 : index
    %157 = vector.load %arg6[%c4_123, %c1_124, %c0_125, %c0_126] : memref<5x18x14x128xf32, #tpu.memory_space<vmem>>, vector<1x14x14x128xf32>
    %158 = vector.shape_cast %157 : vector<1x14x14x128xf32> to vector<14x14x128xf32>
    %159 = vector.extract_strided_slice %94 {offsets = [9, 0], sizes = [1, 128], strides = [1, 1]} : vector<25x128xf32> to vector<1x128xf32>
    %160 = vector.shape_cast %159 : vector<1x128xf32> to vector<1x1x128xf32>
    %161 = vector.broadcast %160 : vector<1x1x128xf32> to vector<14x14x128xf32>
    %162 = arith.mulf %158, %161 : vector<14x14x128xf32>
    %163 = arith.addf %156, %162 : vector<14x14x128xf32>
    %c0_127 = arith.constant 0 : index
    %c2_128 = arith.constant 2 : index
    %c0_129 = arith.constant 0 : index
    %c0_130 = arith.constant 0 : index
    %164 = vector.load %arg6[%c0_127, %c2_128, %c0_129, %c0_130] : memref<5x18x14x128xf32, #tpu.memory_space<vmem>>, vector<1x14x14x128xf32>
    %165 = vector.shape_cast %164 : vector<1x14x14x128xf32> to vector<14x14x128xf32>
    %166 = vector.extract_strided_slice %94 {offsets = [10, 0], sizes = [1, 128], strides = [1, 1]} : vector<25x128xf32> to vector<1x128xf32>
    %167 = vector.shape_cast %166 : vector<1x128xf32> to vector<1x1x128xf32>
    %168 = vector.broadcast %167 : vector<1x1x128xf32> to vector<14x14x128xf32>
    %169 = arith.mulf %165, %168 : vector<14x14x128xf32>
    %170 = arith.addf %163, %169 : vector<14x14x128xf32>
    %c1_131 = arith.constant 1 : index
    %c2_132 = arith.constant 2 : index
    %c0_133 = arith.constant 0 : index
    %c0_134 = arith.constant 0 : index
    %171 = vector.load %arg6[%c1_131, %c2_132, %c0_133, %c0_134] : memref<5x18x14x128xf32, #tpu.memory_space<vmem>>, vector<1x14x14x128xf32>
    %172 = vector.shape_cast %171 : vector<1x14x14x128xf32> to vector<14x14x128xf32>
    %173 = vector.extract_strided_slice %94 {offsets = [11, 0], sizes = [1, 128], strides = [1, 1]} : vector<25x128xf32> to vector<1x128xf32>
    %174 = vector.shape_cast %173 : vector<1x128xf32> to vector<1x1x128xf32>
    %175 = vector.broadcast %174 : vector<1x1x128xf32> to vector<14x14x128xf32>
    %176 = arith.mulf %172, %175 : vector<14x14x128xf32>
    %177 = arith.addf %170, %176 : vector<14x14x128xf32>
    %c2_135 = arith.constant 2 : index
    %c2_136 = arith.constant 2 : index
    %c0_137 = arith.constant 0 : index
    %c0_138 = arith.constant 0 : index
    %178 = vector.load %arg6[%c2_135, %c2_136, %c0_137, %c0_138] : memref<5x18x14x128xf32, #tpu.memory_space<vmem>>, vector<1x14x14x128xf32>
    %179 = vector.shape_cast %178 : vector<1x14x14x128xf32> to vector<14x14x128xf32>
    %180 = vector.extract_strided_slice %94 {offsets = [12, 0], sizes = [1, 128], strides = [1, 1]} : vector<25x128xf32> to vector<1x128xf32>
    %181 = vector.shape_cast %180 : vector<1x128xf32> to vector<1x1x128xf32>
    %182 = vector.broadcast %181 : vector<1x1x128xf32> to vector<14x14x128xf32>
    %183 = arith.mulf %179, %182 : vector<14x14x128xf32>
    %184 = arith.addf %177, %183 : vector<14x14x128xf32>
    %c3_139 = arith.constant 3 : index
    %c2_140 = arith.constant 2 : index
    %c0_141 = arith.constant 0 : index
    %c0_142 = arith.constant 0 : index
    %185 = vector.load %arg6[%c3_139, %c2_140, %c0_141, %c0_142] : memref<5x18x14x128xf32, #tpu.memory_space<vmem>>, vector<1x14x14x128xf32>
    %186 = vector.shape_cast %185 : vector<1x14x14x128xf32> to vector<14x14x128xf32>
    %187 = vector.extract_strided_slice %94 {offsets = [13, 0], sizes = [1, 128], strides = [1, 1]} : vector<25x128xf32> to vector<1x128xf32>
    %188 = vector.shape_cast %187 : vector<1x128xf32> to vector<1x1x128xf32>
    %189 = vector.broadcast %188 : vector<1x1x128xf32> to vector<14x14x128xf32>
    %190 = arith.mulf %186, %189 : vector<14x14x128xf32>
    %191 = arith.addf %184, %190 : vector<14x14x128xf32>
    %c4_143 = arith.constant 4 : index
    %c2_144 = arith.constant 2 : index
    %c0_145 = arith.constant 0 : index
    %c0_146 = arith.constant 0 : index
    %192 = vector.load %arg6[%c4_143, %c2_144, %c0_145, %c0_146] : memref<5x18x14x128xf32, #tpu.memory_space<vmem>>, vector<1x14x14x128xf32>
    %193 = vector.shape_cast %192 : vector<1x14x14x128xf32> to vector<14x14x128xf32>
    %194 = vector.extract_strided_slice %94 {offsets = [14, 0], sizes = [1, 128], strides = [1, 1]} : vector<25x128xf32> to vector<1x128xf32>
    %195 = vector.shape_cast %194 : vector<1x128xf32> to vector<1x1x128xf32>
    %196 = vector.broadcast %195 : vector<1x1x128xf32> to vector<14x14x128xf32>
    %197 = arith.mulf %193, %196 : vector<14x14x128xf32>
    %198 = arith.addf %191, %197 : vector<14x14x128xf32>
    %c0_147 = arith.constant 0 : index
    %c3_148 = arith.constant 3 : index
    %c0_149 = arith.constant 0 : index
    %c0_150 = arith.constant 0 : index
    %199 = vector.load %arg6[%c0_147, %c3_148, %c0_149, %c0_150] : memref<5x18x14x128xf32, #tpu.memory_space<vmem>>, vector<1x14x14x128xf32>
    %200 = vector.shape_cast %199 : vector<1x14x14x128xf32> to vector<14x14x128xf32>
    %201 = vector.extract_strided_slice %94 {offsets = [15, 0], sizes = [1, 128], strides = [1, 1]} : vector<25x128xf32> to vector<1x128xf32>
    %202 = vector.shape_cast %201 : vector<1x128xf32> to vector<1x1x128xf32>
    %203 = vector.broadcast %202 : vector<1x1x128xf32> to vector<14x14x128xf32>
    %204 = arith.mulf %200, %203 : vector<14x14x128xf32>
    %205 = arith.addf %198, %204 : vector<14x14x128xf32>
    %c1_151 = arith.constant 1 : index
    %c3_152 = arith.constant 3 : index
    %c0_153 = arith.constant 0 : index
    %c0_154 = arith.constant 0 : index
    %206 = vector.load %arg6[%c1_151, %c3_152, %c0_153, %c0_154] : memref<5x18x14x128xf32, #tpu.memory_space<vmem>>, vector<1x14x14x128xf32>
    %207 = vector.shape_cast %206 : vector<1x14x14x128xf32> to vector<14x14x128xf32>
    %208 = vector.extract_strided_slice %94 {offsets = [16, 0], sizes = [1, 128], strides = [1, 1]} : vector<25x128xf32> to vector<1x128xf32>
    %209 = vector.shape_cast %208 : vector<1x128xf32> to vector<1x1x128xf32>
    %210 = vector.broadcast %209 : vector<1x1x128xf32> to vector<14x14x128xf32>
    %211 = arith.mulf %207, %210 : vector<14x14x128xf32>
    %212 = arith.addf %205, %211 : vector<14x14x128xf32>
    %c2_155 = arith.constant 2 : index
    %c3_156 = arith.constant 3 : index
    %c0_157 = arith.constant 0 : index
    %c0_158 = arith.constant 0 : index
    %213 = vector.load %arg6[%c2_155, %c3_156, %c0_157, %c0_158] : memref<5x18x14x128xf32, #tpu.memory_space<vmem>>, vector<1x14x14x128xf32>
    %214 = vector.shape_cast %213 : vector<1x14x14x128xf32> to vector<14x14x128xf32>
    %215 = vector.extract_strided_slice %94 {offsets = [17, 0], sizes = [1, 128], strides = [1, 1]} : vector<25x128xf32> to vector<1x128xf32>
    %216 = vector.shape_cast %215 : vector<1x128xf32> to vector<1x1x128xf32>
    %217 = vector.broadcast %216 : vector<1x1x128xf32> to vector<14x14x128xf32>
    %218 = arith.mulf %214, %217 : vector<14x14x128xf32>
    %219 = arith.addf %212, %218 : vector<14x14x128xf32>
    %c3_159 = arith.constant 3 : index
    %c3_160 = arith.constant 3 : index
    %c0_161 = arith.constant 0 : index
    %c0_162 = arith.constant 0 : index
    %220 = vector.load %arg6[%c3_159, %c3_160, %c0_161, %c0_162] : memref<5x18x14x128xf32, #tpu.memory_space<vmem>>, vector<1x14x14x128xf32>
    %221 = vector.shape_cast %220 : vector<1x14x14x128xf32> to vector<14x14x128xf32>
    %222 = vector.extract_strided_slice %94 {offsets = [18, 0], sizes = [1, 128], strides = [1, 1]} : vector<25x128xf32> to vector<1x128xf32>
    %223 = vector.shape_cast %222 : vector<1x128xf32> to vector<1x1x128xf32>
    %224 = vector.broadcast %223 : vector<1x1x128xf32> to vector<14x14x128xf32>
    %225 = arith.mulf %221, %224 : vector<14x14x128xf32>
    %226 = arith.addf %219, %225 : vector<14x14x128xf32>
    %c4_163 = arith.constant 4 : index
    %c3_164 = arith.constant 3 : index
    %c0_165 = arith.constant 0 : index
    %c0_166 = arith.constant 0 : index
    %227 = vector.load %arg6[%c4_163, %c3_164, %c0_165, %c0_166] : memref<5x18x14x128xf32, #tpu.memory_space<vmem>>, vector<1x14x14x128xf32>
    %228 = vector.shape_cast %227 : vector<1x14x14x128xf32> to vector<14x14x128xf32>
    %229 = vector.extract_strided_slice %94 {offsets = [19, 0], sizes = [1, 128], strides = [1, 1]} : vector<25x128xf32> to vector<1x128xf32>
    %230 = vector.shape_cast %229 : vector<1x128xf32> to vector<1x1x128xf32>
    %231 = vector.broadcast %230 : vector<1x1x128xf32> to vector<14x14x128xf32>
    %232 = arith.mulf %228, %231 : vector<14x14x128xf32>
    %233 = arith.addf %226, %232 : vector<14x14x128xf32>
    %c0_167 = arith.constant 0 : index
    %c4_168 = arith.constant 4 : index
    %c0_169 = arith.constant 0 : index
    %c0_170 = arith.constant 0 : index
    %234 = vector.load %arg6[%c0_167, %c4_168, %c0_169, %c0_170] : memref<5x18x14x128xf32, #tpu.memory_space<vmem>>, vector<1x14x14x128xf32>
    %235 = vector.shape_cast %234 : vector<1x14x14x128xf32> to vector<14x14x128xf32>
    %236 = vector.extract_strided_slice %94 {offsets = [20, 0], sizes = [1, 128], strides = [1, 1]} : vector<25x128xf32> to vector<1x128xf32>
    %237 = vector.shape_cast %236 : vector<1x128xf32> to vector<1x1x128xf32>
    %238 = vector.broadcast %237 : vector<1x1x128xf32> to vector<14x14x128xf32>
    %239 = arith.mulf %235, %238 : vector<14x14x128xf32>
    %240 = arith.addf %233, %239 : vector<14x14x128xf32>
    %c1_171 = arith.constant 1 : index
    %c4_172 = arith.constant 4 : index
    %c0_173 = arith.constant 0 : index
    %c0_174 = arith.constant 0 : index
    %241 = vector.load %arg6[%c1_171, %c4_172, %c0_173, %c0_174] : memref<5x18x14x128xf32, #tpu.memory_space<vmem>>, vector<1x14x14x128xf32>
    %242 = vector.shape_cast %241 : vector<1x14x14x128xf32> to vector<14x14x128xf32>
    %243 = vector.extract_strided_slice %94 {offsets = [21, 0], sizes = [1, 128], strides = [1, 1]} : vector<25x128xf32> to vector<1x128xf32>
    %244 = vector.shape_cast %243 : vector<1x128xf32> to vector<1x1x128xf32>
    %245 = vector.broadcast %244 : vector<1x1x128xf32> to vector<14x14x128xf32>
    %246 = arith.mulf %242, %245 : vector<14x14x128xf32>
    %247 = arith.addf %240, %246 : vector<14x14x128xf32>
    %c2_175 = arith.constant 2 : index
    %c4_176 = arith.constant 4 : index
    %c0_177 = arith.constant 0 : index
    %c0_178 = arith.constant 0 : index
    %248 = vector.load %arg6[%c2_175, %c4_176, %c0_177, %c0_178] : memref<5x18x14x128xf32, #tpu.memory_space<vmem>>, vector<1x14x14x128xf32>
    %249 = vector.shape_cast %248 : vector<1x14x14x128xf32> to vector<14x14x128xf32>
    %250 = vector.extract_strided_slice %94 {offsets = [22, 0], sizes = [1, 128], strides = [1, 1]} : vector<25x128xf32> to vector<1x128xf32>
    %251 = vector.shape_cast %250 : vector<1x128xf32> to vector<1x1x128xf32>
    %252 = vector.broadcast %251 : vector<1x1x128xf32> to vector<14x14x128xf32>
    %253 = arith.mulf %249, %252 : vector<14x14x128xf32>
    %254 = arith.addf %247, %253 : vector<14x14x128xf32>
    %c3_179 = arith.constant 3 : index
    %c4_180 = arith.constant 4 : index
    %c0_181 = arith.constant 0 : index
    %c0_182 = arith.constant 0 : index
    %255 = vector.load %arg6[%c3_179, %c4_180, %c0_181, %c0_182] : memref<5x18x14x128xf32, #tpu.memory_space<vmem>>, vector<1x14x14x128xf32>
    %256 = vector.shape_cast %255 : vector<1x14x14x128xf32> to vector<14x14x128xf32>
    %257 = vector.extract_strided_slice %94 {offsets = [23, 0], sizes = [1, 128], strides = [1, 1]} : vector<25x128xf32> to vector<1x128xf32>
    %258 = vector.shape_cast %257 : vector<1x128xf32> to vector<1x1x128xf32>
    %259 = vector.broadcast %258 : vector<1x1x128xf32> to vector<14x14x128xf32>
    %260 = arith.mulf %256, %259 : vector<14x14x128xf32>
    %261 = arith.addf %254, %260 : vector<14x14x128xf32>
    %c4_183 = arith.constant 4 : index
    %c4_184 = arith.constant 4 : index
    %c0_185 = arith.constant 0 : index
    %c0_186 = arith.constant 0 : index
    %262 = vector.load %arg6[%c4_183, %c4_184, %c0_185, %c0_186] : memref<5x18x14x128xf32, #tpu.memory_space<vmem>>, vector<1x14x14x128xf32>
    %263 = vector.shape_cast %262 : vector<1x14x14x128xf32> to vector<14x14x128xf32>
    %264 = vector.extract_strided_slice %94 {offsets = [24, 0], sizes = [1, 128], strides = [1, 1]} : vector<25x128xf32> to vector<1x128xf32>
    %265 = vector.shape_cast %264 : vector<1x128xf32> to vector<1x1x128xf32>
    %266 = vector.broadcast %265 : vector<1x1x128xf32> to vector<14x14x128xf32>
    %267 = arith.mulf %263, %266 : vector<14x14x128xf32>
    %268 = arith.addf %261, %267 : vector<14x14x128xf32>
    %c0_187 = arith.constant 0 : index
    %c0_188 = arith.constant 0 : index
    %c0_189 = arith.constant 0 : index
    %269 = vector.load %arg5[%c0_187, %c0_188, %c0_189] : memref<14x14x128xf32, #tpu.memory_space<vmem>>, vector<14x14x128xf32>
    tpu.vector_store %arg5[%c0_187, %c0_188, %c0_189], %268 {strides = array<i32>} : memref<14x14x128xf32, #tpu.memory_space<vmem>>, vector<14x14x128xf32>,
    return
  }
  func.func @transform_0(%arg0: i32) -> (i32, i32, i32) {
    %c0_i32 = arith.constant 0 : i32
    %c0_i32_0 = arith.constant 0 : i32
    %c0_i32_1 = arith.constant 0 : i32
    return %c0_i32, %c0_i32_0, %arg0 : i32, i32, i32
  }
  func.func @transform_1(%arg0: i32) -> (i32, i32) {
    %c0_i32 = arith.constant 0 : i32
    %c0_i32_0 = arith.constant 0 : i32
    return %c0_i32, %arg0 : i32, i32
  }
  func.func @transform_2(%arg0: i32) -> (i32, i32) {
    %c0_i32 = arith.constant 0 : i32
    %c0_i32_0 = arith.constant 0 : i32
    return %c0_i32, %arg0 : i32, i32
  }
  func.func @transform_3(%arg0: i32) -> (i32, i32) {
    %c0_i32 = arith.constant 0 : i32
    %c0_i32_0 = arith.constant 0 : i32
    return %c0_i32, %arg0 : i32, i32
  }
  func.func @transform_4(%arg0: i32) -> (i32, i32, i32) {
    %c0_i32 = arith.constant 0 : i32
    %c0_i32_0 = arith.constant 0 : i32
    %c0_i32_1 = arith.constant 0 : i32
    return %c0_i32, %c0_i32_0, %arg0 : i32, i32, i32
  }
}

</mosaic_0001>

<llo_original>
// kernel: tpu_custom_call.1
$region0: #{tpu_custom_call.1}
  #allocation0 [shape = 'u32[]', space=smem, size = 0x4, offset = 0x4, fixed_abs, tag = 'smem constant byte address 0x4 - core index']
  #allocation1 [shape = 'u32[144,128]{1,0:T(1,128)}', space=vmem, size = 0x12000, scoped, tag = 'internal scratch']
  #allocation2 [shape = 'f32[5,18,14,128]{3,2,1,0:T(8,128)}', space=vmem, size = 0xb4000, scoped, tag = 'scratch operand']
  %s0 = inlined_call_operand.hbm [shape: f32[14,14,384], index: 0, kind: input, shape index: {}]
  %s1 = inlined_call_operand.vmem [shape: f32[1,384], index: 1, kind: input, shape index: {}]
  %s2 = inlined_call_operand.vmem [shape: f32[1,384], index: 2, kind: input, shape index: {}]
  %s3 = inlined_call_operand.hbm [shape: f32[25,384], index: 3, kind: input, shape index: {}]
  %s4 = inlined_call_operand.hbm [shape: f32[14,14,384], index: 4, kind: output, shape index: {}]
  %s5 = sld [smem:[#allocation0]]
  $region57: #{tpu_custom_call.1} parent=0
    _
  %s7 = ssub.s32 1, %s5
  %s8 = scalar_select 0, %s7, %s5
  $region1: #{tpu_custom_call.1} parent=0
    #allocation3 [shape = 'u8[229376]{0}', space=vmem, size = 0x38000, scoped, tag = 'input window, operand 0']
    #allocation4 [shape = 's32[2]{0}', space=sflag, size = 0x8, scoped, tag = 'scoped memory for tpu_custom_call.1']
    #allocation5 [shape = 's32[2]{0}', space=sflag, size = 0x8, scoped, tag = 'scoped memory for tpu_custom_call.1']
    #allocation6 [shape = 'u8[32768]{0}', space=vmem, size = 0x8000, scoped, tag = 'input window, operand 3']
    #allocation7 [shape = 's32[2]{0}', space=sflag, size = 0x8, scoped, tag = 'scoped memory for tpu_custom_call.1']
    #allocation8 [shape = 'u8[229376]{0}', space=vmem, size = 0x38000, scoped, tag = 'output window, operand 0']
    %9 = vsyncpa [#allocation4], 0
    %s10 = scalar_lea.sflag [#allocation4], 1
    %11 = vsyncpa %s10, 0
    %12 = vsyncpa [#allocation7], 0
    %s13 = scalar_lea.sflag [#allocation7], 1
    %14 = vsyncpa %s13, 0
    %15 = vsyncpa [#allocation5], 0
    %s16 = scalar_lea.sflag [#allocation5], 1
    %17 = vsyncpa %s16, 0
    loop: start=0, step=1, limit=5
    $region2: #{tpu_custom_call.1} parent=1 // loop_pre_header
      _
    $region3: #{tpu_custom_call.1} parent=1 // loop_header
      %s19 = sphi 0, %s23
      %p20 = scmp.ge.s32.totalorder %s19, 5
      %s29 = sphi 0, %s31
      %s32 = sphi 0, %s29
      %s33 = sphi 0, %s32
      %s49 = sphi 0, %s33
      %s55 = sphi 0, %s57
      %s58 = sphi 0, %s55
      %s59 = sphi 0, %s58
      %s75 = sphi 0, %s59
      %s81 = sphi 0, %s83
      %s84 = sphi 0, %s81
      %s85 = sphi 0, %s84
      %s101 = sphi 0, %s85
      %s107 = sphi 0, %s109
      %s110 = sphi 0, %s107
      %s111 = sphi 0, %s110
      %s127 = sphi 0, %s111
      %s133 = sphi 0, %s135
      %s136 = sphi 0, %s133
      %s137 = sphi 0, %s136
      %s153 = sphi 0, %s137
    $region4: #{tpu_custom_call.1} parent=1 // loop_header_branch
      %22 = sbr.rel (%p20) target = $region8
    $region5: #{tpu_custom_call.1} parent=1 // loop_body
      %s24 = ssub.s32 %s19, 1
      %s25 = ssub.s32 %s19, 2
      %s26 = sadd.s32 %s19, 1
      %s27 = ssub.s32 %s19, %s26
      %p28 = scmp.eq.s32.totalorder %s27, 0
      %s30 = sadd.s32 %s29, 1
      %s31 = scalar_select %p28, %s29, %s30
      %p34 = pneg %p28
      %p35 = scmp.eq.s32.totalorder %s19, 2
      %p36 = por %p34, %p35
      %p37 = scmp.ne.s32.totalorder %s29, %s32
      %p38 = scmp.eq.s32.totalorder %s19, 0
      %p39 = por %p37, %p38
      %p40 = scmp.ne.s32.totalorder %s29, %s32
      %p41 = scmp.eq.s32.totalorder %s24, 2
      %p42 = por %p40, %p41
      %p43 = scmp.ne.s32.totalorder %s32, %s33
      %p44 = scmp.eq.s32.totalorder %s24, 0
      %p45 = por %p43, %p44
      %p46 = scmp.ne.s32.totalorder %s32, %s33
      %p47 = scmp.eq.s32.totalorder %s25, 2
      %p48 = por %p46, %p47
      %p50 = scmp.ne.s32.totalorder %s33, %s49
      %p51 = scmp.eq.s32.totalorder %s25, 0
      %p52 = por %p50, %p51
      %s53 = ssub.s32 %s19, %s26
      %p54 = scmp.eq.s32.totalorder %s53, 0
      %s56 = sadd.s32 %s55, 1
      %s57 = scalar_select %p54, %s55, %s56
      %p60 = pneg %p54
      %p61 = scmp.eq.s32.totalorder %s19, 2
      %p62 = por %p60, %p61
      %p63 = scmp.ne.s32.totalorder %s55, %s58
      %p64 = scmp.eq.s32.totalorder %s19, 0
      %p65 = por %p63, %p64
      %p66 = scmp.ne.s32.totalorder %s55, %s58
      %p67 = scmp.eq.s32.totalorder %s24, 2
      %p68 = por %p66, %p67
      %p69 = scmp.ne.s32.totalorder %s58, %s59
      %p70 = scmp.eq.s32.totalorder %s24, 0
      %p71 = por %p69, %p70
      %p72 = scmp.ne.s32.totalorder %s58, %s59
      %p73 = scmp.eq.s32.totalorder %s25, 2
      %p74 = por %p72, %p73
      %p76 = scmp.ne.s32.totalorder %s59, %s75
      %p77 = scmp.eq.s32.totalorder %s25, 0
      %p78 = por %p76, %p77
      %s79 = ssub.s32 %s19, %s26
      %p80 = scmp.eq.s32.totalorder %s79, 0
      %s82 = sadd.s32 %s81, 1
      %s83 = scalar_select %p80, %s81, %s82
      %p86 = pneg %p80
      %p87 = scmp.eq.s32.totalorder %s19, 2
      %p88 = por %p86, %p87
      %p89 = scmp.ne.s32.totalorder %s81, %s84
      %p90 = scmp.eq.s32.totalorder %s19, 0
      %p91 = por %p89, %p90
      %p92 = scmp.ne.s32.totalorder %s81, %s84
      %p93 = scmp.eq.s32.totalorder %s24, 2
      %p94 = por %p92, %p93
      %p95 = scmp.ne.s32.totalorder %s84, %s85
      %p96 = scmp.eq.s32.totalorder %s24, 0
      %p97 = por %p95, %p96
      %p98 = scmp.ne.s32.totalorder %s84, %s85
      %p99 = scmp.eq.s32.totalorder %s25, 2
      %p100 = por %p98, %p99
      %p102 = scmp.ne.s32.totalorder %s85, %s101
      %p103 = scmp.eq.s32.totalorder %s25, 0
      %p104 = por %p102, %p103
      %s105 = ssub.s32 %s19, %s26
      %p106 = scmp.eq.s32.totalorder %s105, 0
      %s108 = sadd.s32 %s107, 1
      %s109 = scalar_select %p106, %s107, %s108
      %p112 = pneg %p106
      %p113 = scmp.eq.s32.totalorder %s19, 2
      %p114 = por %p112, %p113
      %p115 = scmp.ne.s32.totalorder %s107, %s110
      %p116 = scmp.eq.s32.totalorder %s19, 0
      %p117 = por %p115, %p116
      %p118 = scmp.ne.s32.totalorder %s107, %s110
      %p119 = scmp.eq.s32.totalorder %s24, 2
      %p120 = por %p118, %p119
      %p121 = scmp.ne.s32.totalorder %s110, %s111
      %p122 = scmp.eq.s32.totalorder %s24, 0
      %p123 = por %p121, %p122
      %p124 = scmp.ne.s32.totalorder %s110, %s111
      %p125 = scmp.eq.s32.totalorder %s25, 2
      %p126 = por %p124, %p125
      %p128 = scmp.ne.s32.totalorder %s111, %s127
      %p129 = scmp.eq.s32.totalorder %s25, 0
      %p130 = por %p128, %p129
      %s131 = ssub.s32 %s19, %s26
      %p132 = scmp.eq.s32.totalorder %s131, 0
      %s134 = sadd.s32 %s133, 1
      %s135 = scalar_select %p132, %s133, %s134
      %p138 = pneg %p132
      %p139 = scmp.eq.s32.totalorder %s19, 2
      %p140 = por %p138, %p139
      %p141 = scmp.ne.s32.totalorder %s133, %s136
      %p142 = scmp.eq.s32.totalorder %s19, 0
      %p143 = por %p141, %p142
      %p144 = scmp.ne.s32.totalorder %s133, %s136
      %p145 = scmp.eq.s32.totalorder %s24, 2
      %p146 = por %p144, %p145
      %p147 = scmp.ne.s32.totalorder %s136, %s137
      %p148 = scmp.eq.s32.totalorder %s24, 0
      %p149 = por %p147, %p148
      %p150 = scmp.ne.s32.totalorder %s136, %s137
      %p151 = scmp.eq.s32.totalorder %s25, 2
      %p152 = por %p150, %p151
      %p154 = scmp.ne.s32.totalorder %s137, %s153
      %p155 = scmp.eq.s32.totalorder %s25, 0
      %p156 = por %p154, %p155
      %p157 = scmp.le.s32.totalorder 1, %s19
      %p158 = scmp.lt.s32.totalorder %s19, 4
      %p159 = pnand %p157, %p158
      %p160 = pneg %p159
      // Predicated region
      $region9: #{tpu_custom_call.1} parent=5 // pred_check
        _
      $region10: #{tpu_custom_call.1} parent=5 // pred_check_branch
        %162 = sbr.rel (%p159) target = $region12
      $region11: #{tpu_custom_call.1} parent=5 // pred_region
        %s163 = ssub.s32 %s19, 1
      $region12: #{tpu_custom_call.1} parent=5 // pred_fallthru
        _
      %p164 = scmp.lt.s32.totalorder %s19, 3
      // Predicated region
      $region13: #{tpu_custom_call.1} parent=5 // pred_check
        %p165 = pneg %p164
      $region14: #{tpu_custom_call.1} parent=5 // pred_check_branch
        %167 = sbr.rel (%p165) target = $region16
      $region15: #{tpu_custom_call.1} parent=5 // pred_region
        // Predicated region
        $region17: #{tpu_custom_call.1} parent=15 // pred_check
          %p168 = pneg %p39
        $region18: #{tpu_custom_call.1} parent=15 // pred_check_branch
          %170 = sbr.rel (%p168) target = $region20
        $region19: #{tpu_custom_call.1} parent=15 // pred_region
          %s171 = sand.u32 %s29, 1
          %s172 = scalar_lea.sflag [#allocation4], %s171
          %s173 = sand.u32 %s29, 1
          %s174 = smul.addr %s173, 224
          %s175 = scalar_lea.vmem [#allocation3], %s174
          %s177 = ssub.s32 3584, 3584
          %178 = vsyncadd %s172, %s177
          %s179 = smul.addr %s19, 128
          %s180 = scalar_lea.hbm %s0, %s179
          %s181 = sshll.u32 %s175, 4
          %s182 = int_to_ptr.vmem [resolvable:$true] %s181
          %187 = dma.hbm_to_vmem [thread:$0]  %s180, 3584, %s182, %s172, 384, 128, 8
        $region20: #{tpu_custom_call.1} parent=15 // pred_fallthru
          _
        // Predicated region
        $region21: #{tpu_custom_call.1} parent=15 // pred_check
          %p188 = pneg %p65
        $region22: #{tpu_custom_call.1} parent=15 // pred_check_branch
          %190 = sbr.rel (%p188) target = $region24
        $region23: #{tpu_custom_call.1} parent=15 // pred_region
          %p191 = scmp.lt.s32.totalorder %s19, 2
          %s192 = scalar_select %p191, %s19, 2
          %s193 = scalar_lea.vmem %s1, %s192
        $region24: #{tpu_custom_call.1} parent=15 // pred_fallthru
          _
        // Predicated region
        $region25: #{tpu_custom_call.1} parent=15 // pred_check
          %p194 = pneg %p91
        $region26: #{tpu_custom_call.1} parent=15 // pred_check_branch
          %196 = sbr.rel (%p194) target = $region28
        $region27: #{tpu_custom_call.1} parent=15 // pred_region
          %p197 = scmp.lt.s32.totalorder %s19, 2
          %s198 = scalar_select %p197, %s19, 2
          %s199 = scalar_lea.vmem %s2, %s198
        $region28: #{tpu_custom_call.1} parent=15 // pred_fallthru
          _
        // Predicated region
        $region29: #{tpu_custom_call.1} parent=15 // pred_check
          %p200 = pneg %p117
        $region30: #{tpu_custom_call.1} parent=15 // pred_check_branch
          %202 = sbr.rel (%p200) target = $region32
        $region31: #{tpu_custom_call.1} parent=15 // pred_region
          %s203 = sand.u32 %s107, 1
          %s204 = scalar_lea.sflag [#allocation7], %s203
          %s205 = sand.u32 %s107, 1
          %s206 = smul.addr %s205, 32
          %s207 = scalar_lea.vmem [#allocation6], %s206
          %s209 = ssub.s32 512, 512
          %210 = vsyncadd %s204, %s209
          %s211 = smul.addr %s19, 128
          %s212 = scalar_lea.hbm %s3, %s211
          %s213 = sshll.u32 %s207, 4
          %s214 = int_to_ptr.vmem [resolvable:$true] %s213
          %219 = dma.hbm_to_vmem [thread:$0]  %s212, 512, %s214, %s204, 384, 128, 8
        $region32: #{tpu_custom_call.1} parent=15 // pred_fallthru
          _
      $region16: #{tpu_custom_call.1} parent=5 // pred_fallthru
        _
      %p220 = scmp.le.s32.totalorder 1, %s19
      %p221 = scmp.lt.s32.totalorder %s19, 4
      %p222 = pnand %p220, %p221
      %p223 = pneg %p222
      // Predicated region
      $region33: #{tpu_custom_call.1} parent=5 // pred_check
        _
      $region34: #{tpu_custom_call.1} parent=5 // pred_check_branch
        %225 = sbr.rel (%p222) target = $region36
      $region35: #{tpu_custom_call.1} parent=5 // pred_region
        %s226 = ssub.s32 %s19, 1
        %s227 = sand.u32 %s32, 1
        %s228 = scalar_lea.sflag [#allocation4], %s227
        %s229 = sand.u32 %s32, 1
        %s230 = smul.addr %s229, 224
        %s231 = scalar_lea.vmem [#allocation3], %s230
        // Predicated region
        $region37: #{tpu_custom_call.1} parent=35 // pred_check
          %p232 = pneg %p45
        $region38: #{tpu_custom_call.1} parent=35 // pred_check_branch
          %234 = sbr.rel (%p232) target = $region40
        $region39: #{tpu_custom_call.1} parent=35 // pred_region
          %235 = dma.done %s228, 3584
        $region40: #{tpu_custom_call.1} parent=35 // pred_fallthru
          _
        %s236 = sand.u32 %s110, 1
        %s237 = scalar_lea.sflag [#allocation7], %s236
        %s238 = sand.u32 %s110, 1
        %s239 = smul.addr %s238, 32
        %s240 = scalar_lea.vmem [#allocation6], %s239
        // Predicated region
        $region41: #{tpu_custom_call.1} parent=35 // pred_check
          %p241 = pneg %p123
        $region42: #{tpu_custom_call.1} parent=35 // pred_check_branch
          %243 = sbr.rel (%p241) target = $region44
        $region43: #{tpu_custom_call.1} parent=35 // pred_region
          %244 = dma.done %s237, 512
        $region44: #{tpu_custom_call.1} parent=35 // pred_fallthru
          _
        %s245 = sand.u32 %s32, 1
        %s246 = scalar_lea.sflag [#allocation4], %s245
        %s247 = sand.u32 %s32, 1
        %s248 = smul.addr %s247, 224
        %s249 = scalar_lea.vmem [#allocation3], %s248
        %p250 = pneg %p45
        %p251 = pneg %p42
        %p252 = scmp.lt.s32.totalorder %s24, 2
        %s253 = scalar_select %p252, %s24, 2
        %s254 = scalar_lea.vmem %s1, %s253
        %p255 = pneg %p71
        %p256 = pneg %p68
        %p257 = scmp.lt.s32.totalorder %s24, 2
        %s258 = scalar_select %p257, %s24, 2
        %s259 = scalar_lea.vmem %s2, %s258
        %p260 = pneg %p97
        %p261 = pneg %p94
        %s262 = sand.u32 %s110, 1
        %s263 = scalar_lea.sflag [#allocation7], %s262
        %s264 = sand.u32 %s110, 1
        %s265 = smul.addr %s264, 32
        %s266 = scalar_lea.vmem [#allocation6], %s265
        %p267 = pneg %p123
        %p268 = pneg %p120
        %p269 = pneg %p149
        %p270 = pneg %p146
        %s271 = sand.u32 %s136, 1
        %s272 = scalar_lea.sflag [#allocation5], %s271
        %s273 = sand.u32 %s136, 1
        %s274 = smul.addr %s273, 224
        %s275 = scalar_lea.vmem [#allocation8], %s274
        %p276 = scmp.lt.s32.totalorder %s24, 2
        %s277 = scalar_select %p276, %s24, 2
        %s278 = scalar_lea.vmem %s1, %s277
        %p279 = scmp.lt.s32.totalorder %s24, 2
        %s280 = scalar_select %p279, %s24, 2
        %s281 = scalar_lea.vmem %s2, %s280
        %v282 = vld [vmem:[%s231] sm:$0xff]
        %v283 = vld [vmem:[%s231 + $0x8] sm:$0x3f]
        %v284 = vld [vmem:[%s231 + $0x10] sm:$0xff]
        %v285 = vld [vmem:[%s231 + $0x18] sm:$0x3f]
        %v286 = vld [vmem:[%s231 + $0x20] sm:$0xff]
        %v287 = vld [vmem:[%s231 + $0x28] sm:$0x3f]
        %v288 = vld [vmem:[%s231 + $0x30] sm:$0xff]
        %v289 = vld [vmem:[%s231 + $0x38] sm:$0x3f]
        %v290 = vld [vmem:[%s231 + $0x40] sm:$0xff]
        %v291 = vld [vmem:[%s231 + $0x48] sm:$0x3f]
        %v292 = vld [vmem:[%s231 + $0x50] sm:$0xff]
        %v293 = vld [vmem:[%s231 + $0x58] sm:$0x3f]
        %v294 = vld [vmem:[%s231 + $0x60] sm:$0xff]
        %v295 = vld [vmem:[%s231 + $0x68] sm:$0x3f]
        %v296 = vld [vmem:[%s231 + $0x70] sm:$0xff]
        %v297 = vld [vmem:[%s231 + $0x78] sm:$0x3f]
        %v298 = vld [vmem:[%s231 + $0x80] sm:$0xff]
        %v299 = vld [vmem:[%s231 + $0x88] sm:$0x3f]
        %v300 = vld [vmem:[%s231 + $0x90] sm:$0xff]
        %v301 = vld [vmem:[%s231 + $0x98] sm:$0x3f]
        %v302 = vld [vmem:[%s231 + $0xa0] sm:$0xff]
        %v303 = vld [vmem:[%s231 + $0xa8] sm:$0x3f]
        %v304 = vld [vmem:[%s231 + $0xb0] sm:$0xff]
        %v305 = vld [vmem:[%s231 + $0xb8] sm:$0x3f]
        %v306 = vld [vmem:[%s231 + $0xc0] sm:$0xff]
        %v307 = vld [vmem:[%s231 + $0xc8] sm:$0x3f]
        %v308 = vld [vmem:[%s231 + $0xd0] sm:$0xff]
        %v309 = vld [vmem:[%s231 + $0xd8] sm:$0x3f]
        %vm310 = vcmask 1045504
        %v311 = vsel %vm310, %v283, 0.0
        %v312 = vadd.f32 %v282, %v311
        %v313 = vadd.f32 %v312, %v284
        %v314 = vsel %vm310, %v285, 0.0
        %v315 = vadd.f32 %v313, %v314
        %v316 = vadd.f32 %v315, %v286
        %v317 = vsel %vm310, %v287, 0.0
        %v318 = vadd.f32 %v316, %v317
        %v319 = vadd.f32 %v318, %v288
        %v320 = vsel %vm310, %v289, 0.0
        %v321 = vadd.f32 %v319, %v320
        %v322 = vadd.f32 %v321, %v290
        %v323 = vsel %vm310, %v291, 0.0
        %v324 = vadd.f32 %v322, %v323
        %v325 = vadd.f32 %v324, %v292
        %v326 = vsel %vm310, %v293, 0.0
        %v327 = vadd.f32 %v325, %v326
        %v328 = vadd.f32 %v327, %v294
        %v329 = vsel %vm310, %v295, 0.0
        %v330 = vadd.f32 %v328, %v329
        %v331 = vadd.f32 %v330, %v296
        %v332 = vsel %vm310, %v297, 0.0
        %v333 = vadd.f32 %v331, %v332
        %v334 = vadd.f32 %v333, %v298
        %v335 = vsel %vm310, %v299, 0.0
        %v336 = vadd.f32 %v334, %v335
        %v337 = vadd.f32 %v336, %v300
        %v338 = vsel %vm310, %v301, 0.0
        %v339 = vadd.f32 %v337, %v338
        %v340 = vadd.f32 %v339, %v302
        %v341 = vsel %vm310, %v303, 0.0
        %v342 = vadd.f32 %v340, %v341
        %v343 = vadd.f32 %v342, %v304
        %v344 = vsel %vm310, %v305, 0.0
        %v345 = vadd.f32 %v343, %v344
        %v346 = vadd.f32 %v345, %v306
        %v347 = vsel %vm310, %v307, 0.0
        %v348 = vadd.f32 %v346, %v347
        %v349 = vadd.f32 %v348, %v308
        %v350 = vsel %vm310, %v309, 0.0
        %v351 = vadd.f32 %v349, %v350
        %v352 = vrot.slane %v351, 4
        %v353 = vadd.f32 %v351, %v352
        %v354 = vrot.slane %v353, 2
        %v355 = vadd.f32 %v353, %v354
        %v356 = vrot.slane %v355, 1
        %v357 = vadd.f32 %v355, %v356
        %v358 = vmul.f32 %v282, %v282
        %v359 = vmul.f32 %v283, %v283
        %v360 = vmul.f32 %v284, %v284
        %v361 = vmul.f32 %v285, %v285
        %v362 = vmul.f32 %v286, %v286
        %v363 = vmul.f32 %v287, %v287
        %v364 = vmul.f32 %v288, %v288
        %v365 = vmul.f32 %v289, %v289
        %v366 = vmul.f32 %v290, %v290
        %v367 = vmul.f32 %v291, %v291
        %v368 = vmul.f32 %v292, %v292
        %v369 = vmul.f32 %v293, %v293
        %v370 = vmul.f32 %v294, %v294
        %v371 = vmul.f32 %v295, %v295
        %v372 = vmul.f32 %v296, %v296
        %v373 = vmul.f32 %v297, %v297
        %v374 = vmul.f32 %v298, %v298
        %v375 = vmul.f32 %v299, %v299
        %v376 = vmul.f32 %v300, %v300
        %v377 = vmul.f32 %v301, %v301
        %v378 = vmul.f32 %v302, %v302
        %v379 = vmul.f32 %v303, %v303
        %v380 = vmul.f32 %v304, %v304
        %v381 = vmul.f32 %v305, %v305
        %v382 = vmul.f32 %v306, %v306
        %v383 = vmul.f32 %v307, %v307
        %v384 = vmul.f32 %v308, %v308
        %v385 = vmul.f32 %v309, %v309
        %v386 = vsel %vm310, %v359, 0.0
        %v387 = vadd.f32 %v358, %v386
        %v388 = vadd.f32 %v387, %v360
        %v389 = vsel %vm310, %v361, 0.0
        %v390 = vadd.f32 %v388, %v389
        %v391 = vadd.f32 %v390, %v362
        %v392 = vsel %vm310, %v363, 0.0
        %v393 = vadd.f32 %v391, %v392
        %v394 = vadd.f32 %v393, %v364
        %v395 = vsel %vm310, %v365, 0.0
        %v396 = vadd.f32 %v394, %v395
        %v397 = vadd.f32 %v396, %v366
        %v398 = vsel %vm310, %v367, 0.0
        %v399 = vadd.f32 %v397, %v398
        %v400 = vadd.f32 %v399, %v368
        %v401 = vsel %vm310, %v369, 0.0
        %v402 = vadd.f32 %v400, %v401
        %v403 = vadd.f32 %v402, %v370
        %v404 = vsel %vm310, %v371, 0.0
        %v405 = vadd.f32 %v403, %v404
        %v406 = vadd.f32 %v405, %v372
        %v407 = vsel %vm310, %v373, 0.0
        %v408 = vadd.f32 %v406, %v407
        %v409 = vadd.f32 %v408, %v374
        %v410 = vsel %vm310, %v375, 0.0
        %v411 = vadd.f32 %v409, %v410
        %v412 = vadd.f32 %v411, %v376
        %v413 = vsel %vm310, %v377, 0.0
        %v414 = vadd.f32 %v412, %v413
        %v415 = vadd.f32 %v414, %v378
        %v416 = vsel %vm310, %v379, 0.0
        %v417 = vadd.f32 %v415, %v416
        %v418 = vadd.f32 %v417, %v380
        %v419 = vsel %vm310, %v381, 0.0
        %v420 = vadd.f32 %v418, %v419
        %v421 = vadd.f32 %v420, %v382
        %v422 = vsel %vm310, %v383, 0.0
        %v423 = vadd.f32 %v421, %v422
        %v424 = vadd.f32 %v423, %v384
        %v425 = vsel %vm310, %v385, 0.0
        %v426 = vadd.f32 %v424, %v425
        %v427 = vrot.slane %v426, 4
        %v428 = vadd.f32 %v426, %v427
        %v429 = vrot.slane %v428, 2
        %v430 = vadd.f32 %v428, %v429
        %v431 = vrot.slane %v430, 1
        %v432 = vadd.f32 %v430, %v431
        %v433 = vmul.f32 %v357, 0.0051020407
        %v434 = vmul.f32 %v432, 0.0051020407
        %v435 = vmul.f32 %v433, %v433
        %v436 = vsub.f32 %v434, %v435
        %v437 = vld [vmem:[%s278] sm:$0x1]
        %v438 = vadd.f32 %v436, 1e-05
        %v439 = vrsqrt.pop %v438
        %v440 = vmul.f32 %v437, %v439
        %v441 = vld [vmem:[%s281] sm:$0x1]
        %v442 = vmul.f32 %v433, %v440
        %v443 = vsub.f32 %v441, %v442
        %v445 = vlaneseq
        %v446 = vshrl.u32 %v445, 7
        %v447 = vsub.s32 0, %v446
        %v448 = vrot.slane %v440, %v447
        %v450 = vmul.f32 %v282, %v448
        %v451 = vmul.f32 %v283, %v448
        %v452 = vmul.f32 %v284, %v448
        %v453 = vmul.f32 %v285, %v448
        %v454 = vmul.f32 %v286, %v448
        %v455 = vmul.f32 %v287, %v448
        %v456 = vmul.f32 %v288, %v448
        %v457 = vmul.f32 %v289, %v448
        %v458 = vmul.f32 %v290, %v448
        %v459 = vmul.f32 %v291, %v448
        %v460 = vmul.f32 %v292, %v448
        %v461 = vmul.f32 %v293, %v448
        %v462 = vmul.f32 %v294, %v448
        %v463 = vmul.f32 %v295, %v448
        %v464 = vmul.f32 %v296, %v448
        %v465 = vmul.f32 %v297, %v448
        %v466 = vmul.f32 %v298, %v448
        %v467 = vmul.f32 %v299, %v448
        %v468 = vmul.f32 %v300, %v448
        %v469 = vmul.f32 %v301, %v448
        %v470 = vmul.f32 %v302, %v448
        %v471 = vmul.f32 %v303, %v448
        %v472 = vmul.f32 %v304, %v448
        %v473 = vmul.f32 %v305, %v448
        %v474 = vmul.f32 %v306, %v448
        %v475 = vmul.f32 %v307, %v448
        %v476 = vmul.f32 %v308, %v448
        %v477 = vmul.f32 %v309, %v448
        %v479 = vlaneseq
        %v480 = vshrl.u32 %v479, 7
        %v481 = vsub.s32 0, %v480
        %v482 = vrot.slane %v443, %v481
        %v484 = vadd.f32 %v450, %v482
        %v485 = vadd.f32 %v451, %v482
        %v486 = vadd.f32 %v452, %v482
        %v487 = vadd.f32 %v453, %v482
        %v488 = vadd.f32 %v454, %v482
        %v489 = vadd.f32 %v455, %v482
        %v490 = vadd.f32 %v456, %v482
        %v491 = vadd.f32 %v457, %v482
        %v492 = vadd.f32 %v458, %v482
        %v493 = vadd.f32 %v459, %v482
        %v494 = vadd.f32 %v460, %v482
        %v495 = vadd.f32 %v461, %v482
        %v496 = vadd.f32 %v462, %v482
        %v497 = vadd.f32 %v463, %v482
        %v498 = vadd.f32 %v464, %v482
        %v499 = vadd.f32 %v465, %v482
        %v500 = vadd.f32 %v466, %v482
        %v501 = vadd.f32 %v467, %v482
        %v502 = vadd.f32 %v468, %v482
        %v503 = vadd.f32 %v469, %v482
        %v504 = vadd.f32 %v470, %v482
        %v505 = vadd.f32 %v471, %v482
        %v506 = vadd.f32 %v472, %v482
        %v507 = vadd.f32 %v473, %v482
        %v508 = vadd.f32 %v474, %v482
        %v509 = vadd.f32 %v475, %v482
        %v510 = vadd.f32 %v476, %v482
        %v511 = vadd.f32 %v477, %v482
        %v512 = vmax.f32 %v484, 0.0
        %v513 = vmax.f32 %v485, 0.0
        %v514 = vmax.f32 %v486, 0.0
        %v515 = vmax.f32 %v487, 0.0
        %v516 = vmax.f32 %v488, 0.0
        %v517 = vmax.f32 %v489, 0.0
        %v518 = vmax.f32 %v490, 0.0
        %v519 = vmax.f32 %v491, 0.0
        %v520 = vmax.f32 %v492, 0.0
        %v521 = vmax.f32 %v493, 0.0
        %v522 = vmax.f32 %v494, 0.0
        %v523 = vmax.f32 %v495, 0.0
        %v524 = vmax.f32 %v496, 0.0
        %v525 = vmax.f32 %v497, 0.0
        %v526 = vmax.f32 %v498, 0.0
        %v527 = vmax.f32 %v499, 0.0
        %v528 = vmax.f32 %v500, 0.0
        %v529 = vmax.f32 %v501, 0.0
        %v530 = vmax.f32 %v502, 0.0
        %v531 = vmax.f32 %v503, 0.0
        %v532 = vmax.f32 %v504, 0.0
        %v533 = vmax.f32 %v505, 0.0
        %v534 = vmax.f32 %v506, 0.0
        %v535 = vmax.f32 %v507, 0.0
        %v536 = vmax.f32 %v508, 0.0
        %v537 = vmax.f32 %v509, 0.0
        %v538 = vmax.f32 %v510, 0.0
        %v539 = vmax.f32 %v511, 0.0
        %540 = vst [vmem:[#allocation2] sm:$0xff] 0.0
        %541 = vst [vmem:[#allocation2 + $0x8] sm:$0x3f] 0.0
        %542 = vst [vmem:[#allocation2 + $0x10] sm:$0xff] 0.0
        %543 = vst [vmem:[#allocation2 + $0x18] sm:$0x3f] 0.0
        %s544 = scalar_lea.vmem [#allocation2], 256
        %545 = vst [vmem:[%s544] sm:$0xff] 0.0
        %546 = vst [vmem:[%s544 + $0x8] sm:$0x3f] 0.0
        %547 = vst [vmem:[%s544 + $0x10] sm:$0xff] 0.0
        %548 = vst [vmem:[%s544 + $0x18] sm:$0x3f] 0.0
        %s549 = scalar_lea.vmem [#allocation2], 32
        %550 = vst [vmem:[%s549] sm:$0x3] 0.0
        %551 = vst [vmem:[%s549 + $0x10] sm:$0x3] 0.0
        %552 = vst [vmem:[%s549 + $0x20] sm:$0x3] 0.0
        %553 = vst [vmem:[%s549 + $0x30] sm:$0x3] 0.0
        %554 = vst [vmem:[%s549 + $0x40] sm:$0x3] 0.0
        %555 = vst [vmem:[%s549 + $0x50] sm:$0x3] 0.0
        %556 = vst [vmem:[%s549 + $0x60] sm:$0x3] 0.0
        %557 = vst [vmem:[%s549 + $0x70] sm:$0x3] 0.0
        %558 = vst [vmem:[%s549 + $0x80] sm:$0x3] 0.0
        %559 = vst [vmem:[%s549 + $0x90] sm:$0x3] 0.0
        %560 = vst [vmem:[%s549 + $0xa0] sm:$0x3] 0.0
        %561 = vst [vmem:[%s549 + $0xb0] sm:$0x3] 0.0
        %562 = vst [vmem:[%s549 + $0xc0] sm:$0x3] 0.0
        %563 = vst [vmem:[%s549 + $0xd0] sm:$0x3] 0.0
        %564 = vst [vmem:[%s549 + $0x2] sm:$0xff] %v512
        %565 = vst [vmem:[%s549 + $0xa] sm:$0xf] %v513
        %566 = vst [vmem:[%s549 + $0x12] sm:$0xff] %v514
        %567 = vst [vmem:[%s549 + $0x1a] sm:$0xf] %v515
        %568 = vst [vmem:[%s549 + $0x22] sm:$0xff] %v516
        %569 = vst [vmem:[%s549 + $0x2a] sm:$0xf] %v517
        %570 = vst [vmem:[%s549 + $0x32] sm:$0xff] %v518
        %571 = vst [vmem:[%s549 + $0x3a] sm:$0xf] %v519
        %572 = vst [vmem:[%s549 + $0x42] sm:$0xff] %v520
        %573 = vst [vmem:[%s549 + $0x4a] sm:$0xf] %v521
        %574 = vst [vmem:[%s549 + $0x52] sm:$0xff] %v522
        %575 = vst [vmem:[%s549 + $0x5a] sm:$0xf] %v523
        %576 = vst [vmem:[%s549 + $0x62] sm:$0xff] %v524
        %577 = vst [vmem:[%s549 + $0x6a] sm:$0xf] %v525
        %578 = vst [vmem:[%s549 + $0x72] sm:$0xff] %v526
        %579 = vst [vmem:[%s549 + $0x7a] sm:$0xf] %v527
        %580 = vst [vmem:[%s549 + $0x82] sm:$0xff] %v528
        %581 = vst [vmem:[%s549 + $0x8a] sm:$0xf] %v529
        %582 = vst [vmem:[%s549 + $0x92] sm:$0xff] %v530
        %583 = vst [vmem:[%s549 + $0x9a] sm:$0xf] %v531
        %584 = vst [vmem:[%s549 + $0xa2] sm:$0xff] %v532
        %585 = vst [vmem:[%s549 + $0xaa] sm:$0xf] %v533
        %586 = vst [vmem:[%s549 + $0xb2] sm:$0xff] %v534
        %587 = vst [vmem:[%s549 + $0xba] sm:$0xf] %v535
        %588 = vst [vmem:[%s549 + $0xc2] sm:$0xff] %v536
        %589 = vst [vmem:[%s549 + $0xca] sm:$0xf] %v537
        %590 = vst [vmem:[%s549 + $0xd2] sm:$0xff] %v538
        %591 = vst [vmem:[%s549 + $0xda] sm:$0xf] %v539
        %s592 = scalar_lea.vmem [#allocation2], 288
        %593 = vst [vmem:[%s592] sm:$0xff] 0.0
        %594 = vst [vmem:[%s592 + $0x8] sm:$0x3f] 0.0
        %595 = vst [vmem:[%s592 + $0x10] sm:$0xff] 0.0
        %596 = vst [vmem:[%s592 + $0x18] sm:$0x3f] 0.0
        %s597 = scalar_lea.vmem [#allocation2], 544
        %598 = vst [vmem:[%s597] sm:$0xff] 0.0
        %599 = vst [vmem:[%s597 + $0x8] sm:$0x3f] 0.0
        %600 = vst [vmem:[%s597 + $0x10] sm:$0xff] 0.0
        %601 = vst [vmem:[%s597 + $0x18] sm:$0x3f] 0.0
        %s602 = scalar_lea.vmem [#allocation2], 320
        %603 = vst [vmem:[%s602] sm:$0x1] 0.0
        %604 = vst [vmem:[%s602 + $0x10] sm:$0x1] 0.0
        %605 = vst [vmem:[%s602 + $0x20] sm:$0x1] 0.0
        %606 = vst [vmem:[%s602 + $0x30] sm:$0x1] 0.0
        %607 = vst [vmem:[%s602 + $0x40] sm:$0x1] 0.0
        %608 = vst [vmem:[%s602 + $0x50] sm:$0x1] 0.0
        %609 = vst [vmem:[%s602 + $0x60] sm:$0x1] 0.0
        %610 = vst [vmem:[%s602 + $0x70] sm:$0x1] 0.0
        %611 = vst [vmem:[%s602 + $0x80] sm:$0x1] 0.0
        %612 = vst [vmem:[%s602 + $0x90] sm:$0x1] 0.0
        %613 = vst [vmem:[%s602 + $0xa0] sm:$0x1] 0.0
        %614 = vst [vmem:[%s602 + $0xb0] sm:$0x1] 0.0
        %615 = vst [vmem:[%s602 + $0xc0] sm:$0x1] 0.0
        %616 = vst [vmem:[%s602 + $0xd0] sm:$0x1] 0.0
        %617 = vst [vmem:[%s602 + $0x1] sm:$0xff] %v512
        %618 = vst [vmem:[%s602 + $0x9] sm:$0x1f] %v513
        %619 = vst [vmem:[%s602 + $0x11] sm:$0xff] %v514
        %620 = vst [vmem:[%s602 + $0x19] sm:$0x1f] %v515
        %621 = vst [vmem:[%s602 + $0x21] sm:$0xff] %v516
        %622 = vst [vmem:[%s602 + $0x29] sm:$0x1f] %v517
        %623 = vst [vmem:[%s602 + $0x31] sm:$0xff] %v518
        %624 = vst [vmem:[%s602 + $0x39] sm:$0x1f] %v519
        %625 = vst [vmem:[%s602 + $0x41] sm:$0xff] %v520
        %626 = vst [vmem:[%s602 + $0x49] sm:$0x1f] %v521
        %627 = vst [vmem:[%s602 + $0x51] sm:$0xff] %v522
        %628 = vst [vmem:[%s602 + $0x59] sm:$0x1f] %v523
        %629 = vst [vmem:[%s602 + $0x61] sm:$0xff] %v524
        %630 = vst [vmem:[%s602 + $0x69] sm:$0x1f] %v525
        %631 = vst [vmem:[%s602 + $0x71] sm:$0xff] %v526
        %632 = vst [vmem:[%s602 + $0x79] sm:$0x1f] %v527
        %633 = vst [vmem:[%s602 + $0x81] sm:$0xff] %v528
        %634 = vst [vmem:[%s602 + $0x89] sm:$0x1f] %v529
        %635 = vst [vmem:[%s602 + $0x91] sm:$0xff] %v530
        %636 = vst [vmem:[%s602 + $0x99] sm:$0x1f] %v531
        %637 = vst [vmem:[%s602 + $0xa1] sm:$0xff] %v532
        %638 = vst [vmem:[%s602 + $0xa9] sm:$0x1f] %v533
        %639 = vst [vmem:[%s602 + $0xb1] sm:$0xff] %v534
        %640 = vst [vmem:[%s602 + $0xb9] sm:$0x1f] %v535
        %641 = vst [vmem:[%s602 + $0xc1] sm:$0xff] %v536
        %642 = vst [vmem:[%s602 + $0xc9] sm:$0x1f] %v537
        %643 = vst [vmem:[%s602 + $0xd1] sm:$0xff] %v538
        %644 = vst [vmem:[%s602 + $0xd9] sm:$0x1f] %v539
        %s645 = scalar_lea.vmem [#allocation2], 576
        %646 = vst [vmem:[%s645] sm:$0xff] 0.0
        %647 = vst [vmem:[%s645 + $0x8] sm:$0x3f] 0.0
        %648 = vst [vmem:[%s645 + $0x10] sm:$0xff] 0.0
        %649 = vst [vmem:[%s645 + $0x18] sm:$0x3f] 0.0
        %s650 = scalar_lea.vmem [#allocation2], 832
        %651 = vst [vmem:[%s650] sm:$0xff] 0.0
        %652 = vst [vmem:[%s650 + $0x8] sm:$0x3f] 0.0
        %653 = vst [vmem:[%s650 + $0x10] sm:$0xff] 0.0
        %654 = vst [vmem:[%s650 + $0x18] sm:$0x3f] 0.0
        %s655 = scalar_lea.vmem [#allocation2], 608
        %656 = vst [vmem:[%s655] sm:$0xff] %v512
        %657 = vst [vmem:[%s655 + $0x8] sm:$0x3f] %v513
        %658 = vst [vmem:[%s655 + $0x10] sm:$0xff] %v514
        %659 = vst [vmem:[%s655 + $0x18] sm:$0x3f] %v515
        %660 = vst [vmem:[%s655 + $0x20] sm:$0xff] %v516
        %661 = vst [vmem:[%s655 + $0x28] sm:$0x3f] %v517
        %662 = vst [vmem:[%s655 + $0x30] sm:$0xff] %v518
        %663 = vst [vmem:[%s655 + $0x38] sm:$0x3f] %v519
        %664 = vst [vmem:[%s655 + $0x40] sm:$0xff] %v520
        %665 = vst [vmem:[%s655 + $0x48] sm:$0x3f] %v521
        %666 = vst [vmem:[%s655 + $0x50] sm:$0xff] %v522
        %667 = vst [vmem:[%s655 + $0x58] sm:$0x3f] %v523
        %668 = vst [vmem:[%s655 + $0x60] sm:$0xff] %v524
        %669 = vst [vmem:[%s655 + $0x68] sm:$0x3f] %v525
        %670 = vst [vmem:[%s655 + $0x70] sm:$0xff] %v526
        %671 = vst [vmem:[%s655 + $0x78] sm:$0x3f] %v527
        %672 = vst [vmem:[%s655 + $0x80] sm:$0xff] %v528
        %673 = vst [vmem:[%s655 + $0x88] sm:$0x3f] %v529
        %674 = vst [vmem:[%s655 + $0x90] sm:$0xff] %v530
        %675 = vst [vmem:[%s655 + $0x98] sm:$0x3f] %v531
        %676 = vst [vmem:[%s655 + $0xa0] sm:$0xff] %v532
        %677 = vst [vmem:[%s655 + $0xa8] sm:$0x3f] %v533
        %678 = vst [vmem:[%s655 + $0xb0] sm:$0xff] %v534
        %679 = vst [vmem:[%s655 + $0xb8] sm:$0x3f] %v535
        %680 = vst [vmem:[%s655 + $0xc0] sm:$0xff] %v536
        %681 = vst [vmem:[%s655 + $0xc8] sm:$0x3f] %v537
        %682 = vst [vmem:[%s655 + $0xd0] sm:$0xff] %v538
        %683 = vst [vmem:[%s655 + $0xd8] sm:$0x3f] %v539
        %s684 = scalar_lea.vmem [#allocation2], 864
        %685 = vst [vmem:[%s684] sm:$0xff] 0.0
        %686 = vst [vmem:[%s684 + $0x8] sm:$0x3f] 0.0
        %687 = vst [vmem:[%s684 + $0x10] sm:$0xff] 0.0
        %688 = vst [vmem:[%s684 + $0x18] sm:$0x3f] 0.0
        %s689 = scalar_lea.vmem [#allocation2], 1120
        %690 = vst [vmem:[%s689] sm:$0xff] 0.0
        %691 = vst [vmem:[%s689 + $0x8] sm:$0x3f] 0.0
        %692 = vst [vmem:[%s689 + $0x10] sm:$0xff] 0.0
        %693 = vst [vmem:[%s689 + $0x18] sm:$0x3f] 0.0
        %s694 = scalar_lea.vmem [#allocation2], 896
        %695 = vst [vmem:[%s694 + $0xd] sm:$0x1] 0.0
        %696 = vst [vmem:[%s694 + $0x1d] sm:$0x1] 0.0
        %697 = vst [vmem:[%s694 + $0x2d] sm:$0x1] 0.0
        %698 = vst [vmem:[%s694 + $0x3d] sm:$0x1] 0.0
        %699 = vst [vmem:[%s694 + $0x4d] sm:$0x1] 0.0
        %700 = vst [vmem:[%s694 + $0x5d] sm:$0x1] 0.0
        %701 = vst [vmem:[%s694 + $0x6d] sm:$0x1] 0.0
        %702 = vst [vmem:[%s694 + $0x7d] sm:$0x1] 0.0
        %703 = vst [vmem:[%s694 + $0x8d] sm:$0x1] 0.0
        %704 = vst [vmem:[%s694 + $0x9d] sm:$0x1] 0.0
        %705 = vst [vmem:[%s694 + $0xad] sm:$0x1] 0.0
        %706 = vst [vmem:[%s694 + $0xbd] sm:$0x1] 0.0
        %707 = vst [vmem:[%s694 + $0xcd] sm:$0x1] 0.0
        %708 = vst [vmem:[%s694 + $0xdd] sm:$0x1] 0.0
        %709 = vst [vmem:[%s694 - $0x1] sm:$0xfe] %v512
        %710 = vst [vmem:[%s694 + $0x7] sm:$0x3f] %v513
        %711 = vst [vmem:[%s694 + $0xf] sm:$0xfe] %v514
        %712 = vst [vmem:[%s694 + $0x17] sm:$0x3f] %v515
        %713 = vst [vmem:[%s694 + $0x1f] sm:$0xfe] %v516
        %714 = vst [vmem:[%s694 + $0x27] sm:$0x3f] %v517
        %715 = vst [vmem:[%s694 + $0x2f] sm:$0xfe] %v518
        %716 = vst [vmem:[%s694 + $0x37] sm:$0x3f] %v519
        %717 = vst [vmem:[%s694 + $0x3f] sm:$0xfe] %v520
        %718 = vst [vmem:[%s694 + $0x47] sm:$0x3f] %v521
        %719 = vst [vmem:[%s694 + $0x4f] sm:$0xfe] %v522
        %720 = vst [vmem:[%s694 + $0x57] sm:$0x3f] %v523
        %721 = vst [vmem:[%s694 + $0x5f] sm:$0xfe] %v524
        %722 = vst [vmem:[%s694 + $0x67] sm:$0x3f] %v525
        %723 = vst [vmem:[%s694 + $0x6f] sm:$0xfe] %v526
        %724 = vst [vmem:[%s694 + $0x77] sm:$0x3f] %v527
        %725 = vst [vmem:[%s694 + $0x7f] sm:$0xfe] %v528
        %726 = vst [vmem:[%s694 + $0x87] sm:$0x3f] %v529
        %727 = vst [vmem:[%s694 + $0x8f] sm:$0xfe] %v530
        %728 = vst [vmem:[%s694 + $0x97] sm:$0x3f] %v531
        %729 = vst [vmem:[%s694 + $0x9f] sm:$0xfe] %v532
        %730 = vst [vmem:[%s694 + $0xa7] sm:$0x3f] %v533
        %731 = vst [vmem:[%s694 + $0xaf] sm:$0xfe] %v534
        %732 = vst [vmem:[%s694 + $0xb7] sm:$0x3f] %v535
        %733 = vst [vmem:[%s694 + $0xbf] sm:$0xfe] %v536
        %734 = vst [vmem:[%s694 + $0xc7] sm:$0x3f] %v537
        %735 = vst [vmem:[%s694 + $0xcf] sm:$0xfe] %v538
        %736 = vst [vmem:[%s694 + $0xd7] sm:$0x3f] %v539
        %s737 = scalar_lea.vmem [#allocation2], 1152
        %738 = vst [vmem:[%s737] sm:$0xff] 0.0
        %739 = vst [vmem:[%s737 + $0x8] sm:$0x3f] 0.0
        %740 = vst [vmem:[%s737 + $0x10] sm:$0xff] 0.0
        %741 = vst [vmem:[%s737 + $0x18] sm:$0x3f] 0.0
        %s742 = scalar_lea.vmem [#allocation2], 1408
        %743 = vst [vmem:[%s742] sm:$0xff] 0.0
        %744 = vst [vmem:[%s742 + $0x8] sm:$0x3f] 0.0
        %745 = vst [vmem:[%s742 + $0x10] sm:$0xff] 0.0
        %746 = vst [vmem:[%s742 + $0x18] sm:$0x3f] 0.0
        %s747 = scalar_lea.vmem [#allocation2], 1184
        %748 = vst [vmem:[%s747 + $0xc] sm:$0x3] 0.0
        %749 = vst [vmem:[%s747 + $0x1c] sm:$0x3] 0.0
        %750 = vst [vmem:[%s747 + $0x2c] sm:$0x3] 0.0
        %751 = vst [vmem:[%s747 + $0x3c] sm:$0x3] 0.0
        %752 = vst [vmem:[%s747 + $0x4c] sm:$0x3] 0.0
        %753 = vst [vmem:[%s747 + $0x5c] sm:$0x3] 0.0
        %754 = vst [vmem:[%s747 + $0x6c] sm:$0x3] 0.0
        %755 = vst [vmem:[%s747 + $0x7c] sm:$0x3] 0.0
        %756 = vst [vmem:[%s747 + $0x8c] sm:$0x3] 0.0
        %757 = vst [vmem:[%s747 + $0x9c] sm:$0x3] 0.0
        %758 = vst [vmem:[%s747 + $0xac] sm:$0x3] 0.0
        %759 = vst [vmem:[%s747 + $0xbc] sm:$0x3] 0.0
        %760 = vst [vmem:[%s747 + $0xcc] sm:$0x3] 0.0
        %761 = vst [vmem:[%s747 + $0xdc] sm:$0x3] 0.0
        %762 = vst [vmem:[%s747 - $0x2] sm:$0xfc] %v512
        %763 = vst [vmem:[%s747 + $0x6] sm:$0x3f] %v513
        %764 = vst [vmem:[%s747 + $0xe] sm:$0xfc] %v514
        %765 = vst [vmem:[%s747 + $0x16] sm:$0x3f] %v515
        %766 = vst [vmem:[%s747 + $0x1e] sm:$0xfc] %v516
        %767 = vst [vmem:[%s747 + $0x26] sm:$0x3f] %v517
        %768 = vst [vmem:[%s747 + $0x2e] sm:$0xfc] %v518
        %769 = vst [vmem:[%s747 + $0x36] sm:$0x3f] %v519
        %770 = vst [vmem:[%s747 + $0x3e] sm:$0xfc] %v520
        %771 = vst [vmem:[%s747 + $0x46] sm:$0x3f] %v521
        %772 = vst [vmem:[%s747 + $0x4e] sm:$0xfc] %v522
        %773 = vst [vmem:[%s747 + $0x56] sm:$0x3f] %v523
        %774 = vst [vmem:[%s747 + $0x5e] sm:$0xfc] %v524
        %775 = vst [vmem:[%s747 + $0x66] sm:$0x3f] %v525
        %776 = vst [vmem:[%s747 + $0x6e] sm:$0xfc] %v526
        %777 = vst [vmem:[%s747 + $0x76] sm:$0x3f] %v527
        %778 = vst [vmem:[%s747 + $0x7e] sm:$0xfc] %v528
        %779 = vst [vmem:[%s747 + $0x86] sm:$0x3f] %v529
        %780 = vst [vmem:[%s747 + $0x8e] sm:$0xfc] %v530
        %781 = vst [vmem:[%s747 + $0x96] sm:$0x3f] %v531
        %782 = vst [vmem:[%s747 + $0x9e] sm:$0xfc] %v532
        %783 = vst [vmem:[%s747 + $0xa6] sm:$0x3f] %v533
        %784 = vst [vmem:[%s747 + $0xae] sm:$0xfc] %v534
        %785 = vst [vmem:[%s747 + $0xb6] sm:$0x3f] %v535
        %786 = vst [vmem:[%s747 + $0xbe] sm:$0xfc] %v536
        %787 = vst [vmem:[%s747 + $0xc6] sm:$0x3f] %v537
        %788 = vst [vmem:[%s747 + $0xce] sm:$0xfc] %v538
        %789 = vst [vmem:[%s747 + $0xd6] sm:$0x3f] %v539
        %v790 = vld [vmem:[%s240] sm:$0xff]
        %v791 = vld [vmem:[%s240 + $0x8] sm:$0xff]
        %v792 = vld [vmem:[%s240 + $0x10] sm:$0xff]
        %v793 = vld [vmem:[%s240 + $0x18] sm:$0x1]
        %v794 = vld [vmem:[#allocation2] sm:$0xff]
        %v795 = vld [vmem:[#allocation2 + $0x8] sm:$0x3f]
        %v796 = vld [vmem:[#allocation2 + $0x10] sm:$0xff]
        %v797 = vld [vmem:[#allocation2 + $0x18] sm:$0x3f]
        %v798 = vld [vmem:[#allocation2 + $0x20] sm:$0xff]
        %v799 = vld [vmem:[#allocation2 + $0x28] sm:$0x3f]
        %v800 = vld [vmem:[#allocation2 + $0x30] sm:$0xff]
        %v801 = vld [vmem:[#allocation2 + $0x38] sm:$0x3f]
        %v802 = vld [vmem:[#allocation2 + $0x40] sm:$0xff]
        %v803 = vld [vmem:[#allocation2 + $0x48] sm:$0x3f]
        %v804 = vld [vmem:[#allocation2 + $0x50] sm:$0xff]
        %v805 = vld [vmem:[#allocation2 + $0x58] sm:$0x3f]
        %v806 = vld [vmem:[#allocation2 + $0x60] sm:$0xff]
        %v807 = vld [vmem:[#allocation2 + $0x68] sm:$0x3f]
        %v808 = vld [vmem:[#allocation2 + $0x70] sm:$0xff]
        %v809 = vld [vmem:[#allocation2 + $0x78] sm:$0x3f]
        %v810 = vld [vmem:[#allocation2 + $0x80] sm:$0xff]
        %v811 = vld [vmem:[#allocation2 + $0x88] sm:$0x3f]
        %v812 = vld [vmem:[#allocation2 + $0x90] sm:$0xff]
        %v813 = vld [vmem:[#allocation2 + $0x98] sm:$0x3f]
        %v814 = vld [vmem:[#allocation2 + $0xa0] sm:$0xff]
        %v815 = vld [vmem:[#allocation2 + $0xa8] sm:$0x3f]
        %v816 = vld [vmem:[#allocation2 + $0xb0] sm:$0xff]
        %v817 = vld [vmem:[#allocation2 + $0xb8] sm:$0x3f]
        %v818 = vld [vmem:[#allocation2 + $0xc0] sm:$0xff]
        %v819 = vld [vmem:[#allocation2 + $0xc8] sm:$0x3f]
        %v820 = vld [vmem:[#allocation2 + $0xd0] sm:$0xff]
        %v821 = vld [vmem:[#allocation2 + $0xd8] sm:$0x3f]
        %v822 = vlaneseq
        %v823 = vshrl.u32 %v822, 7
        %v824 = vsub.s32 0, %v823
        %v825 = vrot.slane %v790, %v824
        %v826 = vmul.f32 %v794, %v825
        %v827 = vmul.f32 %v795, %v825
        %v828 = vmul.f32 %v796, %v825
        %v829 = vmul.f32 %v797, %v825
        %v830 = vmul.f32 %v798, %v825
        %v831 = vmul.f32 %v799, %v825
        %v832 = vmul.f32 %v800, %v825
        %v833 = vmul.f32 %v801, %v825
        %v834 = vmul.f32 %v802, %v825
        %v835 = vmul.f32 %v803, %v825
        %v836 = vmul.f32 %v804, %v825
        %v837 = vmul.f32 %v805, %v825
        %v838 = vmul.f32 %v806, %v825
        %v839 = vmul.f32 %v807, %v825
        %v840 = vmul.f32 %v808, %v825
        %v841 = vmul.f32 %v809, %v825
        %v842 = vmul.f32 %v810, %v825
        %v843 = vmul.f32 %v811, %v825
        %v844 = vmul.f32 %v812, %v825
        %v845 = vmul.f32 %v813, %v825
        %v846 = vmul.f32 %v814, %v825
        %v847 = vmul.f32 %v815, %v825
        %v848 = vmul.f32 %v816, %v825
        %v849 = vmul.f32 %v817, %v825
        %v850 = vmul.f32 %v818, %v825
        %v851 = vmul.f32 %v819, %v825
        %v852 = vmul.f32 %v820, %v825
        %v853 = vmul.f32 %v821, %v825
        %v854 = vld [vmem:[%s592] sm:$0xff]
        %v855 = vld [vmem:[%s592 + $0x8] sm:$0x3f]
        %v856 = vld [vmem:[%s592 + $0x10] sm:$0xff]
        %v857 = vld [vmem:[%s592 + $0x18] sm:$0x3f]
        %v858 = vld [vmem:[%s592 + $0x20] sm:$0xff]
        %v859 = vld [vmem:[%s592 + $0x28] sm:$0x3f]
        %v860 = vld [vmem:[%s592 + $0x30] sm:$0xff]
        %v861 = vld [vmem:[%s592 + $0x38] sm:$0x3f]
        %v862 = vld [vmem:[%s592 + $0x40] sm:$0xff]
        %v863 = vld [vmem:[%s592 + $0x48] sm:$0x3f]
        %v864 = vld [vmem:[%s592 + $0x50] sm:$0xff]
        %v865 = vld [vmem:[%s592 + $0x58] sm:$0x3f]
        %v866 = vld [vmem:[%s592 + $0x60] sm:$0xff]
        %v867 = vld [vmem:[%s592 + $0x68] sm:$0x3f]
        %v868 = vld [vmem:[%s592 + $0x70] sm:$0xff]
        %v869 = vld [vmem:[%s592 + $0x78] sm:$0x3f]
        %v870 = vld [vmem:[%s592 + $0x80] sm:$0xff]
        %v871 = vld [vmem:[%s592 + $0x88] sm:$0x3f]
        %v872 = vld [vmem:[%s592 + $0x90] sm:$0xff]
        %v873 = vld [vmem:[%s592 + $0x98] sm:$0x3f]
        %v874 = vld [vmem:[%s592 + $0xa0] sm:$0xff]
        %v875 = vld [vmem:[%s592 + $0xa8] sm:$0x3f]
        %v876 = vld [vmem:[%s592 + $0xb0] sm:$0xff]
        %v877 = vld [vmem:[%s592 + $0xb8] sm:$0x3f]
        %v878 = vld [vmem:[%s592 + $0xc0] sm:$0xff]
        %v879 = vld [vmem:[%s592 + $0xc8] sm:$0x3f]
        %v880 = vld [vmem:[%s592 + $0xd0] sm:$0xff]
        %v881 = vld [vmem:[%s592 + $0xd8] sm:$0x3f]
        %v882 = vlaneseq
        %v883 = vshrl.u32 %v882, 7
        %v884 = vsub.s32 1, %v883
        %v885 = vrot.slane %v790, %v884
        %v886 = vmul.f32 %v854, %v885
        %v887 = vmul.f32 %v855, %v885
        %v888 = vmul.f32 %v856, %v885
        %v889 = vmul.f32 %v857, %v885
        %v890 = vmul.f32 %v858, %v885
        %v891 = vmul.f32 %v859, %v885
        %v892 = vmul.f32 %v860, %v885
        %v893 = vmul.f32 %v861, %v885
        %v894 = vmul.f32 %v862, %v885
        %v895 = vmul.f32 %v863, %v885
        %v896 = vmul.f32 %v864, %v885
        %v897 = vmul.f32 %v865, %v885
        %v898 = vmul.f32 %v866, %v885
        %v899 = vmul.f32 %v867, %v885
        %v900 = vmul.f32 %v868, %v885
        %v901 = vmul.f32 %v869, %v885
        %v902 = vmul.f32 %v870, %v885
        %v903 = vmul.f32 %v871, %v885
        %v904 = vmul.f32 %v872, %v885
        %v905 = vmul.f32 %v873, %v885
        %v906 = vmul.f32 %v874, %v885
        %v907 = vmul.f32 %v875, %v885
        %v908 = vmul.f32 %v876, %v885
        %v909 = vmul.f32 %v877, %v885
        %v910 = vmul.f32 %v878, %v885
        %v911 = vmul.f32 %v879, %v885
        %v912 = vmul.f32 %v880, %v885
        %v913 = vmul.f32 %v881, %v885
        %v914 = vadd.f32 %v826, %v886
        %v915 = vadd.f32 %v827, %v887
        %v916 = vadd.f32 %v828, %v888
        %v917 = vadd.f32 %v829, %v889
        %v918 = vadd.f32 %v830, %v890
        %v919 = vadd.f32 %v831, %v891
        %v920 = vadd.f32 %v832, %v892
        %v921 = vadd.f32 %v833, %v893
        %v922 = vadd.f32 %v834, %v894
        %v923 = vadd.f32 %v835, %v895
        %v924 = vadd.f32 %v836, %v896
        %v925 = vadd.f32 %v837, %v897
        %v926 = vadd.f32 %v838, %v898
        %v927 = vadd.f32 %v839, %v899
        %v928 = vadd.f32 %v840, %v900
        %v929 = vadd.f32 %v841, %v901
        %v930 = vadd.f32 %v842, %v902
        %v931 = vadd.f32 %v843, %v903
        %v932 = vadd.f32 %v844, %v904
        %v933 = vadd.f32 %v845, %v905
        %v934 = vadd.f32 %v846, %v906
        %v935 = vadd.f32 %v847, %v907
        %v936 = vadd.f32 %v848, %v908
        %v937 = vadd.f32 %v849, %v909
        %v938 = vadd.f32 %v850, %v910
        %v939 = vadd.f32 %v851, %v911
        %v940 = vadd.f32 %v852, %v912
        %v941 = vadd.f32 %v853, %v913
        %v942 = vld [vmem:[%s645] sm:$0xff]
        %v943 = vld [vmem:[%s645 + $0x8] sm:$0x3f]
        %v944 = vld [vmem:[%s645 + $0x10] sm:$0xff]
        %v945 = vld [vmem:[%s645 + $0x18] sm:$0x3f]
        %v946 = vld [vmem:[%s645 + $0x20] sm:$0xff]
        %v947 = vld [vmem:[%s645 + $0x28] sm:$0x3f]
        %v948 = vld [vmem:[%s645 + $0x30] sm:$0xff]
        %v949 = vld [vmem:[%s645 + $0x38] sm:$0x3f]
        %v950 = vld [vmem:[%s645 + $0x40] sm:$0xff]
        %v951 = vld [vmem:[%s645 + $0x48] sm:$0x3f]
        %v952 = vld [vmem:[%s645 + $0x50] sm:$0xff]
        %v953 = vld [vmem:[%s645 + $0x58] sm:$0x3f]
        %v954 = vld [vmem:[%s645 + $0x60] sm:$0xff]
        %v955 = vld [vmem:[%s645 + $0x68] sm:$0x3f]
        %v956 = vld [vmem:[%s645 + $0x70] sm:$0xff]
        %v957 = vld [vmem:[%s645 + $0x78] sm:$0x3f]
        %v958 = vld [vmem:[%s645 + $0x80] sm:$0xff]
        %v959 = vld [vmem:[%s645 + $0x88] sm:$0x3f]
        %v960 = vld [vmem:[%s645 + $0x90] sm:$0xff]
        %v961 = vld [vmem:[%s645 + $0x98] sm:$0x3f]
        %v962 = vld [vmem:[%s645 + $0xa0] sm:$0xff]
        %v963 = vld [vmem:[%s645 + $0xa8] sm:$0x3f]
        %v964 = vld [vmem:[%s645 + $0xb0] sm:$0xff]
        %v965 = vld [vmem:[%s645 + $0xb8] sm:$0x3f]
        %v966 = vld [vmem:[%s645 + $0xc0] sm:$0xff]
        %v967 = vld [vmem:[%s645 + $0xc8] sm:$0x3f]
        %v968 = vld [vmem:[%s645 + $0xd0] sm:$0xff]
        %v969 = vld [vmem:[%s645 + $0xd8] sm:$0x3f]
        %v970 = vlaneseq
        %v971 = vshrl.u32 %v970, 7
        %v972 = vsub.s32 2, %v971
        %v973 = vrot.slane %v790, %v972
        %v974 = vmul.f32 %v942, %v973
        %v975 = vmul.f32 %v943, %v973
        %v976 = vmul.f32 %v944, %v973
        %v977 = vmul.f32 %v945, %v973
        %v978 = vmul.f32 %v946, %v973
        %v979 = vmul.f32 %v947, %v973
        %v980 = vmul.f32 %v948, %v973
        %v981 = vmul.f32 %v949, %v973
        %v982 = vmul.f32 %v950, %v973
        %v983 = vmul.f32 %v951, %v973
        %v984 = vmul.f32 %v952, %v973
        %v985 = vmul.f32 %v953, %v973
        %v986 = vmul.f32 %v954, %v973
        %v987 = vmul.f32 %v955, %v973
        %v988 = vmul.f32 %v956, %v973
        %v989 = vmul.f32 %v957, %v973
        %v990 = vmul.f32 %v958, %v973
        %v991 = vmul.f32 %v959, %v973
        %v992 = vmul.f32 %v960, %v973
        %v993 = vmul.f32 %v961, %v973
        %v994 = vmul.f32 %v962, %v973
        %v995 = vmul.f32 %v963, %v973
        %v996 = vmul.f32 %v964, %v973
        %v997 = vmul.f32 %v965, %v973
        %v998 = vmul.f32 %v966, %v973
        %v999 = vmul.f32 %v967, %v973
        %v1000 = vmul.f32 %v968, %v973
        %v1001 = vmul.f32 %v969, %v973
        %v1002 = vadd.f32 %v914, %v974
        %v1003 = vadd.f32 %v915, %v975
        %v1004 = vadd.f32 %v916, %v976
        %v1005 = vadd.f32 %v917, %v977
        %v1006 = vadd.f32 %v918, %v978
        %v1007 = vadd.f32 %v919, %v979
        %v1008 = vadd.f32 %v920, %v980
        %v1009 = vadd.f32 %v921, %v981
        %v1010 = vadd.f32 %v922, %v982
        %v1011 = vadd.f32 %v923, %v983
        %v1012 = vadd.f32 %v924, %v984
        %v1013 = vadd.f32 %v925, %v985
        %v1014 = vadd.f32 %v926, %v986
        %v1015 = vadd.f32 %v927, %v987
        %v1016 = vadd.f32 %v928, %v988
        %v1017 = vadd.f32 %v929, %v989
        %v1018 = vadd.f32 %v930, %v990
        %v1019 = vadd.f32 %v931, %v991
        %v1020 = vadd.f32 %v932, %v992
        %v1021 = vadd.f32 %v933, %v993
        %v1022 = vadd.f32 %v934, %v994
        %v1023 = vadd.f32 %v935, %v995
        %v1024 = vadd.f32 %v936, %v996
        %v1025 = vadd.f32 %v937, %v997
        %v1026 = vadd.f32 %v938, %v998
        %v1027 = vadd.f32 %v939, %v999
        %v1028 = vadd.f32 %v940, %v1000
        %v1029 = vadd.f32 %v941, %v1001
        %v1030 = vld [vmem:[%s684] sm:$0xff]
        %v1031 = vld [vmem:[%s684 + $0x8] sm:$0x3f]
        %v1032 = vld [vmem:[%s684 + $0x10] sm:$0xff]
        %v1033 = vld [vmem:[%s684 + $0x18] sm:$0x3f]
        %v1034 = vld [vmem:[%s684 + $0x20] sm:$0xff]
        %v1035 = vld [vmem:[%s684 + $0x28] sm:$0x3f]
        %v1036 = vld [vmem:[%s684 + $0x30] sm:$0xff]
        %v1037 = vld [vmem:[%s684 + $0x38] sm:$0x3f]
        %v1038 = vld [vmem:[%s684 + $0x40] sm:$0xff]
        %v1039 = vld [vmem:[%s684 + $0x48] sm:$0x3f]
        %v1040 = vld [vmem:[%s684 + $0x50] sm:$0xff]
        %v1041 = vld [vmem:[%s684 + $0x58] sm:$0x3f]
        %v1042 = vld [vmem:[%s684 + $0x60] sm:$0xff]
        %v1043 = vld [vmem:[%s684 + $0x68] sm:$0x3f]
        %v1044 = vld [vmem:[%s684 + $0x70] sm:$0xff]
        %v1045 = vld [vmem:[%s684 + $0x78] sm:$0x3f]
        %v1046 = vld [vmem:[%s684 + $0x80] sm:$0xff]
        %v1047 = vld [vmem:[%s684 + $0x88] sm:$0x3f]
        %v1048 = vld [vmem:[%s684 + $0x90] sm:$0xff]
        %v1049 = vld [vmem:[%s684 + $0x98] sm:$0x3f]
        %v1050 = vld [vmem:[%s684 + $0xa0] sm:$0xff]
        %v1051 = vld [vmem:[%s684 + $0xa8] sm:$0x3f]
        %v1052 = vld [vmem:[%s684 + $0xb0] sm:$0xff]
        %v1053 = vld [vmem:[%s684 + $0xb8] sm:$0x3f]
        %v1054 = vld [vmem:[%s684 + $0xc0] sm:$0xff]
        %v1055 = vld [vmem:[%s684 + $0xc8] sm:$0x3f]
        %v1056 = vld [vmem:[%s684 + $0xd0] sm:$0xff]
        %v1057 = vld [vmem:[%s684 + $0xd8] sm:$0x3f]
        %v1058 = vlaneseq
        %v1059 = vshrl.u32 %v1058, 7
        %v1060 = vsub.s32 3, %v1059
        %v1061 = vrot.slane %v790, %v1060
        %v1062 = vmul.f32 %v1030, %v1061
        %v1063 = vmul.f32 %v1031, %v1061
        %v1064 = vmul.f32 %v1032, %v1061
        %v1065 = vmul.f32 %v1033, %v1061
        %v1066 = vmul.f32 %v1034, %v1061
        %v1067 = vmul.f32 %v1035, %v1061
        %v1068 = vmul.f32 %v1036, %v1061
        %v1069 = vmul.f32 %v1037, %v1061
        %v1070 = vmul.f32 %v1038, %v1061
        %v1071 = vmul.f32 %v1039, %v1061
        %v1072 = vmul.f32 %v1040, %v1061
        %v1073 = vmul.f32 %v1041, %v1061
        %v1074 = vmul.f32 %v1042, %v1061
        %v1075 = vmul.f32 %v1043, %v1061
        %v1076 = vmul.f32 %v1044, %v1061
        %v1077 = vmul.f32 %v1045, %v1061
        %v1078 = vmul.f32 %v1046, %v1061
        %v1079 = vmul.f32 %v1047, %v1061
        %v1080 = vmul.f32 %v1048, %v1061
        %v1081 = vmul.f32 %v1049, %v1061
        %v1082 = vmul.f32 %v1050, %v1061
        %v1083 = vmul.f32 %v1051, %v1061
        %v1084 = vmul.f32 %v1052, %v1061
        %v1085 = vmul.f32 %v1053, %v1061
        %v1086 = vmul.f32 %v1054, %v1061
        %v1087 = vmul.f32 %v1055, %v1061
        %v1088 = vmul.f32 %v1056, %v1061
        %v1089 = vmul.f32 %v1057, %v1061
        %v1090 = vadd.f32 %v1002, %v1062
        %v1091 = vadd.f32 %v1003, %v1063
        %v1092 = vadd.f32 %v1004, %v1064
        %v1093 = vadd.f32 %v1005, %v1065
        %v1094 = vadd.f32 %v1006, %v1066
        %v1095 = vadd.f32 %v1007, %v1067
        %v1096 = vadd.f32 %v1008, %v1068
        %v1097 = vadd.f32 %v1009, %v1069
        %v1098 = vadd.f32 %v1010, %v1070
        %v1099 = vadd.f32 %v1011, %v1071
        %v1100 = vadd.f32 %v1012, %v1072
        %v1101 = vadd.f32 %v1013, %v1073
        %v1102 = vadd.f32 %v1014, %v1074
        %v1103 = vadd.f32 %v1015, %v1075
        %v1104 = vadd.f32 %v1016, %v1076
        %v1105 = vadd.f32 %v1017, %v1077
        %v1106 = vadd.f32 %v1018, %v1078
        %v1107 = vadd.f32 %v1019, %v1079
        %v1108 = vadd.f32 %v1020, %v1080
        %v1109 = vadd.f32 %v1021, %v1081
        %v1110 = vadd.f32 %v1022, %v1082
        %v1111 = vadd.f32 %v1023, %v1083
        %v1112 = vadd.f32 %v1024, %v1084
        %v1113 = vadd.f32 %v1025, %v1085
        %v1114 = vadd.f32 %v1026, %v1086
        %v1115 = vadd.f32 %v1027, %v1087
        %v1116 = vadd.f32 %v1028, %v1088
        %v1117 = vadd.f32 %v1029, %v1089
        %v1118 = vld [vmem:[%s737] sm:$0xff]
        %v1119 = vld [vmem:[%s737 + $0x8] sm:$0x3f]
        %v1120 = vld [vmem:[%s737 + $0x10] sm:$0xff]
        %v1121 = vld [vmem:[%s737 + $0x18] sm:$0x3f]
        %v1122 = vld [vmem:[%s737 + $0x20] sm:$0xff]
        %v1123 = vld [vmem:[%s737 + $0x28] sm:$0x3f]
        %v1124 = vld [vmem:[%s737 + $0x30] sm:$0xff]
        %v1125 = vld [vmem:[%s737 + $0x38] sm:$0x3f]
        %v1126 = vld [vmem:[%s737 + $0x40] sm:$0xff]
        %v1127 = vld [vmem:[%s737 + $0x48] sm:$0x3f]
        %v1128 = vld [vmem:[%s737 + $0x50] sm:$0xff]
        %v1129 = vld [vmem:[%s737 + $0x58] sm:$0x3f]
        %v1130 = vld [vmem:[%s737 + $0x60] sm:$0xff]
        %v1131 = vld [vmem:[%s737 + $0x68] sm:$0x3f]
        %v1132 = vld [vmem:[%s737 + $0x70] sm:$0xff]
        %v1133 = vld [vmem:[%s737 + $0x78] sm:$0x3f]
        %v1134 = vld [vmem:[%s737 + $0x80] sm:$0xff]
        %v1135 = vld [vmem:[%s737 + $0x88] sm:$0x3f]
        %v1136 = vld [vmem:[%s737 + $0x90] sm:$0xff]
        %v1137 = vld [vmem:[%s737 + $0x98] sm:$0x3f]
        %v1138 = vld [vmem:[%s737 + $0xa0] sm:$0xff]
        %v1139 = vld [vmem:[%s737 + $0xa8] sm:$0x3f]
        %v1140 = vld [vmem:[%s737 + $0xb0] sm:$0xff]
        %v1141 = vld [vmem:[%s737 + $0xb8] sm:$0x3f]
        %v1142 = vld [vmem:[%s737 + $0xc0] sm:$0xff]
        %v1143 = vld [vmem:[%s737 + $0xc8] sm:$0x3f]
        %v1144 = vld [vmem:[%s737 + $0xd0] sm:$0xff]
        %v1145 = vld [vmem:[%s737 + $0xd8] sm:$0x3f]
        %v1146 = vlaneseq
        %v1147 = vshrl.u32 %v1146, 7
        %v1148 = vsub.s32 4, %v1147
        %v1149 = vrot.slane %v790, %v1148
        %v1150 = vmul.f32 %v1118, %v1149
        %v1151 = vmul.f32 %v1119, %v1149
        %v1152 = vmul.f32 %v1120, %v1149
        %v1153 = vmul.f32 %v1121, %v1149
        %v1154 = vmul.f32 %v1122, %v1149
        %v1155 = vmul.f32 %v1123, %v1149
        %v1156 = vmul.f32 %v1124, %v1149
        %v1157 = vmul.f32 %v1125, %v1149
        %v1158 = vmul.f32 %v1126, %v1149
        %v1159 = vmul.f32 %v1127, %v1149
        %v1160 = vmul.f32 %v1128, %v1149
        %v1161 = vmul.f32 %v1129, %v1149
        %v1162 = vmul.f32 %v1130, %v1149
        %v1163 = vmul.f32 %v1131, %v1149
        %v1164 = vmul.f32 %v1132, %v1149
        %v1165 = vmul.f32 %v1133, %v1149
        %v1166 = vmul.f32 %v1134, %v1149
        %v1167 = vmul.f32 %v1135, %v1149
        %v1168 = vmul.f32 %v1136, %v1149
        %v1169 = vmul.f32 %v1137, %v1149
        %v1170 = vmul.f32 %v1138, %v1149
        %v1171 = vmul.f32 %v1139, %v1149
        %v1172 = vmul.f32 %v1140, %v1149
        %v1173 = vmul.f32 %v1141, %v1149
        %v1174 = vmul.f32 %v1142, %v1149
        %v1175 = vmul.f32 %v1143, %v1149
        %v1176 = vmul.f32 %v1144, %v1149
        %v1177 = vmul.f32 %v1145, %v1149
        %v1178 = vadd.f32 %v1090, %v1150
        %v1179 = vadd.f32 %v1091, %v1151
        %v1180 = vadd.f32 %v1092, %v1152
        %v1181 = vadd.f32 %v1093, %v1153
        %v1182 = vadd.f32 %v1094, %v1154
        %v1183 = vadd.f32 %v1095, %v1155
        %v1184 = vadd.f32 %v1096, %v1156
        %v1185 = vadd.f32 %v1097, %v1157
        %v1186 = vadd.f32 %v1098, %v1158
        %v1187 = vadd.f32 %v1099, %v1159
        %v1188 = vadd.f32 %v1100, %v1160
        %v1189 = vadd.f32 %v1101, %v1161
        %v1190 = vadd.f32 %v1102, %v1162
        %v1191 = vadd.f32 %v1103, %v1163
        %v1192 = vadd.f32 %v1104, %v1164
        %v1193 = vadd.f32 %v1105, %v1165
        %v1194 = vadd.f32 %v1106, %v1166
        %v1195 = vadd.f32 %v1107, %v1167
        %v1196 = vadd.f32 %v1108, %v1168
        %v1197 = vadd.f32 %v1109, %v1169
        %v1198 = vadd.f32 %v1110, %v1170
        %v1199 = vadd.f32 %v1111, %v1171
        %v1200 = vadd.f32 %v1112, %v1172
        %v1201 = vadd.f32 %v1113, %v1173
        %v1202 = vadd.f32 %v1114, %v1174
        %v1203 = vadd.f32 %v1115, %v1175
        %v1204 = vadd.f32 %v1116, %v1176
        %v1205 = vadd.f32 %v1117, %v1177
        %s1206 = scalar_lea.vmem [#allocation2], 16
        %v1207 = vld [vmem:[%s1206] sm:$0xff]
        %v1208 = vld [vmem:[%s1206 + $0x8] sm:$0x3f]
        %v1209 = vld [vmem:[%s1206 + $0x10] sm:$0xff]
        %v1210 = vld [vmem:[%s1206 + $0x18] sm:$0x3f]
        %v1211 = vld [vmem:[%s1206 + $0x20] sm:$0xff]
        %v1212 = vld [vmem:[%s1206 + $0x28] sm:$0x3f]
        %v1213 = vld [vmem:[%s1206 + $0x30] sm:$0xff]
        %v1214 = vld [vmem:[%s1206 + $0x38] sm:$0x3f]
        %v1215 = vld [vmem:[%s1206 + $0x40] sm:$0xff]
        %v1216 = vld [vmem:[%s1206 + $0x48] sm:$0x3f]
        %v1217 = vld [vmem:[%s1206 + $0x50] sm:$0xff]
        %v1218 = vld [vmem:[%s1206 + $0x58] sm:$0x3f]
        %v1219 = vld [vmem:[%s1206 + $0x60] sm:$0xff]
        %v1220 = vld [vmem:[%s1206 + $0x68] sm:$0x3f]
        %v1221 = vld [vmem:[%s1206 + $0x70] sm:$0xff]
        %v1222 = vld [vmem:[%s1206 + $0x78] sm:$0x3f]
        %v1223 = vld [vmem:[%s1206 + $0x80] sm:$0xff]
        %v1224 = vld [vmem:[%s1206 + $0x88] sm:$0x3f]
        %v1225 = vld [vmem:[%s1206 + $0x90] sm:$0xff]
        %v1226 = vld [vmem:[%s1206 + $0x98] sm:$0x3f]
        %v1227 = vld [vmem:[%s1206 + $0xa0] sm:$0xff]
        %v1228 = vld [vmem:[%s1206 + $0xa8] sm:$0x3f]
        %v1229 = vld [vmem:[%s1206 + $0xb0] sm:$0xff]
        %v1230 = vld [vmem:[%s1206 + $0xb8] sm:$0x3f]
        %v1231 = vld [vmem:[%s1206 + $0xc0] sm:$0xff]
        %v1232 = vld [vmem:[%s1206 + $0xc8] sm:$0x3f]
        %v1233 = vld [vmem:[%s1206 + $0xd0] sm:$0xff]
        %v1234 = vld [vmem:[%s1206 + $0xd8] sm:$0x3f]
        %v1235 = vlaneseq
        %v1236 = vshrl.u32 %v1235, 7
        %v1237 = vsub.s32 5, %v1236
        %v1238 = vrot.slane %v790, %v1237
        %v1239 = vmul.f32 %v1207, %v1238
        %v1240 = vmul.f32 %v1208, %v1238
        %v1241 = vmul.f32 %v1209, %v1238
        %v1242 = vmul.f32 %v1210, %v1238
        %v1243 = vmul.f32 %v1211, %v1238
        %v1244 = vmul.f32 %v1212, %v1238
        %v1245 = vmul.f32 %v1213, %v1238
        %v1246 = vmul.f32 %v1214, %v1238
        %v1247 = vmul.f32 %v1215, %v1238
        %v1248 = vmul.f32 %v1216, %v1238
        %v1249 = vmul.f32 %v1217, %v1238
        %v1250 = vmul.f32 %v1218, %v1238
        %v1251 = vmul.f32 %v1219, %v1238
        %v1252 = vmul.f32 %v1220, %v1238
        %v1253 = vmul.f32 %v1221, %v1238
        %v1254 = vmul.f32 %v1222, %v1238
        %v1255 = vmul.f32 %v1223, %v1238
        %v1256 = vmul.f32 %v1224, %v1238
        %v1257 = vmul.f32 %v1225, %v1238
        %v1258 = vmul.f32 %v1226, %v1238
        %v1259 = vmul.f32 %v1227, %v1238
        %v1260 = vmul.f32 %v1228, %v1238
        %v1261 = vmul.f32 %v1229, %v1238
        %v1262 = vmul.f32 %v1230, %v1238
        %v1263 = vmul.f32 %v1231, %v1238
        %v1264 = vmul.f32 %v1232, %v1238
        %v1265 = vmul.f32 %v1233, %v1238
        %v1266 = vmul.f32 %v1234, %v1238
        %v1267 = vadd.f32 %v1178, %v1239
        %v1268 = vadd.f32 %v1179, %v1240
        %v1269 = vadd.f32 %v1180, %v1241
        %v1270 = vadd.f32 %v1181, %v1242
        %v1271 = vadd.f32 %v1182, %v1243
        %v1272 = vadd.f32 %v1183, %v1244
        %v1273 = vadd.f32 %v1184, %v1245
        %v1274 = vadd.f32 %v1185, %v1246
        %v1275 = vadd.f32 %v1186, %v1247
        %v1276 = vadd.f32 %v1187, %v1248
        %v1277 = vadd.f32 %v1188, %v1249
        %v1278 = vadd.f32 %v1189, %v1250
        %v1279 = vadd.f32 %v1190, %v1251
        %v1280 = vadd.f32 %v1191, %v1252
        %v1281 = vadd.f32 %v1192, %v1253
        %v1282 = vadd.f32 %v1193, %v1254
        %v1283 = vadd.f32 %v1194, %v1255
        %v1284 = vadd.f32 %v1195, %v1256
        %v1285 = vadd.f32 %v1196, %v1257
        %v1286 = vadd.f32 %v1197, %v1258
        %v1287 = vadd.f32 %v1198, %v1259
        %v1288 = vadd.f32 %v1199, %v1260
        %v1289 = vadd.f32 %v1200, %v1261
        %v1290 = vadd.f32 %v1201, %v1262
        %v1291 = vadd.f32 %v1202, %v1263
        %v1292 = vadd.f32 %v1203, %v1264
        %v1293 = vadd.f32 %v1204, %v1265
        %v1294 = vadd.f32 %v1205, %v1266
        %s1295 = scalar_lea.vmem [#allocation2], 304
        %v1296 = vld [vmem:[%s1295] sm:$0xff]
        %v1297 = vld [vmem:[%s1295 + $0x8] sm:$0x3f]
        %v1298 = vld [vmem:[%s1295 + $0x10] sm:$0xff]
        %v1299 = vld [vmem:[%s1295 + $0x18] sm:$0x3f]
        %v1300 = vld [vmem:[%s1295 + $0x20] sm:$0xff]
        %v1301 = vld [vmem:[%s1295 + $0x28] sm:$0x3f]
        %v1302 = vld [vmem:[%s1295 + $0x30] sm:$0xff]
        %v1303 = vld [vmem:[%s1295 + $0x38] sm:$0x3f]
        %v1304 = vld [vmem:[%s1295 + $0x40] sm:$0xff]
        %v1305 = vld [vmem:[%s1295 + $0x48] sm:$0x3f]
        %v1306 = vld [vmem:[%s1295 + $0x50] sm:$0xff]
        %v1307 = vld [vmem:[%s1295 + $0x58] sm:$0x3f]
        %v1308 = vld [vmem:[%s1295 + $0x60] sm:$0xff]
        %v1309 = vld [vmem:[%s1295 + $0x68] sm:$0x3f]
        %v1310 = vld [vmem:[%s1295 + $0x70] sm:$0xff]
        %v1311 = vld [vmem:[%s1295 + $0x78] sm:$0x3f]
        %v1312 = vld [vmem:[%s1295 + $0x80] sm:$0xff]
        %v1313 = vld [vmem:[%s1295 + $0x88] sm:$0x3f]
        %v1314 = vld [vmem:[%s1295 + $0x90] sm:$0xff]
        %v1315 = vld [vmem:[%s1295 + $0x98] sm:$0x3f]
        %v1316 = vld [vmem:[%s1295 + $0xa0] sm:$0xff]
        %v1317 = vld [vmem:[%s1295 + $0xa8] sm:$0x3f]
        %v1318 = vld [vmem:[%s1295 + $0xb0] sm:$0xff]
        %v1319 = vld [vmem:[%s1295 + $0xb8] sm:$0x3f]
        %v1320 = vld [vmem:[%s1295 + $0xc0] sm:$0xff]
        %v1321 = vld [vmem:[%s1295 + $0xc8] sm:$0x3f]
        %v1322 = vld [vmem:[%s1295 + $0xd0] sm:$0xff]
        %v1323 = vld [vmem:[%s1295 + $0xd8] sm:$0x3f]
        %v1324 = vlaneseq
        %v1325 = vshrl.u32 %v1324, 7
        %v1326 = vsub.s32 6, %v1325
        %v1327 = vrot.slane %v790, %v1326
        %v1328 = vmul.f32 %v1296, %v1327
        %v1329 = vmul.f32 %v1297, %v1327
        %v1330 = vmul.f32 %v1298, %v1327
        %v1331 = vmul.f32 %v1299, %v1327
        %v1332 = vmul.f32 %v1300, %v1327
        %v1333 = vmul.f32 %v1301, %v1327
        %v1334 = vmul.f32 %v1302, %v1327
        %v1335 = vmul.f32 %v1303, %v1327
        %v1336 = vmul.f32 %v1304, %v1327
        %v1337 = vmul.f32 %v1305, %v1327
        %v1338 = vmul.f32 %v1306, %v1327
        %v1339 = vmul.f32 %v1307, %v1327
        %v1340 = vmul.f32 %v1308, %v1327
        %v1341 = vmul.f32 %v1309, %v1327
        %v1342 = vmul.f32 %v1310, %v1327
        %v1343 = vmul.f32 %v1311, %v1327
        %v1344 = vmul.f32 %v1312, %v1327
        %v1345 = vmul.f32 %v1313, %v1327
        %v1346 = vmul.f32 %v1314, %v1327
        %v1347 = vmul.f32 %v1315, %v1327
        %v1348 = vmul.f32 %v1316, %v1327
        %v1349 = vmul.f32 %v1317, %v1327
        %v1350 = vmul.f32 %v1318, %v1327
        %v1351 = vmul.f32 %v1319, %v1327
        %v1352 = vmul.f32 %v1320, %v1327
        %v1353 = vmul.f32 %v1321, %v1327
        %v1354 = vmul.f32 %v1322, %v1327
        %v1355 = vmul.f32 %v1323, %v1327
        %v1356 = vadd.f32 %v1267, %v1328
        %v1357 = vadd.f32 %v1268, %v1329
        %v1358 = vadd.f32 %v1269, %v1330
        %v1359 = vadd.f32 %v1270, %v1331
        %v1360 = vadd.f32 %v1271, %v1332
        %v1361 = vadd.f32 %v1272, %v1333
        %v1362 = vadd.f32 %v1273, %v1334
        %v1363 = vadd.f32 %v1274, %v1335
        %v1364 = vadd.f32 %v1275, %v1336
        %v1365 = vadd.f32 %v1276, %v1337
        %v1366 = vadd.f32 %v1277, %v1338
        %v1367 = vadd.f32 %v1278, %v1339
        %v1368 = vadd.f32 %v1279, %v1340
        %v1369 = vadd.f32 %v1280, %v1341
        %v1370 = vadd.f32 %v1281, %v1342
        %v1371 = vadd.f32 %v1282, %v1343
        %v1372 = vadd.f32 %v1283, %v1344
        %v1373 = vadd.f32 %v1284, %v1345
        %v1374 = vadd.f32 %v1285, %v1346
        %v1375 = vadd.f32 %v1286, %v1347
        %v1376 = vadd.f32 %v1287, %v1348
        %v1377 = vadd.f32 %v1288, %v1349
        %v1378 = vadd.f32 %v1289, %v1350
        %v1379 = vadd.f32 %v1290, %v1351
        %v1380 = vadd.f32 %v1291, %v1352
        %v1381 = vadd.f32 %v1292, %v1353
        %v1382 = vadd.f32 %v1293, %v1354
        %v1383 = vadd.f32 %v1294, %v1355
        %s1384 = scalar_lea.vmem [#allocation2], 592
        %v1385 = vld [vmem:[%s1384] sm:$0xff]
        %v1386 = vld [vmem:[%s1384 + $0x8] sm:$0x3f]
        %v1387 = vld [vmem:[%s1384 + $0x10] sm:$0xff]
        %v1388 = vld [vmem:[%s1384 + $0x18] sm:$0x3f]
        %v1389 = vld [vmem:[%s1384 + $0x20] sm:$0xff]
        %v1390 = vld [vmem:[%s1384 + $0x28] sm:$0x3f]
        %v1391 = vld [vmem:[%s1384 + $0x30] sm:$0xff]
        %v1392 = vld [vmem:[%s1384 + $0x38] sm:$0x3f]
        %v1393 = vld [vmem:[%s1384 + $0x40] sm:$0xff]
        %v1394 = vld [vmem:[%s1384 + $0x48] sm:$0x3f]
        %v1395 = vld [vmem:[%s1384 + $0x50] sm:$0xff]
        %v1396 = vld [vmem:[%s1384 + $0x58] sm:$0x3f]
        %v1397 = vld [vmem:[%s1384 + $0x60] sm:$0xff]
        %v1398 = vld [vmem:[%s1384 + $0x68] sm:$0x3f]
        %v1399 = vld [vmem:[%s1384 + $0x70] sm:$0xff]
        %v1400 = vld [vmem:[%s1384 + $0x78] sm:$0x3f]
        %v1401 = vld [vmem:[%s1384 + $0x80] sm:$0xff]
        %v1402 = vld [vmem:[%s1384 + $0x88] sm:$0x3f]
        %v1403 = vld [vmem:[%s1384 + $0x90] sm:$0xff]
        %v1404 = vld [vmem:[%s1384 + $0x98] sm:$0x3f]
        %v1405 = vld [vmem:[%s1384 + $0xa0] sm:$0xff]
        %v1406 = vld [vmem:[%s1384 + $0xa8] sm:$0x3f]
        %v1407 = vld [vmem:[%s1384 + $0xb0] sm:$0xff]
        %v1408 = vld [vmem:[%s1384 + $0xb8] sm:$0x3f]
        %v1409 = vld [vmem:[%s1384 + $0xc0] sm:$0xff]
        %v1410 = vld [vmem:[%s1384 + $0xc8] sm:$0x3f]
        %v1411 = vld [vmem:[%s1384 + $0xd0] sm:$0xff]
        %v1412 = vld [vmem:[%s1384 + $0xd8] sm:$0x3f]
        %v1413 = vlaneseq
        %v1414 = vshrl.u32 %v1413, 7
        %v1415 = vsub.s32 7, %v1414
        %v1416 = vrot.slane %v790, %v1415
        %v1417 = vmul.f32 %v1385, %v1416
        %v1418 = vmul.f32 %v1386, %v1416
        %v1419 = vmul.f32 %v1387, %v1416
        %v1420 = vmul.f32 %v1388, %v1416
        %v1421 = vmul.f32 %v1389, %v1416
        %v1422 = vmul.f32 %v1390, %v1416
        %v1423 = vmul.f32 %v1391, %v1416
        %v1424 = vmul.f32 %v1392, %v1416
        %v1425 = vmul.f32 %v1393, %v1416
        %v1426 = vmul.f32 %v1394, %v1416
        %v1427 = vmul.f32 %v1395, %v1416
        %v1428 = vmul.f32 %v1396, %v1416
        %v1429 = vmul.f32 %v1397, %v1416
        %v1430 = vmul.f32 %v1398, %v1416
        %v1431 = vmul.f32 %v1399, %v1416
        %v1432 = vmul.f32 %v1400, %v1416
        %v1433 = vmul.f32 %v1401, %v1416
        %v1434 = vmul.f32 %v1402, %v1416
        %v1435 = vmul.f32 %v1403, %v1416
        %v1436 = vmul.f32 %v1404, %v1416
        %v1437 = vmul.f32 %v1405, %v1416
        %v1438 = vmul.f32 %v1406, %v1416
        %v1439 = vmul.f32 %v1407, %v1416
        %v1440 = vmul.f32 %v1408, %v1416
        %v1441 = vmul.f32 %v1409, %v1416
        %v1442 = vmul.f32 %v1410, %v1416
        %v1443 = vmul.f32 %v1411, %v1416
        %v1444 = vmul.f32 %v1412, %v1416
        %v1445 = vadd.f32 %v1356, %v1417
        %v1446 = vadd.f32 %v1357, %v1418
        %v1447 = vadd.f32 %v1358, %v1419
        %v1448 = vadd.f32 %v1359, %v1420
        %v1449 = vadd.f32 %v1360, %v1421
        %v1450 = vadd.f32 %v1361, %v1422
        %v1451 = vadd.f32 %v1362, %v1423
        %v1452 = vadd.f32 %v1363, %v1424
        %v1453 = vadd.f32 %v1364, %v1425
        %v1454 = vadd.f32 %v1365, %v1426
        %v1455 = vadd.f32 %v1366, %v1427
        %v1456 = vadd.f32 %v1367, %v1428
        %v1457 = vadd.f32 %v1368, %v1429
        %v1458 = vadd.f32 %v1369, %v1430
        %v1459 = vadd.f32 %v1370, %v1431
        %v1460 = vadd.f32 %v1371, %v1432
        %v1461 = vadd.f32 %v1372, %v1433
        %v1462 = vadd.f32 %v1373, %v1434
        %v1463 = vadd.f32 %v1374, %v1435
        %v1464 = vadd.f32 %v1375, %v1436
        %v1465 = vadd.f32 %v1376, %v1437
        %v1466 = vadd.f32 %v1377, %v1438
        %v1467 = vadd.f32 %v1378, %v1439
        %v1468 = vadd.f32 %v1379, %v1440
        %v1469 = vadd.f32 %v1380, %v1441
        %v1470 = vadd.f32 %v1381, %v1442
        %v1471 = vadd.f32 %v1382, %v1443
        %v1472 = vadd.f32 %v1383, %v1444
        %s1473 = scalar_lea.vmem [#allocation2], 880
        %v1474 = vld [vmem:[%s1473] sm:$0xff]
        %v1475 = vld [vmem:[%s1473 + $0x8] sm:$0x3f]
        %v1476 = vld [vmem:[%s1473 + $0x10] sm:$0xff]
        %v1477 = vld [vmem:[%s1473 + $0x18] sm:$0x3f]
        %v1478 = vld [vmem:[%s1473 + $0x20] sm:$0xff]
        %v1479 = vld [vmem:[%s1473 + $0x28] sm:$0x3f]
        %v1480 = vld [vmem:[%s1473 + $0x30] sm:$0xff]
        %v1481 = vld [vmem:[%s1473 + $0x38] sm:$0x3f]
        %v1482 = vld [vmem:[%s1473 + $0x40] sm:$0xff]
        %v1483 = vld [vmem:[%s1473 + $0x48] sm:$0x3f]
        %v1484 = vld [vmem:[%s1473 + $0x50] sm:$0xff]
        %v1485 = vld [vmem:[%s1473 + $0x58] sm:$0x3f]
        %v1486 = vld [vmem:[%s1473 + $0x60] sm:$0xff]
        %v1487 = vld [vmem:[%s1473 + $0x68] sm:$0x3f]
        %v1488 = vld [vmem:[%s1473 + $0x70] sm:$0xff]
        %v1489 = vld [vmem:[%s1473 + $0x78] sm:$0x3f]
        %v1490 = vld [vmem:[%s1473 + $0x80] sm:$0xff]
        %v1491 = vld [vmem:[%s1473 + $0x88] sm:$0x3f]
        %v1492 = vld [vmem:[%s1473 + $0x90] sm:$0xff]
        %v1493 = vld [vmem:[%s1473 + $0x98] sm:$0x3f]
        %v1494 = vld [vmem:[%s1473 + $0xa0] sm:$0xff]
        %v1495 = vld [vmem:[%s1473 + $0xa8] sm:$0x3f]
        %v1496 = vld [vmem:[%s1473 + $0xb0] sm:$0xff]
        %v1497 = vld [vmem:[%s1473 + $0xb8] sm:$0x3f]
        %v1498 = vld [vmem:[%s1473 + $0xc0] sm:$0xff]
        %v1499 = vld [vmem:[%s1473 + $0xc8] sm:$0x3f]
        %v1500 = vld [vmem:[%s1473 + $0xd0] sm:$0xff]
        %v1501 = vld [vmem:[%s1473 + $0xd8] sm:$0x3f]
        %v1502 = vlaneseq
        %v1503 = vshrl.u32 %v1502, 7
        %v1504 = vsub.s32 0, %v1503
        %v1505 = vrot.slane %v791, %v1504
        %v1506 = vmul.f32 %v1474, %v1505
        %v1507 = vmul.f32 %v1475, %v1505
        %v1508 = vmul.f32 %v1476, %v1505
        %v1509 = vmul.f32 %v1477, %v1505
        %v1510 = vmul.f32 %v1478, %v1505
        %v1511 = vmul.f32 %v1479, %v1505
        %v1512 = vmul.f32 %v1480, %v1505
        %v1513 = vmul.f32 %v1481, %v1505
        %v1514 = vmul.f32 %v1482, %v1505
        %v1515 = vmul.f32 %v1483, %v1505
        %v1516 = vmul.f32 %v1484, %v1505
        %v1517 = vmul.f32 %v1485, %v1505
        %v1518 = vmul.f32 %v1486, %v1505
        %v1519 = vmul.f32 %v1487, %v1505
        %v1520 = vmul.f32 %v1488, %v1505
        %v1521 = vmul.f32 %v1489, %v1505
        %v1522 = vmul.f32 %v1490, %v1505
        %v1523 = vmul.f32 %v1491, %v1505
        %v1524 = vmul.f32 %v1492, %v1505
        %v1525 = vmul.f32 %v1493, %v1505
        %v1526 = vmul.f32 %v1494, %v1505
        %v1527 = vmul.f32 %v1495, %v1505
        %v1528 = vmul.f32 %v1496, %v1505
        %v1529 = vmul.f32 %v1497, %v1505
        %v1530 = vmul.f32 %v1498, %v1505
        %v1531 = vmul.f32 %v1499, %v1505
        %v1532 = vmul.f32 %v1500, %v1505
        %v1533 = vmul.f32 %v1501, %v1505
        %v1534 = vadd.f32 %v1445, %v1506
        %v1535 = vadd.f32 %v1446, %v1507
        %v1536 = vadd.f32 %v1447, %v1508
        %v1537 = vadd.f32 %v1448, %v1509
        %v1538 = vadd.f32 %v1449, %v1510
        %v1539 = vadd.f32 %v1450, %v1511
        %v1540 = vadd.f32 %v1451, %v1512
        %v1541 = vadd.f32 %v1452, %v1513
        %v1542 = vadd.f32 %v1453, %v1514
        %v1543 = vadd.f32 %v1454, %v1515
        %v1544 = vadd.f32 %v1455, %v1516
        %v1545 = vadd.f32 %v1456, %v1517
        %v1546 = vadd.f32 %v1457, %v1518
        %v1547 = vadd.f32 %v1458, %v1519
        %v1548 = vadd.f32 %v1459, %v1520
        %v1549 = vadd.f32 %v1460, %v1521
        %v1550 = vadd.f32 %v1461, %v1522
        %v1551 = vadd.f32 %v1462, %v1523
        %v1552 = vadd.f32 %v1463, %v1524
        %v1553 = vadd.f32 %v1464, %v1525
        %v1554 = vadd.f32 %v1465, %v1526
        %v1555 = vadd.f32 %v1466, %v1527
        %v1556 = vadd.f32 %v1467, %v1528
        %v1557 = vadd.f32 %v1468, %v1529
        %v1558 = vadd.f32 %v1469, %v1530
        %v1559 = vadd.f32 %v1470, %v1531
        %v1560 = vadd.f32 %v1471, %v1532
        %v1561 = vadd.f32 %v1472, %v1533
        %s1562 = scalar_lea.vmem [#allocation2], 1168
        %v1563 = vld [vmem:[%s1562] sm:$0xff]
        %v1564 = vld [vmem:[%s1562 + $0x8] sm:$0x3f]
        %v1565 = vld [vmem:[%s1562 + $0x10] sm:$0xff]
        %v1566 = vld [vmem:[%s1562 + $0x18] sm:$0x3f]
        %v1567 = vld [vmem:[%s1562 + $0x20] sm:$0xff]
        %v1568 = vld [vmem:[%s1562 + $0x28] sm:$0x3f]
        %v1569 = vld [vmem:[%s1562 + $0x30] sm:$0xff]
        %v1570 = vld [vmem:[%s1562 + $0x38] sm:$0x3f]
        %v1571 = vld [vmem:[%s1562 + $0x40] sm:$0xff]
        %v1572 = vld [vmem:[%s1562 + $0x48] sm:$0x3f]
        %v1573 = vld [vmem:[%s1562 + $0x50] sm:$0xff]
        %v1574 = vld [vmem:[%s1562 + $0x58] sm:$0x3f]
        %v1575 = vld [vmem:[%s1562 + $0x60] sm:$0xff]
        %v1576 = vld [vmem:[%s1562 + $0x68] sm:$0x3f]
        %v1577 = vld [vmem:[%s1562 + $0x70] sm:$0xff]
        %v1578 = vld [vmem:[%s1562 + $0x78] sm:$0x3f]
        %v1579 = vld [vmem:[%s1562 + $0x80] sm:$0xff]
        %v1580 = vld [vmem:[%s1562 + $0x88] sm:$0x3f]
        %v1581 = vld [vmem:[%s1562 + $0x90] sm:$0xff]
        %v1582 = vld [vmem:[%s1562 + $0x98] sm:$0x3f]
        %v1583 = vld [vmem:[%s1562 + $0xa0] sm:$0xff]
        %v1584 = vld [vmem:[%s1562 + $0xa8] sm:$0x3f]
        %v1585 = vld [vmem:[%s1562 + $0xb0] sm:$0xff]
        %v1586 = vld [vmem:[%s1562 + $0xb8] sm:$0x3f]
        %v1587 = vld [vmem:[%s1562 + $0xc0] sm:$0xff]
        %v1588 = vld [vmem:[%s1562 + $0xc8] sm:$0x3f]
        %v1589 = vld [vmem:[%s1562 + $0xd0] sm:$0xff]
        %v1590 = vld [vmem:[%s1562 + $0xd8] sm:$0x3f]
        %v1591 = vlaneseq
        %v1592 = vshrl.u32 %v1591, 7
        %v1593 = vsub.s32 1, %v1592
        %v1594 = vrot.slane %v791, %v1593
        %v1595 = vmul.f32 %v1563, %v1594
        %v1596 = vmul.f32 %v1564, %v1594
        %v1597 = vmul.f32 %v1565, %v1594
        %v1598 = vmul.f32 %v1566, %v1594
        %v1599 = vmul.f32 %v1567, %v1594
        %v1600 = vmul.f32 %v1568, %v1594
        %v1601 = vmul.f32 %v1569, %v1594
        %v1602 = vmul.f32 %v1570, %v1594
        %v1603 = vmul.f32 %v1571, %v1594
        %v1604 = vmul.f32 %v1572, %v1594
        %v1605 = vmul.f32 %v1573, %v1594
        %v1606 = vmul.f32 %v1574, %v1594
        %v1607 = vmul.f32 %v1575, %v1594
        %v1608 = vmul.f32 %v1576, %v1594
        %v1609 = vmul.f32 %v1577, %v1594
        %v1610 = vmul.f32 %v1578, %v1594
        %v1611 = vmul.f32 %v1579, %v1594
        %v1612 = vmul.f32 %v1580, %v1594
        %v1613 = vmul.f32 %v1581, %v1594
        %v1614 = vmul.f32 %v1582, %v1594
        %v1615 = vmul.f32 %v1583, %v1594
        %v1616 = vmul.f32 %v1584, %v1594
        %v1617 = vmul.f32 %v1585, %v1594
        %v1618 = vmul.f32 %v1586, %v1594
        %v1619 = vmul.f32 %v1587, %v1594
        %v1620 = vmul.f32 %v1588, %v1594
        %v1621 = vmul.f32 %v1589, %v1594
        %v1622 = vmul.f32 %v1590, %v1594
        %v1623 = vadd.f32 %v1534, %v1595
        %v1624 = vadd.f32 %v1535, %v1596
        %v1625 = vadd.f32 %v1536, %v1597
        %v1626 = vadd.f32 %v1537, %v1598
        %v1627 = vadd.f32 %v1538, %v1599
        %v1628 = vadd.f32 %v1539, %v1600
        %v1629 = vadd.f32 %v1540, %v1601
        %v1630 = vadd.f32 %v1541, %v1602
        %v1631 = vadd.f32 %v1542, %v1603
        %v1632 = vadd.f32 %v1543, %v1604
        %v1633 = vadd.f32 %v1544, %v1605
        %v1634 = vadd.f32 %v1545, %v1606
        %v1635 = vadd.f32 %v1546, %v1607
        %v1636 = vadd.f32 %v1547, %v1608
        %v1637 = vadd.f32 %v1548, %v1609
        %v1638 = vadd.f32 %v1549, %v1610
        %v1639 = vadd.f32 %v1550, %v1611
        %v1640 = vadd.f32 %v1551, %v1612
        %v1641 = vadd.f32 %v1552, %v1613
        %v1642 = vadd.f32 %v1553, %v1614
        %v1643 = vadd.f32 %v1554, %v1615
        %v1644 = vadd.f32 %v1555, %v1616
        %v1645 = vadd.f32 %v1556, %v1617
        %v1646 = vadd.f32 %v1557, %v1618
        %v1647 = vadd.f32 %v1558, %v1619
        %v1648 = vadd.f32 %v1559, %v1620
        %v1649 = vadd.f32 %v1560, %v1621
        %v1650 = vadd.f32 %v1561, %v1622
        %v1651 = vld [vmem:[%s549] sm:$0xff]
        %v1652 = vld [vmem:[%s549 + $0x8] sm:$0x3f]
        %v1653 = vld [vmem:[%s549 + $0x10] sm:$0xff]
        %v1654 = vld [vmem:[%s549 + $0x18] sm:$0x3f]
        %v1655 = vld [vmem:[%s549 + $0x20] sm:$0xff]
        %v1656 = vld [vmem:[%s549 + $0x28] sm:$0x3f]
        %v1657 = vld [vmem:[%s549 + $0x30] sm:$0xff]
        %v1658 = vld [vmem:[%s549 + $0x38] sm:$0x3f]
        %v1659 = vld [vmem:[%s549 + $0x40] sm:$0xff]
        %v1660 = vld [vmem:[%s549 + $0x48] sm:$0x3f]
        %v1661 = vld [vmem:[%s549 + $0x50] sm:$0xff]
        %v1662 = vld [vmem:[%s549 + $0x58] sm:$0x3f]
        %v1663 = vld [vmem:[%s549 + $0x60] sm:$0xff]
        %v1664 = vld [vmem:[%s549 + $0x68] sm:$0x3f]
        %v1665 = vld [vmem:[%s549 + $0x70] sm:$0xff]
        %v1666 = vld [vmem:[%s549 + $0x78] sm:$0x3f]
        %v1667 = vld [vmem:[%s549 + $0x80] sm:$0xff]
        %v1668 = vld [vmem:[%s549 + $0x88] sm:$0x3f]
        %v1669 = vld [vmem:[%s549 + $0x90] sm:$0xff]
        %v1670 = vld [vmem:[%s549 + $0x98] sm:$0x3f]
        %v1671 = vld [vmem:[%s549 + $0xa0] sm:$0xff]
        %v1672 = vld [vmem:[%s549 + $0xa8] sm:$0x3f]
        %v1673 = vld [vmem:[%s549 + $0xb0] sm:$0xff]
        %v1674 = vld [vmem:[%s549 + $0xb8] sm:$0x3f]
        %v1675 = vld [vmem:[%s549 + $0xc0] sm:$0xff]
        %v1676 = vld [vmem:[%s549 + $0xc8] sm:$0x3f]
        %v1677 = vld [vmem:[%s549 + $0xd0] sm:$0xff]
        %v1678 = vld [vmem:[%s549 + $0xd8] sm:$0x3f]
        %v1679 = vlaneseq
        %v1680 = vshrl.u32 %v1679, 7
        %v1681 = vsub.s32 2, %v1680
        %v1682 = vrot.slane %v791, %v1681
        %v1683 = vmul.f32 %v1651, %v1682
        %v1684 = vmul.f32 %v1652, %v1682
        %v1685 = vmul.f32 %v1653, %v1682
        %v1686 = vmul.f32 %v1654, %v1682
        %v1687 = vmul.f32 %v1655, %v1682
        %v1688 = vmul.f32 %v1656, %v1682
        %v1689 = vmul.f32 %v1657, %v1682
        %v1690 = vmul.f32 %v1658, %v1682
        %v1691 = vmul.f32 %v1659, %v1682
        %v1692 = vmul.f32 %v1660, %v1682
        %v1693 = vmul.f32 %v1661, %v1682
        %v1694 = vmul.f32 %v1662, %v1682
        %v1695 = vmul.f32 %v1663, %v1682
        %v1696 = vmul.f32 %v1664, %v1682
        %v1697 = vmul.f32 %v1665, %v1682
        %v1698 = vmul.f32 %v1666, %v1682
        %v1699 = vmul.f32 %v1667, %v1682
        %v1700 = vmul.f32 %v1668, %v1682
        %v1701 = vmul.f32 %v1669, %v1682
        %v1702 = vmul.f32 %v1670, %v1682
        %v1703 = vmul.f32 %v1671, %v1682
        %v1704 = vmul.f32 %v1672, %v1682
        %v1705 = vmul.f32 %v1673, %v1682
        %v1706 = vmul.f32 %v1674, %v1682
        %v1707 = vmul.f32 %v1675, %v1682
        %v1708 = vmul.f32 %v1676, %v1682
        %v1709 = vmul.f32 %v1677, %v1682
        %v1710 = vmul.f32 %v1678, %v1682
        %v1711 = vadd.f32 %v1623, %v1683
        %v1712 = vadd.f32 %v1624, %v1684
        %v1713 = vadd.f32 %v1625, %v1685
        %v1714 = vadd.f32 %v1626, %v1686
        %v1715 = vadd.f32 %v1627, %v1687
        %v1716 = vadd.f32 %v1628, %v1688
        %v1717 = vadd.f32 %v1629, %v1689
        %v1718 = vadd.f32 %v1630, %v1690
        %v1719 = vadd.f32 %v1631, %v1691
        %v1720 = vadd.f32 %v1632, %v1692
        %v1721 = vadd.f32 %v1633, %v1693
        %v1722 = vadd.f32 %v1634, %v1694
        %v1723 = vadd.f32 %v1635, %v1695
        %v1724 = vadd.f32 %v1636, %v1696
        %v1725 = vadd.f32 %v1637, %v1697
        %v1726 = vadd.f32 %v1638, %v1698
        %v1727 = vadd.f32 %v1639, %v1699
        %v1728 = vadd.f32 %v1640, %v1700
        %v1729 = vadd.f32 %v1641, %v1701
        %v1730 = vadd.f32 %v1642, %v1702
        %v1731 = vadd.f32 %v1643, %v1703
        %v1732 = vadd.f32 %v1644, %v1704
        %v1733 = vadd.f32 %v1645, %v1705
        %v1734 = vadd.f32 %v1646, %v1706
        %v1735 = vadd.f32 %v1647, %v1707
        %v1736 = vadd.f32 %v1648, %v1708
        %v1737 = vadd.f32 %v1649, %v1709
        %v1738 = vadd.f32 %v1650, %v1710
        %v1739 = vld [vmem:[%s602] sm:$0xff]
        %v1740 = vld [vmem:[%s602 + $0x8] sm:$0x3f]
        %v1741 = vld [vmem:[%s602 + $0x10] sm:$0xff]
        %v1742 = vld [vmem:[%s602 + $0x18] sm:$0x3f]
        %v1743 = vld [vmem:[%s602 + $0x20] sm:$0xff]
        %v1744 = vld [vmem:[%s602 + $0x28] sm:$0x3f]
        %v1745 = vld [vmem:[%s602 + $0x30] sm:$0xff]
        %v1746 = vld [vmem:[%s602 + $0x38] sm:$0x3f]
        %v1747 = vld [vmem:[%s602 + $0x40] sm:$0xff]
        %v1748 = vld [vmem:[%s602 + $0x48] sm:$0x3f]
        %v1749 = vld [vmem:[%s602 + $0x50] sm:$0xff]
        %v1750 = vld [vmem:[%s602 + $0x58] sm:$0x3f]
        %v1751 = vld [vmem:[%s602 + $0x60] sm:$0xff]
        %v1752 = vld [vmem:[%s602 + $0x68] sm:$0x3f]
        %v1753 = vld [vmem:[%s602 + $0x70] sm:$0xff]
        %v1754 = vld [vmem:[%s602 + $0x78] sm:$0x3f]
        %v1755 = vld [vmem:[%s602 + $0x80] sm:$0xff]
        %v1756 = vld [vmem:[%s602 + $0x88] sm:$0x3f]
        %v1757 = vld [vmem:[%s602 + $0x90] sm:$0xff]
        %v1758 = vld [vmem:[%s602 + $0x98] sm:$0x3f]
        %v1759 = vld [vmem:[%s602 + $0xa0] sm:$0xff]
        %v1760 = vld [vmem:[%s602 + $0xa8] sm:$0x3f]
        %v1761 = vld [vmem:[%s602 + $0xb0] sm:$0xff]
        %v1762 = vld [vmem:[%s602 + $0xb8] sm:$0x3f]
        %v1763 = vld [vmem:[%s602 + $0xc0] sm:$0xff]
        %v1764 = vld [vmem:[%s602 + $0xc8] sm:$0x3f]
        %v1765 = vld [vmem:[%s602 + $0xd0] sm:$0xff]
        %v1766 = vld [vmem:[%s602 + $0xd8] sm:$0x3f]
        %v1767 = vlaneseq
        %v1768 = vshrl.u32 %v1767, 7
        %v1769 = vsub.s32 3, %v1768
        %v1770 = vrot.slane %v791, %v1769
        %v1771 = vmul.f32 %v1739, %v1770
        %v1772 = vmul.f32 %v1740, %v1770
        %v1773 = vmul.f32 %v1741, %v1770
        %v1774 = vmul.f32 %v1742, %v1770
        %v1775 = vmul.f32 %v1743, %v1770
        %v1776 = vmul.f32 %v1744, %v1770
        %v1777 = vmul.f32 %v1745, %v1770
        %v1778 = vmul.f32 %v1746, %v1770
        %v1779 = vmul.f32 %v1747, %v1770
        %v1780 = vmul.f32 %v1748, %v1770
        %v1781 = vmul.f32 %v1749, %v1770
        %v1782 = vmul.f32 %v1750, %v1770
        %v1783 = vmul.f32 %v1751, %v1770
        %v1784 = vmul.f32 %v1752, %v1770
        %v1785 = vmul.f32 %v1753, %v1770
        %v1786 = vmul.f32 %v1754, %v1770
        %v1787 = vmul.f32 %v1755, %v1770
        %v1788 = vmul.f32 %v1756, %v1770
        %v1789 = vmul.f32 %v1757, %v1770
        %v1790 = vmul.f32 %v1758, %v1770
        %v1791 = vmul.f32 %v1759, %v1770
        %v1792 = vmul.f32 %v1760, %v1770
        %v1793 = vmul.f32 %v1761, %v1770
        %v1794 = vmul.f32 %v1762, %v1770
        %v1795 = vmul.f32 %v1763, %v1770
        %v1796 = vmul.f32 %v1764, %v1770
        %v1797 = vmul.f32 %v1765, %v1770
        %v1798 = vmul.f32 %v1766, %v1770
        %v1799 = vadd.f32 %v1711, %v1771
        %v1800 = vadd.f32 %v1712, %v1772
        %v1801 = vadd.f32 %v1713, %v1773
        %v1802 = vadd.f32 %v1714, %v1774
        %v1803 = vadd.f32 %v1715, %v1775
        %v1804 = vadd.f32 %v1716, %v1776
        %v1805 = vadd.f32 %v1717, %v1777
        %v1806 = vadd.f32 %v1718, %v1778
        %v1807 = vadd.f32 %v1719, %v1779
        %v1808 = vadd.f32 %v1720, %v1780
        %v1809 = vadd.f32 %v1721, %v1781
        %v1810 = vadd.f32 %v1722, %v1782
        %v1811 = vadd.f32 %v1723, %v1783
        %v1812 = vadd.f32 %v1724, %v1784
        %v1813 = vadd.f32 %v1725, %v1785
        %v1814 = vadd.f32 %v1726, %v1786
        %v1815 = vadd.f32 %v1727, %v1787
        %v1816 = vadd.f32 %v1728, %v1788
        %v1817 = vadd.f32 %v1729, %v1789
        %v1818 = vadd.f32 %v1730, %v1790
        %v1819 = vadd.f32 %v1731, %v1791
        %v1820 = vadd.f32 %v1732, %v1792
        %v1821 = vadd.f32 %v1733, %v1793
        %v1822 = vadd.f32 %v1734, %v1794
        %v1823 = vadd.f32 %v1735, %v1795
        %v1824 = vadd.f32 %v1736, %v1796
        %v1825 = vadd.f32 %v1737, %v1797
        %v1826 = vadd.f32 %v1738, %v1798
        %v1827 = vld [vmem:[%s655] sm:$0xff]
        %v1828 = vld [vmem:[%s655 + $0x8] sm:$0x3f]
        %v1829 = vld [vmem:[%s655 + $0x10] sm:$0xff]
        %v1830 = vld [vmem:[%s655 + $0x18] sm:$0x3f]
        %v1831 = vld [vmem:[%s655 + $0x20] sm:$0xff]
        %v1832 = vld [vmem:[%s655 + $0x28] sm:$0x3f]
        %v1833 = vld [vmem:[%s655 + $0x30] sm:$0xff]
        %v1834 = vld [vmem:[%s655 + $0x38] sm:$0x3f]
        %v1835 = vld [vmem:[%s655 + $0x40] sm:$0xff]
        %v1836 = vld [vmem:[%s655 + $0x48] sm:$0x3f]
        %v1837 = vld [vmem:[%s655 + $0x50] sm:$0xff]
        %v1838 = vld [vmem:[%s655 + $0x58] sm:$0x3f]
        %v1839 = vld [vmem:[%s655 + $0x60] sm:$0xff]
        %v1840 = vld [vmem:[%s655 + $0x68] sm:$0x3f]
        %v1841 = vld [vmem:[%s655 + $0x70] sm:$0xff]
        %v1842 = vld [vmem:[%s655 + $0x78] sm:$0x3f]
        %v1843 = vld [vmem:[%s655 + $0x80] sm:$0xff]
        %v1844 = vld [vmem:[%s655 + $0x88] sm:$0x3f]
        %v1845 = vld [vmem:[%s655 + $0x90] sm:$0xff]
        %v1846 = vld [vmem:[%s655 + $0x98] sm:$0x3f]
        %v1847 = vld [vmem:[%s655 + $0xa0] sm:$0xff]
        %v1848 = vld [vmem:[%s655 + $0xa8] sm:$0x3f]
        %v1849 = vld [vmem:[%s655 + $0xb0] sm:$0xff]
        %v1850 = vld [vmem:[%s655 + $0xb8] sm:$0x3f]
        %v1851 = vld [vmem:[%s655 + $0xc0] sm:$0xff]
        %v1852 = vld [vmem:[%s655 + $0xc8] sm:$0x3f]
        %v1853 = vld [vmem:[%s655 + $0xd0] sm:$0xff]
        %v1854 = vld [vmem:[%s655 + $0xd8] sm:$0x3f]
        %v1855 = vlaneseq
        %v1856 = vshrl.u32 %v1855, 7
        %v1857 = vsub.s32 4, %v1856
        %v1858 = vrot.slane %v791, %v1857
        %v1859 = vmul.f32 %v1827, %v1858
        %v1860 = vmul.f32 %v1828, %v1858
        %v1861 = vmul.f32 %v1829, %v1858
        %v1862 = vmul.f32 %v1830, %v1858
        %v1863 = vmul.f32 %v1831, %v1858
        %v1864 = vmul.f32 %v1832, %v1858
        %v1865 = vmul.f32 %v1833, %v1858
        %v1866 = vmul.f32 %v1834, %v1858
        %v1867 = vmul.f32 %v1835, %v1858
        %v1868 = vmul.f32 %v1836, %v1858
        %v1869 = vmul.f32 %v1837, %v1858
        %v1870 = vmul.f32 %v1838, %v1858
        %v1871 = vmul.f32 %v1839, %v1858
        %v1872 = vmul.f32 %v1840, %v1858
        %v1873 = vmul.f32 %v1841, %v1858
        %v1874 = vmul.f32 %v1842, %v1858
        %v1875 = vmul.f32 %v1843, %v1858
        %v1876 = vmul.f32 %v1844, %v1858
        %v1877 = vmul.f32 %v1845, %v1858
        %v1878 = vmul.f32 %v1846, %v1858
        %v1879 = vmul.f32 %v1847, %v1858
        %v1880 = vmul.f32 %v1848, %v1858
        %v1881 = vmul.f32 %v1849, %v1858
        %v1882 = vmul.f32 %v1850, %v1858
        %v1883 = vmul.f32 %v1851, %v1858
        %v1884 = vmul.f32 %v1852, %v1858
        %v1885 = vmul.f32 %v1853, %v1858
        %v1886 = vmul.f32 %v1854, %v1858
        %v1887 = vadd.f32 %v1799, %v1859
        %v1888 = vadd.f32 %v1800, %v1860
        %v1889 = vadd.f32 %v1801, %v1861
        %v1890 = vadd.f32 %v1802, %v1862
        %v1891 = vadd.f32 %v1803, %v1863
        %v1892 = vadd.f32 %v1804, %v1864
        %v1893 = vadd.f32 %v1805, %v1865
        %v1894 = vadd.f32 %v1806, %v1866
        %v1895 = vadd.f32 %v1807, %v1867
        %v1896 = vadd.f32 %v1808, %v1868
        %v1897 = vadd.f32 %v1809, %v1869
        %v1898 = vadd.f32 %v1810, %v1870
        %v1899 = vadd.f32 %v1811, %v1871
        %v1900 = vadd.f32 %v1812, %v1872
        %v1901 = vadd.f32 %v1813, %v1873
        %v1902 = vadd.f32 %v1814, %v1874
        %v1903 = vadd.f32 %v1815, %v1875
        %v1904 = vadd.f32 %v1816, %v1876
        %v1905 = vadd.f32 %v1817, %v1877
        %v1906 = vadd.f32 %v1818, %v1878
        %v1907 = vadd.f32 %v1819, %v1879
        %v1908 = vadd.f32 %v1820, %v1880
        %v1909 = vadd.f32 %v1821, %v1881
        %v1910 = vadd.f32 %v1822, %v1882
        %v1911 = vadd.f32 %v1823, %v1883
        %v1912 = vadd.f32 %v1824, %v1884
        %v1913 = vadd.f32 %v1825, %v1885
        %v1914 = vadd.f32 %v1826, %v1886
        %v1915 = vld [vmem:[%s694] sm:$0xff]
        %v1916 = vld [vmem:[%s694 + $0x8] sm:$0x3f]
        %v1917 = vld [vmem:[%s694 + $0x10] sm:$0xff]
        %v1918 = vld [vmem:[%s694 + $0x18] sm:$0x3f]
        %v1919 = vld [vmem:[%s694 + $0x20] sm:$0xff]
        %v1920 = vld [vmem:[%s694 + $0x28] sm:$0x3f]
        %v1921 = vld [vmem:[%s694 + $0x30] sm:$0xff]
        %v1922 = vld [vmem:[%s694 + $0x38] sm:$0x3f]
        %v1923 = vld [vmem:[%s694 + $0x40] sm:$0xff]
        %v1924 = vld [vmem:[%s694 + $0x48] sm:$0x3f]
        %v1925 = vld [vmem:[%s694 + $0x50] sm:$0xff]
        %v1926 = vld [vmem:[%s694 + $0x58] sm:$0x3f]
        %v1927 = vld [vmem:[%s694 + $0x60] sm:$0xff]
        %v1928 = vld [vmem:[%s694 + $0x68] sm:$0x3f]
        %v1929 = vld [vmem:[%s694 + $0x70] sm:$0xff]
        %v1930 = vld [vmem:[%s694 + $0x78] sm:$0x3f]
        %v1931 = vld [vmem:[%s694 + $0x80] sm:$0xff]
        %v1932 = vld [vmem:[%s694 + $0x88] sm:$0x3f]
        %v1933 = vld [vmem:[%s694 + $0x90] sm:$0xff]
        %v1934 = vld [vmem:[%s694 + $0x98] sm:$0x3f]
        %v1935 = vld [vmem:[%s694 + $0xa0] sm:$0xff]
        %v1936 = vld [vmem:[%s694 + $0xa8] sm:$0x3f]
        %v1937 = vld [vmem:[%s694 + $0xb0] sm:$0xff]
        %v1938 = vld [vmem:[%s694 + $0xb8] sm:$0x3f]
        %v1939 = vld [vmem:[%s694 + $0xc0] sm:$0xff]
        %v1940 = vld [vmem:[%s694 + $0xc8] sm:$0x3f]
        %v1941 = vld [vmem:[%s694 + $0xd0] sm:$0xff]
        %v1942 = vld [vmem:[%s694 + $0xd8] sm:$0x3f]
        %v1943 = vlaneseq
        %v1944 = vshrl.u32 %v1943, 7
        %v1945 = vsub.s32 5, %v1944
        %v1946 = vrot.slane %v791, %v1945
        %v1947 = vmul.f32 %v1915, %v1946
        %v1948 = vmul.f32 %v1916, %v1946
        %v1949 = vmul.f32 %v1917, %v1946
        %v1950 = vmul.f32 %v1918, %v1946
        %v1951 = vmul.f32 %v1919, %v1946
        %v1952 = vmul.f32 %v1920, %v1946
        %v1953 = vmul.f32 %v1921, %v1946
        %v1954 = vmul.f32 %v1922, %v1946
        %v1955 = vmul.f32 %v1923, %v1946
        %v1956 = vmul.f32 %v1924, %v1946
        %v1957 = vmul.f32 %v1925, %v1946
        %v1958 = vmul.f32 %v1926, %v1946
        %v1959 = vmul.f32 %v1927, %v1946
        %v1960 = vmul.f32 %v1928, %v1946
        %v1961 = vmul.f32 %v1929, %v1946
        %v1962 = vmul.f32 %v1930, %v1946
        %v1963 = vmul.f32 %v1931, %v1946
        %v1964 = vmul.f32 %v1932, %v1946
        %v1965 = vmul.f32 %v1933, %v1946
        %v1966 = vmul.f32 %v1934, %v1946
        %v1967 = vmul.f32 %v1935, %v1946
        %v1968 = vmul.f32 %v1936, %v1946
        %v1969 = vmul.f32 %v1937, %v1946
        %v1970 = vmul.f32 %v1938, %v1946
        %v1971 = vmul.f32 %v1939, %v1946
        %v1972 = vmul.f32 %v1940, %v1946
        %v1973 = vmul.f32 %v1941, %v1946
        %v1974 = vmul.f32 %v1942, %v1946
        %v1975 = vadd.f32 %v1887, %v1947
        %v1976 = vadd.f32 %v1888, %v1948
        %v1977 = vadd.f32 %v1889, %v1949
        %v1978 = vadd.f32 %v1890, %v1950
        %v1979 = vadd.f32 %v1891, %v1951
        %v1980 = vadd.f32 %v1892, %v1952
        %v1981 = vadd.f32 %v1893, %v1953
        %v1982 = vadd.f32 %v1894, %v1954
        %v1983 = vadd.f32 %v1895, %v1955
        %v1984 = vadd.f32 %v1896, %v1956
        %v1985 = vadd.f32 %v1897, %v1957
        %v1986 = vadd.f32 %v1898, %v1958
        %v1987 = vadd.f32 %v1899, %v1959
        %v1988 = vadd.f32 %v1900, %v1960
        %v1989 = vadd.f32 %v1901, %v1961
        %v1990 = vadd.f32 %v1902, %v1962
        %v1991 = vadd.f32 %v1903, %v1963
        %v1992 = vadd.f32 %v1904, %v1964
        %v1993 = vadd.f32 %v1905, %v1965
        %v1994 = vadd.f32 %v1906, %v1966
        %v1995 = vadd.f32 %v1907, %v1967
        %v1996 = vadd.f32 %v1908, %v1968
        %v1997 = vadd.f32 %v1909, %v1969
        %v1998 = vadd.f32 %v1910, %v1970
        %v1999 = vadd.f32 %v1911, %v1971
        %v2000 = vadd.f32 %v1912, %v1972
        %v2001 = vadd.f32 %v1913, %v1973
        %v2002 = vadd.f32 %v1914, %v1974
        %v2003 = vld [vmem:[%s747] sm:$0xff]
        %v2004 = vld [vmem:[%s747 + $0x8] sm:$0x3f]
        %v2005 = vld [vmem:[%s747 + $0x10] sm:$0xff]
        %v2006 = vld [vmem:[%s747 + $0x18] sm:$0x3f]
        %v2007 = vld [vmem:[%s747 + $0x20] sm:$0xff]
        %v2008 = vld [vmem:[%s747 + $0x28] sm:$0x3f]
        %v2009 = vld [vmem:[%s747 + $0x30] sm:$0xff]
        %v2010 = vld [vmem:[%s747 + $0x38] sm:$0x3f]
        %v2011 = vld [vmem:[%s747 + $0x40] sm:$0xff]
        %v2012 = vld [vmem:[%s747 + $0x48] sm:$0x3f]
        %v2013 = vld [vmem:[%s747 + $0x50] sm:$0xff]
        %v2014 = vld [vmem:[%s747 + $0x58] sm:$0x3f]
        %v2015 = vld [vmem:[%s747 + $0x60] sm:$0xff]
        %v2016 = vld [vmem:[%s747 + $0x68] sm:$0x3f]
        %v2017 = vld [vmem:[%s747 + $0x70] sm:$0xff]
        %v2018 = vld [vmem:[%s747 + $0x78] sm:$0x3f]
        %v2019 = vld [vmem:[%s747 + $0x80] sm:$0xff]
        %v2020 = vld [vmem:[%s747 + $0x88] sm:$0x3f]
        %v2021 = vld [vmem:[%s747 + $0x90] sm:$0xff]
        %v2022 = vld [vmem:[%s747 + $0x98] sm:$0x3f]
        %v2023 = vld [vmem:[%s747 + $0xa0] sm:$0xff]
        %v2024 = vld [vmem:[%s747 + $0xa8] sm:$0x3f]
        %v2025 = vld [vmem:[%s747 + $0xb0] sm:$0xff]
        %v2026 = vld [vmem:[%s747 + $0xb8] sm:$0x3f]
        %v2027 = vld [vmem:[%s747 + $0xc0] sm:$0xff]
        %v2028 = vld [vmem:[%s747 + $0xc8] sm:$0x3f]
        %v2029 = vld [vmem:[%s747 + $0xd0] sm:$0xff]
        %v2030 = vld [vmem:[%s747 + $0xd8] sm:$0x3f]
        %v2031 = vlaneseq
        %v2032 = vshrl.u32 %v2031, 7
        %v2033 = vsub.s32 6, %v2032
        %v2034 = vrot.slane %v791, %v2033
        %v2035 = vmul.f32 %v2003, %v2034
        %v2036 = vmul.f32 %v2004, %v2034
        %v2037 = vmul.f32 %v2005, %v2034
        %v2038 = vmul.f32 %v2006, %v2034
        %v2039 = vmul.f32 %v2007, %v2034
        %v2040 = vmul.f32 %v2008, %v2034
        %v2041 = vmul.f32 %v2009, %v2034
        %v2042 = vmul.f32 %v2010, %v2034
        %v2043 = vmul.f32 %v2011, %v2034
        %v2044 = vmul.f32 %v2012, %v2034
        %v2045 = vmul.f32 %v2013, %v2034
        %v2046 = vmul.f32 %v2014, %v2034
        %v2047 = vmul.f32 %v2015, %v2034
        %v2048 = vmul.f32 %v2016, %v2034
        %v2049 = vmul.f32 %v2017, %v2034
        %v2050 = vmul.f32 %v2018, %v2034
        %v2051 = vmul.f32 %v2019, %v2034
        %v2052 = vmul.f32 %v2020, %v2034
        %v2053 = vmul.f32 %v2021, %v2034
        %v2054 = vmul.f32 %v2022, %v2034
        %v2055 = vmul.f32 %v2023, %v2034
        %v2056 = vmul.f32 %v2024, %v2034
        %v2057 = vmul.f32 %v2025, %v2034
        %v2058 = vmul.f32 %v2026, %v2034
        %v2059 = vmul.f32 %v2027, %v2034
        %v2060 = vmul.f32 %v2028, %v2034
        %v2061 = vmul.f32 %v2029, %v2034
        %v2062 = vmul.f32 %v2030, %v2034
        %v2063 = vadd.f32 %v1975, %v2035
        %v2064 = vadd.f32 %v1976, %v2036
        %v2065 = vadd.f32 %v1977, %v2037
        %v2066 = vadd.f32 %v1978, %v2038
        %v2067 = vadd.f32 %v1979, %v2039
        %v2068 = vadd.f32 %v1980, %v2040
        %v2069 = vadd.f32 %v1981, %v2041
        %v2070 = vadd.f32 %v1982, %v2042
        %v2071 = vadd.f32 %v1983, %v2043
        %v2072 = vadd.f32 %v1984, %v2044
        %v2073 = vadd.f32 %v1985, %v2045
        %v2074 = vadd.f32 %v1986, %v2046
        %v2075 = vadd.f32 %v1987, %v2047
        %v2076 = vadd.f32 %v1988, %v2048
        %v2077 = vadd.f32 %v1989, %v2049
        %v2078 = vadd.f32 %v1990, %v2050
        %v2079 = vadd.f32 %v1991, %v2051
        %v2080 = vadd.f32 %v1992, %v2052
        %v2081 = vadd.f32 %v1993, %v2053
        %v2082 = vadd.f32 %v1994, %v2054
        %v2083 = vadd.f32 %v1995, %v2055
        %v2084 = vadd.f32 %v1996, %v2056
        %v2085 = vadd.f32 %v1997, %v2057
        %v2086 = vadd.f32 %v1998, %v2058
        %v2087 = vadd.f32 %v1999, %v2059
        %v2088 = vadd.f32 %v2000, %v2060
        %v2089 = vadd.f32 %v2001, %v2061
        %v2090 = vadd.f32 %v2002, %v2062
        %s2091 = scalar_lea.vmem [#allocation2], 48
        %v2092 = vld [vmem:[%s2091] sm:$0xff]
        %v2093 = vld [vmem:[%s2091 + $0x8] sm:$0x3f]
        %v2094 = vld [vmem:[%s2091 + $0x10] sm:$0xff]
        %v2095 = vld [vmem:[%s2091 + $0x18] sm:$0x3f]
        %v2096 = vld [vmem:[%s2091 + $0x20] sm:$0xff]
        %v2097 = vld [vmem:[%s2091 + $0x28] sm:$0x3f]
        %v2098 = vld [vmem:[%s2091 + $0x30] sm:$0xff]
        %v2099 = vld [vmem:[%s2091 + $0x38] sm:$0x3f]
        %v2100 = vld [vmem:[%s2091 + $0x40] sm:$0xff]
        %v2101 = vld [vmem:[%s2091 + $0x48] sm:$0x3f]
        %v2102 = vld [vmem:[%s2091 + $0x50] sm:$0xff]
        %v2103 = vld [vmem:[%s2091 + $0x58] sm:$0x3f]
        %v2104 = vld [vmem:[%s2091 + $0x60] sm:$0xff]
        %v2105 = vld [vmem:[%s2091 + $0x68] sm:$0x3f]
        %v2106 = vld [vmem:[%s2091 + $0x70] sm:$0xff]
        %v2107 = vld [vmem:[%s2091 + $0x78] sm:$0x3f]
        %v2108 = vld [vmem:[%s2091 + $0x80] sm:$0xff]
        %v2109 = vld [vmem:[%s2091 + $0x88] sm:$0x3f]
        %v2110 = vld [vmem:[%s2091 + $0x90] sm:$0xff]
        %v2111 = vld [vmem:[%s2091 + $0x98] sm:$0x3f]
        %v2112 = vld [vmem:[%s2091 + $0xa0] sm:$0xff]
        %v2113 = vld [vmem:[%s2091 + $0xa8] sm:$0x3f]
        %v2114 = vld [vmem:[%s2091 + $0xb0] sm:$0xff]
        %v2115 = vld [vmem:[%s2091 + $0xb8] sm:$0x3f]
        %v2116 = vld [vmem:[%s2091 + $0xc0] sm:$0xff]
        %v2117 = vld [vmem:[%s2091 + $0xc8] sm:$0x3f]
        %v2118 = vld [vmem:[%s2091 + $0xd0] sm:$0xff]
        %v2119 = vld [vmem:[%s2091 + $0xd8] sm:$0x3f]
        %v2120 = vlaneseq
        %v2121 = vshrl.u32 %v2120, 7
        %v2122 = vsub.s32 7, %v2121
        %v2123 = vrot.slane %v791, %v2122
        %v2124 = vmul.f32 %v2092, %v2123
        %v2125 = vmul.f32 %v2093, %v2123
        %v2126 = vmul.f32 %v2094, %v2123
        %v2127 = vmul.f32 %v2095, %v2123
        %v2128 = vmul.f32 %v2096, %v2123
        %v2129 = vmul.f32 %v2097, %v2123
        %v2130 = vmul.f32 %v2098, %v2123
        %v2131 = vmul.f32 %v2099, %v2123
        %v2132 = vmul.f32 %v2100, %v2123
        %v2133 = vmul.f32 %v2101, %v2123
        %v2134 = vmul.f32 %v2102, %v2123
        %v2135 = vmul.f32 %v2103, %v2123
        %v2136 = vmul.f32 %v2104, %v2123
        %v2137 = vmul.f32 %v2105, %v2123
        %v2138 = vmul.f32 %v2106, %v2123
        %v2139 = vmul.f32 %v2107, %v2123
        %v2140 = vmul.f32 %v2108, %v2123
        %v2141 = vmul.f32 %v2109, %v2123
        %v2142 = vmul.f32 %v2110, %v2123
        %v2143 = vmul.f32 %v2111, %v2123
        %v2144 = vmul.f32 %v2112, %v2123
        %v2145 = vmul.f32 %v2113, %v2123
        %v2146 = vmul.f32 %v2114, %v2123
        %v2147 = vmul.f32 %v2115, %v2123
        %v2148 = vmul.f32 %v2116, %v2123
        %v2149 = vmul.f32 %v2117, %v2123
        %v2150 = vmul.f32 %v2118, %v2123
        %v2151 = vmul.f32 %v2119, %v2123
        %v2152 = vadd.f32 %v2063, %v2124
        %v2153 = vadd.f32 %v2064, %v2125
        %v2154 = vadd.f32 %v2065, %v2126
        %v2155 = vadd.f32 %v2066, %v2127
        %v2156 = vadd.f32 %v2067, %v2128
        %v2157 = vadd.f32 %v2068, %v2129
        %v2158 = vadd.f32 %v2069, %v2130
        %v2159 = vadd.f32 %v2070, %v2131
        %v2160 = vadd.f32 %v2071, %v2132
        %v2161 = vadd.f32 %v2072, %v2133
        %v2162 = vadd.f32 %v2073, %v2134
        %v2163 = vadd.f32 %v2074, %v2135
        %v2164 = vadd.f32 %v2075, %v2136
        %v2165 = vadd.f32 %v2076, %v2137
        %v2166 = vadd.f32 %v2077, %v2138
        %v2167 = vadd.f32 %v2078, %v2139
        %v2168 = vadd.f32 %v2079, %v2140
        %v2169 = vadd.f32 %v2080, %v2141
        %v2170 = vadd.f32 %v2081, %v2142
        %v2171 = vadd.f32 %v2082, %v2143
        %v2172 = vadd.f32 %v2083, %v2144
        %v2173 = vadd.f32 %v2084, %v2145
        %v2174 = vadd.f32 %v2085, %v2146
        %v2175 = vadd.f32 %v2086, %v2147
        %v2176 = vadd.f32 %v2087, %v2148
        %v2177 = vadd.f32 %v2088, %v2149
        %v2178 = vadd.f32 %v2089, %v2150
        %v2179 = vadd.f32 %v2090, %v2151
        %s2180 = scalar_lea.vmem [#allocation2], 336
        %v2181 = vld [vmem:[%s2180] sm:$0xff]
        %v2182 = vld [vmem:[%s2180 + $0x8] sm:$0x3f]
        %v2183 = vld [vmem:[%s2180 + $0x10] sm:$0xff]
        %v2184 = vld [vmem:[%s2180 + $0x18] sm:$0x3f]
        %v2185 = vld [vmem:[%s2180 + $0x20] sm:$0xff]
        %v2186 = vld [vmem:[%s2180 + $0x28] sm:$0x3f]
        %v2187 = vld [vmem:[%s2180 + $0x30] sm:$0xff]
        %v2188 = vld [vmem:[%s2180 + $0x38] sm:$0x3f]
        %v2189 = vld [vmem:[%s2180 + $0x40] sm:$0xff]
        %v2190 = vld [vmem:[%s2180 + $0x48] sm:$0x3f]
        %v2191 = vld [vmem:[%s2180 + $0x50] sm:$0xff]
        %v2192 = vld [vmem:[%s2180 + $0x58] sm:$0x3f]
        %v2193 = vld [vmem:[%s2180 + $0x60] sm:$0xff]
        %v2194 = vld [vmem:[%s2180 + $0x68] sm:$0x3f]
        %v2195 = vld [vmem:[%s2180 + $0x70] sm:$0xff]
        %v2196 = vld [vmem:[%s2180 + $0x78] sm:$0x3f]
        %v2197 = vld [vmem:[%s2180 + $0x80] sm:$0xff]
        %v2198 = vld [vmem:[%s2180 + $0x88] sm:$0x3f]
        %v2199 = vld [vmem:[%s2180 + $0x90] sm:$0xff]
        %v2200 = vld [vmem:[%s2180 + $0x98] sm:$0x3f]
        %v2201 = vld [vmem:[%s2180 + $0xa0] sm:$0xff]
        %v2202 = vld [vmem:[%s2180 + $0xa8] sm:$0x3f]
        %v2203 = vld [vmem:[%s2180 + $0xb0] sm:$0xff]
        %v2204 = vld [vmem:[%s2180 + $0xb8] sm:$0x3f]
        %v2205 = vld [vmem:[%s2180 + $0xc0] sm:$0xff]
        %v2206 = vld [vmem:[%s2180 + $0xc8] sm:$0x3f]
        %v2207 = vld [vmem:[%s2180 + $0xd0] sm:$0xff]
        %v2208 = vld [vmem:[%s2180 + $0xd8] sm:$0x3f]
        %v2209 = vlaneseq
        %v2210 = vshrl.u32 %v2209, 7
        %v2211 = vsub.s32 0, %v2210
        %v2212 = vrot.slane %v792, %v2211
        %v2213 = vmul.f32 %v2181, %v2212
        %v2214 = vmul.f32 %v2182, %v2212
        %v2215 = vmul.f32 %v2183, %v2212
        %v2216 = vmul.f32 %v2184, %v2212
        %v2217 = vmul.f32 %v2185, %v2212
        %v2218 = vmul.f32 %v2186, %v2212
        %v2219 = vmul.f32 %v2187, %v2212
        %v2220 = vmul.f32 %v2188, %v2212
        %v2221 = vmul.f32 %v2189, %v2212
        %v2222 = vmul.f32 %v2190, %v2212
        %v2223 = vmul.f32 %v2191, %v2212
        %v2224 = vmul.f32 %v2192, %v2212
        %v2225 = vmul.f32 %v2193, %v2212
        %v2226 = vmul.f32 %v2194, %v2212
        %v2227 = vmul.f32 %v2195, %v2212
        %v2228 = vmul.f32 %v2196, %v2212
        %v2229 = vmul.f32 %v2197, %v2212
        %v2230 = vmul.f32 %v2198, %v2212
        %v2231 = vmul.f32 %v2199, %v2212
        %v2232 = vmul.f32 %v2200, %v2212
        %v2233 = vmul.f32 %v2201, %v2212
        %v2234 = vmul.f32 %v2202, %v2212
        %v2235 = vmul.f32 %v2203, %v2212
        %v2236 = vmul.f32 %v2204, %v2212
        %v2237 = vmul.f32 %v2205, %v2212
        %v2238 = vmul.f32 %v2206, %v2212
        %v2239 = vmul.f32 %v2207, %v2212
        %v2240 = vmul.f32 %v2208, %v2212
        %v2241 = vadd.f32 %v2152, %v2213
        %v2242 = vadd.f32 %v2153, %v2214
        %v2243 = vadd.f32 %v2154, %v2215
        %v2244 = vadd.f32 %v2155, %v2216
        %v2245 = vadd.f32 %v2156, %v2217
        %v2246 = vadd.f32 %v2157, %v2218
        %v2247 = vadd.f32 %v2158, %v2219
        %v2248 = vadd.f32 %v2159, %v2220
        %v2249 = vadd.f32 %v2160, %v2221
        %v2250 = vadd.f32 %v2161, %v2222
        %v2251 = vadd.f32 %v2162, %v2223
        %v2252 = vadd.f32 %v2163, %v2224
        %v2253 = vadd.f32 %v2164, %v2225
        %v2254 = vadd.f32 %v2165, %v2226
        %v2255 = vadd.f32 %v2166, %v2227
        %v2256 = vadd.f32 %v2167, %v2228
        %v2257 = vadd.f32 %v2168, %v2229
        %v2258 = vadd.f32 %v2169, %v2230
        %v2259 = vadd.f32 %v2170, %v2231
        %v2260 = vadd.f32 %v2171, %v2232
        %v2261 = vadd.f32 %v2172, %v2233
        %v2262 = vadd.f32 %v2173, %v2234
        %v2263 = vadd.f32 %v2174, %v2235
        %v2264 = vadd.f32 %v2175, %v2236
        %v2265 = vadd.f32 %v2176, %v2237
        %v2266 = vadd.f32 %v2177, %v2238
        %v2267 = vadd.f32 %v2178, %v2239
        %v2268 = vadd.f32 %v2179, %v2240
        %s2269 = scalar_lea.vmem [#allocation2], 624
        %v2270 = vld [vmem:[%s2269] sm:$0xff]
        %v2271 = vld [vmem:[%s2269 + $0x8] sm:$0x3f]
        %v2272 = vld [vmem:[%s2269 + $0x10] sm:$0xff]
        %v2273 = vld [vmem:[%s2269 + $0x18] sm:$0x3f]
        %v2274 = vld [vmem:[%s2269 + $0x20] sm:$0xff]
        %v2275 = vld [vmem:[%s2269 + $0x28] sm:$0x3f]
        %v2276 = vld [vmem:[%s2269 + $0x30] sm:$0xff]
        %v2277 = vld [vmem:[%s2269 + $0x38] sm:$0x3f]
        %v2278 = vld [vmem:[%s2269 + $0x40] sm:$0xff]
        %v2279 = vld [vmem:[%s2269 + $0x48] sm:$0x3f]
        %v2280 = vld [vmem:[%s2269 + $0x50] sm:$0xff]
        %v2281 = vld [vmem:[%s2269 + $0x58] sm:$0x3f]
        %v2282 = vld [vmem:[%s2269 + $0x60] sm:$0xff]
        %v2283 = vld [vmem:[%s2269 + $0x68] sm:$0x3f]
        %v2284 = vld [vmem:[%s2269 + $0x70] sm:$0xff]
        %v2285 = vld [vmem:[%s2269 + $0x78] sm:$0x3f]
        %v2286 = vld [vmem:[%s2269 + $0x80] sm:$0xff]
        %v2287 = vld [vmem:[%s2269 + $0x88] sm:$0x3f]
        %v2288 = vld [vmem:[%s2269 + $0x90] sm:$0xff]
        %v2289 = vld [vmem:[%s2269 + $0x98] sm:$0x3f]
        %v2290 = vld [vmem:[%s2269 + $0xa0] sm:$0xff]
        %v2291 = vld [vmem:[%s2269 + $0xa8] sm:$0x3f]
        %v2292 = vld [vmem:[%s2269 + $0xb0] sm:$0xff]
        %v2293 = vld [vmem:[%s2269 + $0xb8] sm:$0x3f]
        %v2294 = vld [vmem:[%s2269 + $0xc0] sm:$0xff]
        %v2295 = vld [vmem:[%s2269 + $0xc8] sm:$0x3f]
        %v2296 = vld [vmem:[%s2269 + $0xd0] sm:$0xff]
        %v2297 = vld [vmem:[%s2269 + $0xd8] sm:$0x3f]
        %v2298 = vlaneseq
        %v2299 = vshrl.u32 %v2298, 7
        %v2300 = vsub.s32 1, %v2299
        %v2301 = vrot.slane %v792, %v2300
        %v2302 = vmul.f32 %v2270, %v2301
        %v2303 = vmul.f32 %v2271, %v2301
        %v2304 = vmul.f32 %v2272, %v2301
        %v2305 = vmul.f32 %v2273, %v2301
        %v2306 = vmul.f32 %v2274, %v2301
        %v2307 = vmul.f32 %v2275, %v2301
        %v2308 = vmul.f32 %v2276, %v2301
        %v2309 = vmul.f32 %v2277, %v2301
        %v2310 = vmul.f32 %v2278, %v2301
        %v2311 = vmul.f32 %v2279, %v2301
        %v2312 = vmul.f32 %v2280, %v2301
        %v2313 = vmul.f32 %v2281, %v2301
        %v2314 = vmul.f32 %v2282, %v2301
        %v2315 = vmul.f32 %v2283, %v2301
        %v2316 = vmul.f32 %v2284, %v2301
        %v2317 = vmul.f32 %v2285, %v2301
        %v2318 = vmul.f32 %v2286, %v2301
        %v2319 = vmul.f32 %v2287, %v2301
        %v2320 = vmul.f32 %v2288, %v2301
        %v2321 = vmul.f32 %v2289, %v2301
        %v2322 = vmul.f32 %v2290, %v2301
        %v2323 = vmul.f32 %v2291, %v2301
        %v2324 = vmul.f32 %v2292, %v2301
        %v2325 = vmul.f32 %v2293, %v2301
        %v2326 = vmul.f32 %v2294, %v2301
        %v2327 = vmul.f32 %v2295, %v2301
        %v2328 = vmul.f32 %v2296, %v2301
        %v2329 = vmul.f32 %v2297, %v2301
        %v2330 = vadd.f32 %v2241, %v2302
        %v2331 = vadd.f32 %v2242, %v2303
        %v2332 = vadd.f32 %v2243, %v2304
        %v2333 = vadd.f32 %v2244, %v2305
        %v2334 = vadd.f32 %v2245, %v2306
        %v2335 = vadd.f32 %v2246, %v2307
        %v2336 = vadd.f32 %v2247, %v2308
        %v2337 = vadd.f32 %v2248, %v2309
        %v2338 = vadd.f32 %v2249, %v2310
        %v2339 = vadd.f32 %v2250, %v2311
        %v2340 = vadd.f32 %v2251, %v2312
        %v2341 = vadd.f32 %v2252, %v2313
        %v2342 = vadd.f32 %v2253, %v2314
        %v2343 = vadd.f32 %v2254, %v2315
        %v2344 = vadd.f32 %v2255, %v2316
        %v2345 = vadd.f32 %v2256, %v2317
        %v2346 = vadd.f32 %v2257, %v2318
        %v2347 = vadd.f32 %v2258, %v2319
        %v2348 = vadd.f32 %v2259, %v2320
        %v2349 = vadd.f32 %v2260, %v2321
        %v2350 = vadd.f32 %v2261, %v2322
        %v2351 = vadd.f32 %v2262, %v2323
        %v2352 = vadd.f32 %v2263, %v2324
        %v2353 = vadd.f32 %v2264, %v2325
        %v2354 = vadd.f32 %v2265, %v2326
        %v2355 = vadd.f32 %v2266, %v2327
        %v2356 = vadd.f32 %v2267, %v2328
        %v2357 = vadd.f32 %v2268, %v2329
        %s2358 = scalar_lea.vmem [#allocation2], 912
        %v2359 = vld [vmem:[%s2358] sm:$0xff]
        %v2360 = vld [vmem:[%s2358 + $0x8] sm:$0x3f]
        %v2361 = vld [vmem:[%s2358 + $0x10] sm:$0xff]
        %v2362 = vld [vmem:[%s2358 + $0x18] sm:$0x3f]
        %v2363 = vld [vmem:[%s2358 + $0x20] sm:$0xff]
        %v2364 = vld [vmem:[%s2358 + $0x28] sm:$0x3f]
        %v2365 = vld [vmem:[%s2358 + $0x30] sm:$0xff]
        %v2366 = vld [vmem:[%s2358 + $0x38] sm:$0x3f]
        %v2367 = vld [vmem:[%s2358 + $0x40] sm:$0xff]
        %v2368 = vld [vmem:[%s2358 + $0x48] sm:$0x3f]
        %v2369 = vld [vmem:[%s2358 + $0x50] sm:$0xff]
        %v2370 = vld [vmem:[%s2358 + $0x58] sm:$0x3f]
        %v2371 = vld [vmem:[%s2358 + $0x60] sm:$0xff]
        %v2372 = vld [vmem:[%s2358 + $0x68] sm:$0x3f]
        %v2373 = vld [vmem:[%s2358 + $0x70] sm:$0xff]
        %v2374 = vld [vmem:[%s2358 + $0x78] sm:$0x3f]
        %v2375 = vld [vmem:[%s2358 + $0x80] sm:$0xff]
        %v2376 = vld [vmem:[%s2358 + $0x88] sm:$0x3f]
        %v2377 = vld [vmem:[%s2358 + $0x90] sm:$0xff]
        %v2378 = vld [vmem:[%s2358 + $0x98] sm:$0x3f]
        %v2379 = vld [vmem:[%s2358 + $0xa0] sm:$0xff]
        %v2380 = vld [vmem:[%s2358 + $0xa8] sm:$0x3f]
        %v2381 = vld [vmem:[%s2358 + $0xb0] sm:$0xff]
        %v2382 = vld [vmem:[%s2358 + $0xb8] sm:$0x3f]
        %v2383 = vld [vmem:[%s2358 + $0xc0] sm:$0xff]
        %v2384 = vld [vmem:[%s2358 + $0xc8] sm:$0x3f]
        %v2385 = vld [vmem:[%s2358 + $0xd0] sm:$0xff]
        %v2386 = vld [vmem:[%s2358 + $0xd8] sm:$0x3f]
        %v2387 = vlaneseq
        %v2388 = vshrl.u32 %v2387, 7
        %v2389 = vsub.s32 2, %v2388
        %v2390 = vrot.slane %v792, %v2389
        %v2391 = vmul.f32 %v2359, %v2390
        %v2392 = vmul.f32 %v2360, %v2390
        %v2393 = vmul.f32 %v2361, %v2390
        %v2394 = vmul.f32 %v2362, %v2390
        %v2395 = vmul.f32 %v2363, %v2390
        %v2396 = vmul.f32 %v2364, %v2390
        %v2397 = vmul.f32 %v2365, %v2390
        %v2398 = vmul.f32 %v2366, %v2390
        %v2399 = vmul.f32 %v2367, %v2390
        %v2400 = vmul.f32 %v2368, %v2390
        %v2401 = vmul.f32 %v2369, %v2390
        %v2402 = vmul.f32 %v2370, %v2390
        %v2403 = vmul.f32 %v2371, %v2390
        %v2404 = vmul.f32 %v2372, %v2390
        %v2405 = vmul.f32 %v2373, %v2390
        %v2406 = vmul.f32 %v2374, %v2390
        %v2407 = vmul.f32 %v2375, %v2390
        %v2408 = vmul.f32 %v2376, %v2390
        %v2409 = vmul.f32 %v2377, %v2390
        %v2410 = vmul.f32 %v2378, %v2390
        %v2411 = vmul.f32 %v2379, %v2390
        %v2412 = vmul.f32 %v2380, %v2390
        %v2413 = vmul.f32 %v2381, %v2390
        %v2414 = vmul.f32 %v2382, %v2390
        %v2415 = vmul.f32 %v2383, %v2390
        %v2416 = vmul.f32 %v2384, %v2390
        %v2417 = vmul.f32 %v2385, %v2390
        %v2418 = vmul.f32 %v2386, %v2390
        %v2419 = vadd.f32 %v2330, %v2391
        %v2420 = vadd.f32 %v2331, %v2392
        %v2421 = vadd.f32 %v2332, %v2393
        %v2422 = vadd.f32 %v2333, %v2394
        %v2423 = vadd.f32 %v2334, %v2395
        %v2424 = vadd.f32 %v2335, %v2396
        %v2425 = vadd.f32 %v2336, %v2397
        %v2426 = vadd.f32 %v2337, %v2398
        %v2427 = vadd.f32 %v2338, %v2399
        %v2428 = vadd.f32 %v2339, %v2400
        %v2429 = vadd.f32 %v2340, %v2401
        %v2430 = vadd.f32 %v2341, %v2402
        %v2431 = vadd.f32 %v2342, %v2403
        %v2432 = vadd.f32 %v2343, %v2404
        %v2433 = vadd.f32 %v2344, %v2405
        %v2434 = vadd.f32 %v2345, %v2406
        %v2435 = vadd.f32 %v2346, %v2407
        %v2436 = vadd.f32 %v2347, %v2408
        %v2437 = vadd.f32 %v2348, %v2409
        %v2438 = vadd.f32 %v2349, %v2410
        %v2439 = vadd.f32 %v2350, %v2411
        %v2440 = vadd.f32 %v2351, %v2412
        %v2441 = vadd.f32 %v2352, %v2413
        %v2442 = vadd.f32 %v2353, %v2414
        %v2443 = vadd.f32 %v2354, %v2415
        %v2444 = vadd.f32 %v2355, %v2416
        %v2445 = vadd.f32 %v2356, %v2417
        %v2446 = vadd.f32 %v2357, %v2418
        %s2447 = scalar_lea.vmem [#allocation2], 1200
        %v2448 = vld [vmem:[%s2447] sm:$0xff]
        %v2449 = vld [vmem:[%s2447 + $0x8] sm:$0x3f]
        %v2450 = vld [vmem:[%s2447 + $0x10] sm:$0xff]
        %v2451 = vld [vmem:[%s2447 + $0x18] sm:$0x3f]
        %v2452 = vld [vmem:[%s2447 + $0x20] sm:$0xff]
        %v2453 = vld [vmem:[%s2447 + $0x28] sm:$0x3f]
        %v2454 = vld [vmem:[%s2447 + $0x30] sm:$0xff]
        %v2455 = vld [vmem:[%s2447 + $0x38] sm:$0x3f]
        %v2456 = vld [vmem:[%s2447 + $0x40] sm:$0xff]
        %v2457 = vld [vmem:[%s2447 + $0x48] sm:$0x3f]
        %v2458 = vld [vmem:[%s2447 + $0x50] sm:$0xff]
        %v2459 = vld [vmem:[%s2447 + $0x58] sm:$0x3f]
        %v2460 = vld [vmem:[%s2447 + $0x60] sm:$0xff]
        %v2461 = vld [vmem:[%s2447 + $0x68] sm:$0x3f]
        %v2462 = vld [vmem:[%s2447 + $0x70] sm:$0xff]
        %v2463 = vld [vmem:[%s2447 + $0x78] sm:$0x3f]
        %v2464 = vld [vmem:[%s2447 + $0x80] sm:$0xff]
        %v2465 = vld [vmem:[%s2447 + $0x88] sm:$0x3f]
        %v2466 = vld [vmem:[%s2447 + $0x90] sm:$0xff]
        %v2467 = vld [vmem:[%s2447 + $0x98] sm:$0x3f]
        %v2468 = vld [vmem:[%s2447 + $0xa0] sm:$0xff]
        %v2469 = vld [vmem:[%s2447 + $0xa8] sm:$0x3f]
        %v2470 = vld [vmem:[%s2447 + $0xb0] sm:$0xff]
        %v2471 = vld [vmem:[%s2447 + $0xb8] sm:$0x3f]
        %v2472 = vld [vmem:[%s2447 + $0xc0] sm:$0xff]
        %v2473 = vld [vmem:[%s2447 + $0xc8] sm:$0x3f]
        %v2474 = vld [vmem:[%s2447 + $0xd0] sm:$0xff]
        %v2475 = vld [vmem:[%s2447 + $0xd8] sm:$0x3f]
        %v2476 = vlaneseq
        %v2477 = vshrl.u32 %v2476, 7
        %v2478 = vsub.s32 3, %v2477
        %v2479 = vrot.slane %v792, %v2478
        %v2480 = vmul.f32 %v2448, %v2479
        %v2481 = vmul.f32 %v2449, %v2479
        %v2482 = vmul.f32 %v2450, %v2479
        %v2483 = vmul.f32 %v2451, %v2479
        %v2484 = vmul.f32 %v2452, %v2479
        %v2485 = vmul.f32 %v2453, %v2479
        %v2486 = vmul.f32 %v2454, %v2479
        %v2487 = vmul.f32 %v2455, %v2479
        %v2488 = vmul.f32 %v2456, %v2479
        %v2489 = vmul.f32 %v2457, %v2479
        %v2490 = vmul.f32 %v2458, %v2479
        %v2491 = vmul.f32 %v2459, %v2479
        %v2492 = vmul.f32 %v2460, %v2479
        %v2493 = vmul.f32 %v2461, %v2479
        %v2494 = vmul.f32 %v2462, %v2479
        %v2495 = vmul.f32 %v2463, %v2479
        %v2496 = vmul.f32 %v2464, %v2479
        %v2497 = vmul.f32 %v2465, %v2479
        %v2498 = vmul.f32 %v2466, %v2479
        %v2499 = vmul.f32 %v2467, %v2479
        %v2500 = vmul.f32 %v2468, %v2479
        %v2501 = vmul.f32 %v2469, %v2479
        %v2502 = vmul.f32 %v2470, %v2479
        %v2503 = vmul.f32 %v2471, %v2479
        %v2504 = vmul.f32 %v2472, %v2479
        %v2505 = vmul.f32 %v2473, %v2479
        %v2506 = vmul.f32 %v2474, %v2479
        %v2507 = vmul.f32 %v2475, %v2479
        %v2508 = vadd.f32 %v2419, %v2480
        %v2509 = vadd.f32 %v2420, %v2481
        %v2510 = vadd.f32 %v2421, %v2482
        %v2511 = vadd.f32 %v2422, %v2483
        %v2512 = vadd.f32 %v2423, %v2484
        %v2513 = vadd.f32 %v2424, %v2485
        %v2514 = vadd.f32 %v2425, %v2486
        %v2515 = vadd.f32 %v2426, %v2487
        %v2516 = vadd.f32 %v2427, %v2488
        %v2517 = vadd.f32 %v2428, %v2489
        %v2518 = vadd.f32 %v2429, %v2490
        %v2519 = vadd.f32 %v2430, %v2491
        %v2520 = vadd.f32 %v2431, %v2492
        %v2521 = vadd.f32 %v2432, %v2493
        %v2522 = vadd.f32 %v2433, %v2494
        %v2523 = vadd.f32 %v2434, %v2495
        %v2524 = vadd.f32 %v2435, %v2496
        %v2525 = vadd.f32 %v2436, %v2497
        %v2526 = vadd.f32 %v2437, %v2498
        %v2527 = vadd.f32 %v2438, %v2499
        %v2528 = vadd.f32 %v2439, %v2500
        %v2529 = vadd.f32 %v2440, %v2501
        %v2530 = vadd.f32 %v2441, %v2502
        %v2531 = vadd.f32 %v2442, %v2503
        %v2532 = vadd.f32 %v2443, %v2504
        %v2533 = vadd.f32 %v2444, %v2505
        %v2534 = vadd.f32 %v2445, %v2506
        %v2535 = vadd.f32 %v2446, %v2507
        %s2536 = scalar_lea.vmem [#allocation2], 64
        %v2537 = vld [vmem:[%s2536] sm:$0xff]
        %v2538 = vld [vmem:[%s2536 + $0x8] sm:$0x3f]
        %v2539 = vld [vmem:[%s2536 + $0x10] sm:$0xff]
        %v2540 = vld [vmem:[%s2536 + $0x18] sm:$0x3f]
        %v2541 = vld [vmem:[%s2536 + $0x20] sm:$0xff]
        %v2542 = vld [vmem:[%s2536 + $0x28] sm:$0x3f]
        %v2543 = vld [vmem:[%s2536 + $0x30] sm:$0xff]
        %v2544 = vld [vmem:[%s2536 + $0x38] sm:$0x3f]
        %v2545 = vld [vmem:[%s2536 + $0x40] sm:$0xff]
        %v2546 = vld [vmem:[%s2536 + $0x48] sm:$0x3f]
        %v2547 = vld [vmem:[%s2536 + $0x50] sm:$0xff]
        %v2548 = vld [vmem:[%s2536 + $0x58] sm:$0x3f]
        %v2549 = vld [vmem:[%s2536 + $0x60] sm:$0xff]
        %v2550 = vld [vmem:[%s2536 + $0x68] sm:$0x3f]
        %v2551 = vld [vmem:[%s2536 + $0x70] sm:$0xff]
        %v2552 = vld [vmem:[%s2536 + $0x78] sm:$0x3f]
        %v2553 = vld [vmem:[%s2536 + $0x80] sm:$0xff]
        %v2554 = vld [vmem:[%s2536 + $0x88] sm:$0x3f]
        %v2555 = vld [vmem:[%s2536 + $0x90] sm:$0xff]
        %v2556 = vld [vmem:[%s2536 + $0x98] sm:$0x3f]
        %v2557 = vld [vmem:[%s2536 + $0xa0] sm:$0xff]
        %v2558 = vld [vmem:[%s2536 + $0xa8] sm:$0x3f]
        %v2559 = vld [vmem:[%s2536 + $0xb0] sm:$0xff]
        %v2560 = vld [vmem:[%s2536 + $0xb8] sm:$0x3f]
        %v2561 = vld [vmem:[%s2536 + $0xc0] sm:$0xff]
        %v2562 = vld [vmem:[%s2536 + $0xc8] sm:$0x3f]
        %v2563 = vld [vmem:[%s2536 + $0xd0] sm:$0xff]
        %v2564 = vld [vmem:[%s2536 + $0xd8] sm:$0x3f]
        %v2565 = vlaneseq
        %v2566 = vshrl.u32 %v2565, 7
        %v2567 = vsub.s32 4, %v2566
        %v2568 = vrot.slane %v792, %v2567
        %v2569 = vmul.f32 %v2537, %v2568
        %v2570 = vmul.f32 %v2538, %v2568
        %v2571 = vmul.f32 %v2539, %v2568
        %v2572 = vmul.f32 %v2540, %v2568
        %v2573 = vmul.f32 %v2541, %v2568
        %v2574 = vmul.f32 %v2542, %v2568
        %v2575 = vmul.f32 %v2543, %v2568
        %v2576 = vmul.f32 %v2544, %v2568
        %v2577 = vmul.f32 %v2545, %v2568
        %v2578 = vmul.f32 %v2546, %v2568
        %v2579 = vmul.f32 %v2547, %v2568
        %v2580 = vmul.f32 %v2548, %v2568
        %v2581 = vmul.f32 %v2549, %v2568
        %v2582 = vmul.f32 %v2550, %v2568
        %v2583 = vmul.f32 %v2551, %v2568
        %v2584 = vmul.f32 %v2552, %v2568
        %v2585 = vmul.f32 %v2553, %v2568
        %v2586 = vmul.f32 %v2554, %v2568
        %v2587 = vmul.f32 %v2555, %v2568
        %v2588 = vmul.f32 %v2556, %v2568
        %v2589 = vmul.f32 %v2557, %v2568
        %v2590 = vmul.f32 %v2558, %v2568
        %v2591 = vmul.f32 %v2559, %v2568
        %v2592 = vmul.f32 %v2560, %v2568
        %v2593 = vmul.f32 %v2561, %v2568
        %v2594 = vmul.f32 %v2562, %v2568
        %v2595 = vmul.f32 %v2563, %v2568
        %v2596 = vmul.f32 %v2564, %v2568
        %v2597 = vadd.f32 %v2508, %v2569
        %v2598 = vadd.f32 %v2509, %v2570
        %v2599 = vadd.f32 %v2510, %v2571
        %v2600 = vadd.f32 %v2511, %v2572
        %v2601 = vadd.f32 %v2512, %v2573
        %v2602 = vadd.f32 %v2513, %v2574
        %v2603 = vadd.f32 %v2514, %v2575
        %v2604 = vadd.f32 %v2515, %v2576
        %v2605 = vadd.f32 %v2516, %v2577
        %v2606 = vadd.f32 %v2517, %v2578
        %v2607 = vadd.f32 %v2518, %v2579
        %v2608 = vadd.f32 %v2519, %v2580
        %v2609 = vadd.f32 %v2520, %v2581
        %v2610 = vadd.f32 %v2521, %v2582
        %v2611 = vadd.f32 %v2522, %v2583
        %v2612 = vadd.f32 %v2523, %v2584
        %v2613 = vadd.f32 %v2524, %v2585
        %v2614 = vadd.f32 %v2525, %v2586
        %v2615 = vadd.f32 %v2526, %v2587
        %v2616 = vadd.f32 %v2527, %v2588
        %v2617 = vadd.f32 %v2528, %v2589
        %v2618 = vadd.f32 %v2529, %v2590
        %v2619 = vadd.f32 %v2530, %v2591
        %v2620 = vadd.f32 %v2531, %v2592
        %v2621 = vadd.f32 %v2532, %v2593
        %v2622 = vadd.f32 %v2533, %v2594
        %v2623 = vadd.f32 %v2534, %v2595
        %v2624 = vadd.f32 %v2535, %v2596
        %s2625 = scalar_lea.vmem [#allocation2], 352
        %v2626 = vld [vmem:[%s2625] sm:$0xff]
        %v2627 = vld [vmem:[%s2625 + $0x8] sm:$0x3f]
        %v2628 = vld [vmem:[%s2625 + $0x10] sm:$0xff]
        %v2629 = vld [vmem:[%s2625 + $0x18] sm:$0x3f]
        %v2630 = vld [vmem:[%s2625 + $0x20] sm:$0xff]
        %v2631 = vld [vmem:[%s2625 + $0x28] sm:$0x3f]
        %v2632 = vld [vmem:[%s2625 + $0x30] sm:$0xff]
        %v2633 = vld [vmem:[%s2625 + $0x38] sm:$0x3f]
        %v2634 = vld [vmem:[%s2625 + $0x40] sm:$0xff]
        %v2635 = vld [vmem:[%s2625 + $0x48] sm:$0x3f]
        %v2636 = vld [vmem:[%s2625 + $0x50] sm:$0xff]
        %v2637 = vld [vmem:[%s2625 + $0x58] sm:$0x3f]
        %v2638 = vld [vmem:[%s2625 + $0x60] sm:$0xff]
        %v2639 = vld [vmem:[%s2625 + $0x68] sm:$0x3f]
        %v2640 = vld [vmem:[%s2625 + $0x70] sm:$0xff]
        %v2641 = vld [vmem:[%s2625 + $0x78] sm:$0x3f]
        %v2642 = vld [vmem:[%s2625 + $0x80] sm:$0xff]
        %v2643 = vld [vmem:[%s2625 + $0x88] sm:$0x3f]
        %v2644 = vld [vmem:[%s2625 + $0x90] sm:$0xff]
        %v2645 = vld [vmem:[%s2625 + $0x98] sm:$0x3f]
        %v2646 = vld [vmem:[%s2625 + $0xa0] sm:$0xff]
        %v2647 = vld [vmem:[%s2625 + $0xa8] sm:$0x3f]
        %v2648 = vld [vmem:[%s2625 + $0xb0] sm:$0xff]
        %v2649 = vld [vmem:[%s2625 + $0xb8] sm:$0x3f]
        %v2650 = vld [vmem:[%s2625 + $0xc0] sm:$0xff]
        %v2651 = vld [vmem:[%s2625 + $0xc8] sm:$0x3f]
        %v2652 = vld [vmem:[%s2625 + $0xd0] sm:$0xff]
        %v2653 = vld [vmem:[%s2625 + $0xd8] sm:$0x3f]
        %v2654 = vlaneseq
        %v2655 = vshrl.u32 %v2654, 7
        %v2656 = vsub.s32 5, %v2655
        %v2657 = vrot.slane %v792, %v2656
        %v2658 = vmul.f32 %v2626, %v2657
        %v2659 = vmul.f32 %v2627, %v2657
        %v2660 = vmul.f32 %v2628, %v2657
        %v2661 = vmul.f32 %v2629, %v2657
        %v2662 = vmul.f32 %v2630, %v2657
        %v2663 = vmul.f32 %v2631, %v2657
        %v2664 = vmul.f32 %v2632, %v2657
        %v2665 = vmul.f32 %v2633, %v2657
        %v2666 = vmul.f32 %v2634, %v2657
        %v2667 = vmul.f32 %v2635, %v2657
        %v2668 = vmul.f32 %v2636, %v2657
        %v2669 = vmul.f32 %v2637, %v2657
        %v2670 = vmul.f32 %v2638, %v2657
        %v2671 = vmul.f32 %v2639, %v2657
        %v2672 = vmul.f32 %v2640, %v2657
        %v2673 = vmul.f32 %v2641, %v2657
        %v2674 = vmul.f32 %v2642, %v2657
        %v2675 = vmul.f32 %v2643, %v2657
        %v2676 = vmul.f32 %v2644, %v2657
        %v2677 = vmul.f32 %v2645, %v2657
        %v2678 = vmul.f32 %v2646, %v2657
        %v2679 = vmul.f32 %v2647, %v2657
        %v2680 = vmul.f32 %v2648, %v2657
        %v2681 = vmul.f32 %v2649, %v2657
        %v2682 = vmul.f32 %v2650, %v2657
        %v2683 = vmul.f32 %v2651, %v2657
        %v2684 = vmul.f32 %v2652, %v2657
        %v2685 = vmul.f32 %v2653, %v2657
        %v2686 = vadd.f32 %v2597, %v2658
        %v2687 = vadd.f32 %v2598, %v2659
        %v2688 = vadd.f32 %v2599, %v2660
        %v2689 = vadd.f32 %v2600, %v2661
        %v2690 = vadd.f32 %v2601, %v2662
        %v2691 = vadd.f32 %v2602, %v2663
        %v2692 = vadd.f32 %v2603, %v2664
        %v2693 = vadd.f32 %v2604, %v2665
        %v2694 = vadd.f32 %v2605, %v2666
        %v2695 = vadd.f32 %v2606, %v2667
        %v2696 = vadd.f32 %v2607, %v2668
        %v2697 = vadd.f32 %v2608, %v2669
        %v2698 = vadd.f32 %v2609, %v2670
        %v2699 = vadd.f32 %v2610, %v2671
        %v2700 = vadd.f32 %v2611, %v2672
        %v2701 = vadd.f32 %v2612, %v2673
        %v2702 = vadd.f32 %v2613, %v2674
        %v2703 = vadd.f32 %v2614, %v2675
        %v2704 = vadd.f32 %v2615, %v2676
        %v2705 = vadd.f32 %v2616, %v2677
        %v2706 = vadd.f32 %v2617, %v2678
        %v2707 = vadd.f32 %v2618, %v2679
        %v2708 = vadd.f32 %v2619, %v2680
        %v2709 = vadd.f32 %v2620, %v2681
        %v2710 = vadd.f32 %v2621, %v2682
        %v2711 = vadd.f32 %v2622, %v2683
        %v2712 = vadd.f32 %v2623, %v2684
        %v2713 = vadd.f32 %v2624, %v2685
        %s2714 = scalar_lea.vmem [#allocation2], 640
        %v2715 = vld [vmem:[%s2714] sm:$0xff]
        %v2716 = vld [vmem:[%s2714 + $0x8] sm:$0x3f]
        %v2717 = vld [vmem:[%s2714 + $0x10] sm:$0xff]
        %v2718 = vld [vmem:[%s2714 + $0x18] sm:$0x3f]
        %v2719 = vld [vmem:[%s2714 + $0x20] sm:$0xff]
        %v2720 = vld [vmem:[%s2714 + $0x28] sm:$0x3f]
        %v2721 = vld [vmem:[%s2714 + $0x30] sm:$0xff]
        %v2722 = vld [vmem:[%s2714 + $0x38] sm:$0x3f]
        %v2723 = vld [vmem:[%s2714 + $0x40] sm:$0xff]
        %v2724 = vld [vmem:[%s2714 + $0x48] sm:$0x3f]
        %v2725 = vld [vmem:[%s2714 + $0x50] sm:$0xff]
        %v2726 = vld [vmem:[%s2714 + $0x58] sm:$0x3f]
        %v2727 = vld [vmem:[%s2714 + $0x60] sm:$0xff]
        %v2728 = vld [vmem:[%s2714 + $0x68] sm:$0x3f]
        %v2729 = vld [vmem:[%s2714 + $0x70] sm:$0xff]
        %v2730 = vld [vmem:[%s2714 + $0x78] sm:$0x3f]
        %v2731 = vld [vmem:[%s2714 + $0x80] sm:$0xff]
        %v2732 = vld [vmem:[%s2714 + $0x88] sm:$0x3f]
        %v2733 = vld [vmem:[%s2714 + $0x90] sm:$0xff]
        %v2734 = vld [vmem:[%s2714 + $0x98] sm:$0x3f]
        %v2735 = vld [vmem:[%s2714 + $0xa0] sm:$0xff]
        %v2736 = vld [vmem:[%s2714 + $0xa8] sm:$0x3f]
        %v2737 = vld [vmem:[%s2714 + $0xb0] sm:$0xff]
        %v2738 = vld [vmem:[%s2714 + $0xb8] sm:$0x3f]
        %v2739 = vld [vmem:[%s2714 + $0xc0] sm:$0xff]
        %v2740 = vld [vmem:[%s2714 + $0xc8] sm:$0x3f]
        %v2741 = vld [vmem:[%s2714 + $0xd0] sm:$0xff]
        %v2742 = vld [vmem:[%s2714 + $0xd8] sm:$0x3f]
        %v2743 = vlaneseq
        %v2744 = vshrl.u32 %v2743, 7
        %v2745 = vsub.s32 6, %v2744
        %v2746 = vrot.slane %v792, %v2745
        %v2747 = vmul.f32 %v2715, %v2746
        %v2748 = vmul.f32 %v2716, %v2746
        %v2749 = vmul.f32 %v2717, %v2746
        %v2750 = vmul.f32 %v2718, %v2746
        %v2751 = vmul.f32 %v2719, %v2746
        %v2752 = vmul.f32 %v2720, %v2746
        %v2753 = vmul.f32 %v2721, %v2746
        %v2754 = vmul.f32 %v2722, %v2746
        %v2755 = vmul.f32 %v2723, %v2746
        %v2756 = vmul.f32 %v2724, %v2746
        %v2757 = vmul.f32 %v2725, %v2746
        %v2758 = vmul.f32 %v2726, %v2746
        %v2759 = vmul.f32 %v2727, %v2746
        %v2760 = vmul.f32 %v2728, %v2746
        %v2761 = vmul.f32 %v2729, %v2746
        %v2762 = vmul.f32 %v2730, %v2746
        %v2763 = vmul.f32 %v2731, %v2746
        %v2764 = vmul.f32 %v2732, %v2746
        %v2765 = vmul.f32 %v2733, %v2746
        %v2766 = vmul.f32 %v2734, %v2746
        %v2767 = vmul.f32 %v2735, %v2746
        %v2768 = vmul.f32 %v2736, %v2746
        %v2769 = vmul.f32 %v2737, %v2746
        %v2770 = vmul.f32 %v2738, %v2746
        %v2771 = vmul.f32 %v2739, %v2746
        %v2772 = vmul.f32 %v2740, %v2746
        %v2773 = vmul.f32 %v2741, %v2746
        %v2774 = vmul.f32 %v2742, %v2746
        %v2775 = vadd.f32 %v2686, %v2747
        %v2776 = vadd.f32 %v2687, %v2748
        %v2777 = vadd.f32 %v2688, %v2749
        %v2778 = vadd.f32 %v2689, %v2750
        %v2779 = vadd.f32 %v2690, %v2751
        %v2780 = vadd.f32 %v2691, %v2752
        %v2781 = vadd.f32 %v2692, %v2753
        %v2782 = vadd.f32 %v2693, %v2754
        %v2783 = vadd.f32 %v2694, %v2755
        %v2784 = vadd.f32 %v2695, %v2756
        %v2785 = vadd.f32 %v2696, %v2757
        %v2786 = vadd.f32 %v2697, %v2758
        %v2787 = vadd.f32 %v2698, %v2759
        %v2788 = vadd.f32 %v2699, %v2760
        %v2789 = vadd.f32 %v2700, %v2761
        %v2790 = vadd.f32 %v2701, %v2762
        %v2791 = vadd.f32 %v2702, %v2763
        %v2792 = vadd.f32 %v2703, %v2764
        %v2793 = vadd.f32 %v2704, %v2765
        %v2794 = vadd.f32 %v2705, %v2766
        %v2795 = vadd.f32 %v2706, %v2767
        %v2796 = vadd.f32 %v2707, %v2768
        %v2797 = vadd.f32 %v2708, %v2769
        %v2798 = vadd.f32 %v2709, %v2770
        %v2799 = vadd.f32 %v2710, %v2771
        %v2800 = vadd.f32 %v2711, %v2772
        %v2801 = vadd.f32 %v2712, %v2773
        %v2802 = vadd.f32 %v2713, %v2774
        %s2803 = scalar_lea.vmem [#allocation2], 928
        %v2804 = vld [vmem:[%s2803] sm:$0xff]
        %v2805 = vld [vmem:[%s2803 + $0x8] sm:$0x3f]
        %v2806 = vld [vmem:[%s2803 + $0x10] sm:$0xff]
        %v2807 = vld [vmem:[%s2803 + $0x18] sm:$0x3f]
        %v2808 = vld [vmem:[%s2803 + $0x20] sm:$0xff]
        %v2809 = vld [vmem:[%s2803 + $0x28] sm:$0x3f]
        %v2810 = vld [vmem:[%s2803 + $0x30] sm:$0xff]
        %v2811 = vld [vmem:[%s2803 + $0x38] sm:$0x3f]
        %v2812 = vld [vmem:[%s2803 + $0x40] sm:$0xff]
        %v2813 = vld [vmem:[%s2803 + $0x48] sm:$0x3f]
        %v2814 = vld [vmem:[%s2803 + $0x50] sm:$0xff]
        %v2815 = vld [vmem:[%s2803 + $0x58] sm:$0x3f]
        %v2816 = vld [vmem:[%s2803 + $0x60] sm:$0xff]
        %v2817 = vld [vmem:[%s2803 + $0x68] sm:$0x3f]
        %v2818 = vld [vmem:[%s2803 + $0x70] sm:$0xff]
        %v2819 = vld [vmem:[%s2803 + $0x78] sm:$0x3f]
        %v2820 = vld [vmem:[%s2803 + $0x80] sm:$0xff]
        %v2821 = vld [vmem:[%s2803 + $0x88] sm:$0x3f]
        %v2822 = vld [vmem:[%s2803 + $0x90] sm:$0xff]
        %v2823 = vld [vmem:[%s2803 + $0x98] sm:$0x3f]
        %v2824 = vld [vmem:[%s2803 + $0xa0] sm:$0xff]
        %v2825 = vld [vmem:[%s2803 + $0xa8] sm:$0x3f]
        %v2826 = vld [vmem:[%s2803 + $0xb0] sm:$0xff]
        %v2827 = vld [vmem:[%s2803 + $0xb8] sm:$0x3f]
        %v2828 = vld [vmem:[%s2803 + $0xc0] sm:$0xff]
        %v2829 = vld [vmem:[%s2803 + $0xc8] sm:$0x3f]
        %v2830 = vld [vmem:[%s2803 + $0xd0] sm:$0xff]
        %v2831 = vld [vmem:[%s2803 + $0xd8] sm:$0x3f]
        %v2832 = vlaneseq
        %v2833 = vshrl.u32 %v2832, 7
        %v2834 = vsub.s32 7, %v2833
        %v2835 = vrot.slane %v792, %v2834
        %v2836 = vmul.f32 %v2804, %v2835
        %v2837 = vmul.f32 %v2805, %v2835
        %v2838 = vmul.f32 %v2806, %v2835
        %v2839 = vmul.f32 %v2807, %v2835
        %v2840 = vmul.f32 %v2808, %v2835
        %v2841 = vmul.f32 %v2809, %v2835
        %v2842 = vmul.f32 %v2810, %v2835
        %v2843 = vmul.f32 %v2811, %v2835
        %v2844 = vmul.f32 %v2812, %v2835
        %v2845 = vmul.f32 %v2813, %v2835
        %v2846 = vmul.f32 %v2814, %v2835
        %v2847 = vmul.f32 %v2815, %v2835
        %v2848 = vmul.f32 %v2816, %v2835
        %v2849 = vmul.f32 %v2817, %v2835
        %v2850 = vmul.f32 %v2818, %v2835
        %v2851 = vmul.f32 %v2819, %v2835
        %v2852 = vmul.f32 %v2820, %v2835
        %v2853 = vmul.f32 %v2821, %v2835
        %v2854 = vmul.f32 %v2822, %v2835
        %v2855 = vmul.f32 %v2823, %v2835
        %v2856 = vmul.f32 %v2824, %v2835
        %v2857 = vmul.f32 %v2825, %v2835
        %v2858 = vmul.f32 %v2826, %v2835
        %v2859 = vmul.f32 %v2827, %v2835
        %v2860 = vmul.f32 %v2828, %v2835
        %v2861 = vmul.f32 %v2829, %v2835
        %v2862 = vmul.f32 %v2830, %v2835
        %v2863 = vmul.f32 %v2831, %v2835
        %v2864 = vadd.f32 %v2775, %v2836
        %v2865 = vadd.f32 %v2776, %v2837
        %v2866 = vadd.f32 %v2777, %v2838
        %v2867 = vadd.f32 %v2778, %v2839
        %v2868 = vadd.f32 %v2779, %v2840
        %v2869 = vadd.f32 %v2780, %v2841
        %v2870 = vadd.f32 %v2781, %v2842
        %v2871 = vadd.f32 %v2782, %v2843
        %v2872 = vadd.f32 %v2783, %v2844
        %v2873 = vadd.f32 %v2784, %v2845
        %v2874 = vadd.f32 %v2785, %v2846
        %v2875 = vadd.f32 %v2786, %v2847
        %v2876 = vadd.f32 %v2787, %v2848
        %v2877 = vadd.f32 %v2788, %v2849
        %v2878 = vadd.f32 %v2789, %v2850
        %v2879 = vadd.f32 %v2790, %v2851
        %v2880 = vadd.f32 %v2791, %v2852
        %v2881 = vadd.f32 %v2792, %v2853
        %v2882 = vadd.f32 %v2793, %v2854
        %v2883 = vadd.f32 %v2794, %v2855
        %v2884 = vadd.f32 %v2795, %v2856
        %v2885 = vadd.f32 %v2796, %v2857
        %v2886 = vadd.f32 %v2797, %v2858
        %v2887 = vadd.f32 %v2798, %v2859
        %v2888 = vadd.f32 %v2799, %v2860
        %v2889 = vadd.f32 %v2800, %v2861
        %v2890 = vadd.f32 %v2801, %v2862
        %v2891 = vadd.f32 %v2802, %v2863
        %s2892 = scalar_lea.vmem [#allocation2], 1216
        %v2893 = vld [vmem:[%s2892] sm:$0xff]
        %v2894 = vld [vmem:[%s2892 + $0x8] sm:$0x3f]
        %v2895 = vld [vmem:[%s2892 + $0x10] sm:$0xff]
        %v2896 = vld [vmem:[%s2892 + $0x18] sm:$0x3f]
        %v2897 = vld [vmem:[%s2892 + $0x20] sm:$0xff]
        %v2898 = vld [vmem:[%s2892 + $0x28] sm:$0x3f]
        %v2899 = vld [vmem:[%s2892 + $0x30] sm:$0xff]
        %v2900 = vld [vmem:[%s2892 + $0x38] sm:$0x3f]
        %v2901 = vld [vmem:[%s2892 + $0x40] sm:$0xff]
        %v2902 = vld [vmem:[%s2892 + $0x48] sm:$0x3f]
        %v2903 = vld [vmem:[%s2892 + $0x50] sm:$0xff]
        %v2904 = vld [vmem:[%s2892 + $0x58] sm:$0x3f]
        %v2905 = vld [vmem:[%s2892 + $0x60] sm:$0xff]
        %v2906 = vld [vmem:[%s2892 + $0x68] sm:$0x3f]
        %v2907 = vld [vmem:[%s2892 + $0x70] sm:$0xff]
        %v2908 = vld [vmem:[%s2892 + $0x78] sm:$0x3f]
        %v2909 = vld [vmem:[%s2892 + $0x80] sm:$0xff]
        %v2910 = vld [vmem:[%s2892 + $0x88] sm:$0x3f]
        %v2911 = vld [vmem:[%s2892 + $0x90] sm:$0xff]
        %v2912 = vld [vmem:[%s2892 + $0x98] sm:$0x3f]
        %v2913 = vld [vmem:[%s2892 + $0xa0] sm:$0xff]
        %v2914 = vld [vmem:[%s2892 + $0xa8] sm:$0x3f]
        %v2915 = vld [vmem:[%s2892 + $0xb0] sm:$0xff]
        %v2916 = vld [vmem:[%s2892 + $0xb8] sm:$0x3f]
        %v2917 = vld [vmem:[%s2892 + $0xc0] sm:$0xff]
        %v2918 = vld [vmem:[%s2892 + $0xc8] sm:$0x3f]
        %v2919 = vld [vmem:[%s2892 + $0xd0] sm:$0xff]
        %v2920 = vld [vmem:[%s2892 + $0xd8] sm:$0x3f]
        %v2921 = vlaneseq
        %v2922 = vshrl.u32 %v2921, 7
        %v2923 = vsub.s32 0, %v2922
        %v2924 = vrot.slane %v793, %v2923
        %v2925 = vmul.f32 %v2893, %v2924
        %v2926 = vmul.f32 %v2894, %v2924
        %v2927 = vmul.f32 %v2895, %v2924
        %v2928 = vmul.f32 %v2896, %v2924
        %v2929 = vmul.f32 %v2897, %v2924
        %v2930 = vmul.f32 %v2898, %v2924
        %v2931 = vmul.f32 %v2899, %v2924
        %v2932 = vmul.f32 %v2900, %v2924
        %v2933 = vmul.f32 %v2901, %v2924
        %v2934 = vmul.f32 %v2902, %v2924
        %v2935 = vmul.f32 %v2903, %v2924
        %v2936 = vmul.f32 %v2904, %v2924
        %v2937 = vmul.f32 %v2905, %v2924
        %v2938 = vmul.f32 %v2906, %v2924
        %v2939 = vmul.f32 %v2907, %v2924
        %v2940 = vmul.f32 %v2908, %v2924
        %v2941 = vmul.f32 %v2909, %v2924
        %v2942 = vmul.f32 %v2910, %v2924
        %v2943 = vmul.f32 %v2911, %v2924
        %v2944 = vmul.f32 %v2912, %v2924
        %v2945 = vmul.f32 %v2913, %v2924
        %v2946 = vmul.f32 %v2914, %v2924
        %v2947 = vmul.f32 %v2915, %v2924
        %v2948 = vmul.f32 %v2916, %v2924
        %v2949 = vmul.f32 %v2917, %v2924
        %v2950 = vmul.f32 %v2918, %v2924
        %v2951 = vmul.f32 %v2919, %v2924
        %v2952 = vmul.f32 %v2920, %v2924
        %v2953 = vadd.f32 %v2864, %v2925
        %v2954 = vadd.f32 %v2865, %v2926
        %v2955 = vadd.f32 %v2866, %v2927
        %v2956 = vadd.f32 %v2867, %v2928
        %v2957 = vadd.f32 %v2868, %v2929
        %v2958 = vadd.f32 %v2869, %v2930
        %v2959 = vadd.f32 %v2870, %v2931
        %v2960 = vadd.f32 %v2871, %v2932
        %v2961 = vadd.f32 %v2872, %v2933
        %v2962 = vadd.f32 %v2873, %v2934
        %v2963 = vadd.f32 %v2874, %v2935
        %v2964 = vadd.f32 %v2875, %v2936
        %v2965 = vadd.f32 %v2876, %v2937
        %v2966 = vadd.f32 %v2877, %v2938
        %v2967 = vadd.f32 %v2878, %v2939
        %v2968 = vadd.f32 %v2879, %v2940
        %v2969 = vadd.f32 %v2880, %v2941
        %v2970 = vadd.f32 %v2881, %v2942
        %v2971 = vadd.f32 %v2882, %v2943
        %v2972 = vadd.f32 %v2883, %v2944
        %v2973 = vadd.f32 %v2884, %v2945
        %v2974 = vadd.f32 %v2885, %v2946
        %v2975 = vadd.f32 %v2886, %v2947
        %v2976 = vadd.f32 %v2887, %v2948
        %v2977 = vadd.f32 %v2888, %v2949
        %v2978 = vadd.f32 %v2889, %v2950
        %v2979 = vadd.f32 %v2890, %v2951
        %v2980 = vadd.f32 %v2891, %v2952
        %2981 = vst [vmem:[%s275] sm:$0xff] %v2953
        %2982 = vst [vmem:[%s275 + $0x8] sm:$0x3f] %v2954
        %2983 = vst [vmem:[%s275 + $0x10] sm:$0xff] %v2955
        %2984 = vst [vmem:[%s275 + $0x18] sm:$0x3f] %v2956
        %2985 = vst [vmem:[%s275 + $0x20] sm:$0xff] %v2957
        %2986 = vst [vmem:[%s275 + $0x28] sm:$0x3f] %v2958
        %2987 = vst [vmem:[%s275 + $0x30] sm:$0xff] %v2959
        %2988 = vst [vmem:[%s275 + $0x38] sm:$0x3f] %v2960
        %2989 = vst [vmem:[%s275 + $0x40] sm:$0xff] %v2961
        %2990 = vst [vmem:[%s275 + $0x48] sm:$0x3f] %v2962
        %2991 = vst [vmem:[%s275 + $0x50] sm:$0xff] %v2963
        %2992 = vst [vmem:[%s275 + $0x58] sm:$0x3f] %v2964
        %2993 = vst [vmem:[%s275 + $0x60] sm:$0xff] %v2965
        %2994 = vst [vmem:[%s275 + $0x68] sm:$0x3f] %v2966
        %2995 = vst [vmem:[%s275 + $0x70] sm:$0xff] %v2967
        %2996 = vst [vmem:[%s275 + $0x78] sm:$0x3f] %v2968
        %2997 = vst [vmem:[%s275 + $0x80] sm:$0xff] %v2969
        %2998 = vst [vmem:[%s275 + $0x88] sm:$0x3f] %v2970
        %2999 = vst [vmem:[%s275 + $0x90] sm:$0xff] %v2971
        %3000 = vst [vmem:[%s275 + $0x98] sm:$0x3f] %v2972
        %3001 = vst [vmem:[%s275 + $0xa0] sm:$0xff] %v2973
        %3002 = vst [vmem:[%s275 + $0xa8] sm:$0x3f] %v2974
        %3003 = vst [vmem:[%s275 + $0xb0] sm:$0xff] %v2975
        %3004 = vst [vmem:[%s275 + $0xb8] sm:$0x3f] %v2976
        %3005 = vst [vmem:[%s275 + $0xc0] sm:$0xff] %v2977
        %3006 = vst [vmem:[%s275 + $0xc8] sm:$0x3f] %v2978
        %3007 = vst [vmem:[%s275 + $0xd0] sm:$0xff] %v2979
        %3008 = vst [vmem:[%s275 + $0xd8] sm:$0x3f] %v2980
        %s3009 = sand.u32 %s136, 1
        %s3010 = scalar_lea.sflag [#allocation5], %s3009
        %s3011 = sand.u32 %s136, 1
        %s3012 = smul.addr %s3011, 224
        %s3013 = scalar_lea.vmem [#allocation8], %s3012
        // Predicated region
        $region45: #{tpu_custom_call.1} parent=35 // pred_check
          %p3014 = pneg %p146
        $region46: #{tpu_custom_call.1} parent=35 // pred_check_branch
          %3016 = sbr.rel (%p3014) target = $region48
        $region47: #{tpu_custom_call.1} parent=35 // pred_region
          %s3018 = ssub.s32 3584, 3584
          %3019 = vsyncadd %s3010, %s3018
          %s3020 = smul.addr %s24, 128
          %s3021 = scalar_lea.hbm %s4, %s3020
          %s3022 = sshll.u32 %s3013, 4
          %s3023 = int_to_ptr.vmem [resolvable:$true] %s3022
          %3028 = dma.vmem_to_hbm [thread:$0]  %s3023, 3584, %s3021, %s3010, 128, 384, 8
        $region48: #{tpu_custom_call.1} parent=35 // pred_fallthru
          _
      $region36: #{tpu_custom_call.1} parent=5 // pred_fallthru
        _
      %p3029 = scmp.le.s32.totalorder 2, %s19
      // Predicated region
      $region49: #{tpu_custom_call.1} parent=5 // pred_check
        %p3030 = pneg %p3029
      $region50: #{tpu_custom_call.1} parent=5 // pred_check_branch
        %3032 = sbr.rel (%p3030) target = $region52
      $region51: #{tpu_custom_call.1} parent=5 // pred_region
        %s3033 = ssub.s32 %s19, 2
        // Predicated region
        $region53: #{tpu_custom_call.1} parent=51 // pred_check
          %p3034 = pneg %p152
        $region54: #{tpu_custom_call.1} parent=51 // pred_check_branch
          %3036 = sbr.rel (%p3034) target = $region56
        $region55: #{tpu_custom_call.1} parent=51 // pred_region
          %s3037 = sand.u32 %s137, 1
          %s3038 = scalar_lea.sflag [#allocation5], %s3037
          %s3039 = sand.u32 %s137, 1
          %s3040 = smul.addr %s3039, 224
          %s3041 = scalar_lea.vmem [#allocation8], %s3040
          %3042 = dma.done %s3038, 3584
        $region56: #{tpu_custom_call.1} parent=51 // pred_fallthru
          _
      $region52: #{tpu_custom_call.1} parent=5 // pred_fallthru
        _
    $region6: #{tpu_custom_call.1} parent=1 // loop_footer
      %s23 = sadd.s32 1, %s19
    $region7: #{tpu_custom_call.1} parent=1 // loop_footer_branch
      %18 = sbr.rel target = $region3
    $region8: #{tpu_custom_call.1} parent=1 // loop_exit
      _
    %3043 = vsyncpa [#allocation4], 1
    %s3044 = scalar_lea.sflag [#allocation4], 1
    %3045 = vsyncpa %s3044, 1
    %3046 = vsyncpa [#allocation7], 1
    %s3047 = scalar_lea.sflag [#allocation7], 1
    %3048 = vsyncpa %s3047, 1
    %3049 = vsyncpa [#allocation5], 1
    %s3050 = scalar_lea.sflag [#allocation5], 1
    %3051 = vsyncpa %s3050, 1

</llo_original>
